<compile_context>
chip_gen: v5e
topology: v5e:2x2
jax: 0.10.0
libtpu: 0.0.40
codegen_flags: <defaults>
</compile_context>

<pallas_src>
import functools
import math

import jax
import jax.numpy as jnp
from jax import lax
from jax.experimental import pallas as pl
from jax.experimental.pallas import tpu as pltpu

# ---- scaled-down bert-base-uncased config ----------------------------------
VOCAB = 512          # bert-base: 30522
MAX_POS = 64         # bert-base: 512
TYPE_VOCAB = 2
HIDDEN = 128         # bert-base: 768
NUM_LAYERS = 2       # bert-base: 12
NUM_HEADS = 4        # bert-base: 12
HEAD_DIM = HIDDEN // NUM_HEADS
INTERMEDIATE = 4 * HIDDEN
LN_EPS = 1e-12

_SQRT1_2 = 1.0 / math.sqrt(2.0)
_VMEM = pl.BlockSpec(memory_space=pltpu.MemorySpace.VMEM)


def _default_vmem_limit():
    """Generation-aware scoped-VMEM limit: half of physical VMEM, capped at 64 MiB.
    v5e/v6e (128 MiB phys) -> 64 MiB, v7x (64 MiB phys) -> 32 MiB."""
    try:
        cap = int(pltpu.get_tpu_info().vmem_capacity_bytes)
        return max(16 * 1024 * 1024, min(cap // 2, 64 * 1024 * 1024))
    except Exception:
        return 32 * 1024 * 1024


_VMEM_LIMIT = _default_vmem_limit()


def _pick_tile(dim, pref):
    """Largest divisor of `dim` that is <= pref (never silently falls back to
    the full dimension when dim > pref)."""
    if dim <= pref:
        return dim
    for t in range(pref, 0, -1):
        if dim % t == 0:
            return t
    return dim


def _layernorm_f32(y, gamma, beta):
    """y:(rows,H) f32 -> LN(y) f32 (math fully in f32)."""
    mu = jnp.mean(y, axis=-1, keepdims=True)
    yc = y - mu
    var = jnp.mean(yc * yc, axis=-1, keepdims=True)
    inv = lax.rsqrt(var + LN_EPS)
    return yc * inv * gamma + beta


# ---------------------------------------------------------------------------
# 1) Fused embeddings: word + type + position add, then LayerNorm
# ---------------------------------------------------------------------------
def _emb_add_ln_kernel(w_ref, t_ref, p_ref, g_ref, b_ref, o_ref):
    y = w_ref[...] + t_ref[...] + p_ref[...]          # f32
    o_ref[...] = _layernorm_f32(y, g_ref[...], b_ref[...]).astype(o_ref.dtype)


def emb_add_layernorm(word_g, type_g, pos_tab, gamma, beta, *, ts=256):
    B, S, H = word_g.shape
    ts = _pick_tile(S, ts)
    return pl.pallas_call(
        _emb_add_ln_kernel,
        out_shape=jax.ShapeDtypeStruct((B, S, H), jnp.bfloat16),
        grid=(B, S // ts),
        in_specs=[
            pl.BlockSpec((None, ts, H), lambda b, s: (b, s, 0)),
            pl.BlockSpec((None, ts, H), lambda b, s: (b, s, 0)),
            pl.BlockSpec((ts, H), lambda b, s: (s, 0)),
            pl.BlockSpec((1, H), lambda b, s: (0, 0)),
            pl.BlockSpec((1, H), lambda b, s: (0, 0)),
        ],
        out_specs=pl.BlockSpec((None, ts, H), lambda b, s: (b, s, 0)),
        compiler_params=pltpu.CompilerParams(
            dimension_semantics=("parallel", "parallel"),
            vmem_limit_bytes=_VMEM_LIMIT),
    )(word_g, type_g, pos_tab, gamma.reshape(1, H), beta.reshape(1, H))


# ---------------------------------------------------------------------------
# 2) Fused attention block (QKV projection + flash attention + Wo + residual + LN)
#    grid = (B, S // tq); K/V per-head scratch filled once per batch element.
# ---------------------------------------------------------------------------
def _attn_block_kernel(x_ref, wq_ref, wk_ref, wv_ref, bq_ref, bk_ref, bv_ref,
                       wo_ref, bo_ref, g_ref, beta_ref, mask_ref, o_ref,
                       k_scr, v_scr, acc_ref,
                       *, num_heads, head_dim, tq, tkv, nkv, scale):
    qi = pl.program_id(1)

    # ---- fill per-head K / V scratch once per batch element (qi == 0) ------
    @pl.when(qi == 0)
    def _():
        x_full = x_ref[...]                                       # (S, H) bf16

        @pl.loop(0, num_heads)
        def _(h):
            k_scr[h] = (jnp.dot(x_full, wk_ref[h],
                                preferred_element_type=jnp.float32)
                        + bk_ref[h]).astype(k_scr.dtype)
            v_scr[h] = (jnp.dot(x_full, wv_ref[h],
                                preferred_element_type=jnp.float32)
                        + bv_ref[h]).astype(v_scr.dtype)

    row0 = pl.multiple_of(qi * tq, tq)
    x_q = x_ref[pl.ds(row0, tq), :]                                # (tq, H) bf16

    # residual + attention-output bias seed the accumulator
    acc_ref[...] = x_q.astype(jnp.float32) + bo_ref[...]

    # ---- per-head flash-style attention, context folded into Wo chunks -----
    @pl.loop(0, num_heads)
    def _(h):
        qh = (jnp.dot(x_q, wq_ref[h], preferred_element_type=jnp.float32)
              + bq_ref[h]).astype(jnp.bfloat16)                    # (tq, hd)

        def kv_step(kb, carry):
            m_i, l_i, ctx = carry
            r0 = pl.multiple_of(kb * tkv, tkv)
            kh = k_scr[h, pl.ds(r0, tkv), :]                       # (tkv, hd)
            vh = v_scr[h, pl.ds(r0, tkv), :]
            s = lax.dot_general(qh, kh, (((1,), (1,)), ((), ())),
                                preferred_element_type=jnp.float32) * scale
            s = s + mask_ref[kb]                                   # (1, tkv) pad mask
            m_new = jnp.maximum(m_i, jnp.max(s, axis=-1, keepdims=True))
            alpha = jnp.exp(m_i - m_new)
            p = jnp.exp(s - m_new)
            l_new = alpha * l_i + jnp.sum(p, axis=-1, keepdims=True)
            ctx_new = alpha * ctx + jnp.dot(p.astype(vh.dtype), vh,
                                            preferred_element_type=jnp.float32)
            return m_new, l_new, ctx_new

        m0 = jnp.full((tq, 1), -jnp.inf, jnp.float32)
        l0 = jnp.zeros((tq, 1), jnp.float32)
        c0 = jnp.zeros((tq, head_dim), jnp.float32)
        _, l_f, ctx = lax.fori_loop(0, nkv, kv_step, (m0, l0, c0))
        # approx reciprocal (EUP): ~1e-3 rel error on the softmax denominator,
        # acceptable for inference (use approx=False for bit-closeness).
        ctx = (ctx * pl.reciprocal(l_f, approx=True)).astype(jnp.bfloat16)
        # per-head chunk of the output projection, accumulated in place
        acc_ref[...] += jnp.dot(ctx, wo_ref[h], preferred_element_type=jnp.float32)

    o_ref[...] = _layernorm_f32(acc_ref[...], g_ref[...],
                                beta_ref[...]).astype(o_ref.dtype)


def attn_block(x, wq, wk, wv, bq, bk, bv, wo, bo, ln_g, ln_b, add_mask,
               *, tq=256, tkv=512):
    """x:(B,S,H) bf16, per-head weights, add_mask:(B,S) f32 -> (B,S,H) bf16."""
    B, S, H = x.shape
    NH, _, HD = wq.shape
    tq = _pick_tile(S, tq)
    tkv = _pick_tile(S, tkv)
    nq = S // tq
    nkv = S // tkv
    mask4 = add_mask.reshape(B, nkv, 1, tkv)
    kernel = functools.partial(
        _attn_block_kernel, num_heads=NH, head_dim=HD, tq=tq, tkv=tkv,
        nkv=nkv, scale=1.0 / math.sqrt(HD))
    return pl.pallas_call(
        kernel,
        out_shape=jax.ShapeDtypeStruct((B, S, H), jnp.bfloat16),
        grid=(B, nq),
        in_specs=[
            pl.BlockSpec((None, S, H), lambda b, q: (b, 0, 0)),          # x (full seq)
            pl.BlockSpec((NH, H, HD), lambda b, q: (0, 0, 0)),           # w_q
            pl.BlockSpec((NH, H, HD), lambda b, q: (0, 0, 0)),           # w_k
            pl.BlockSpec((NH, H, HD), lambda b, q: (0, 0, 0)),           # w_v
            pl.BlockSpec((NH, 1, HD), lambda b, q: (0, 0, 0)),           # b_q
            pl.BlockSpec((NH, 1, HD), lambda b, q: (0, 0, 0)),           # b_k
            pl.BlockSpec((NH, 1, HD), lambda b, q: (0, 0, 0)),           # b_v
            pl.BlockSpec((NH, HD, H), lambda b, q: (0, 0, 0)),           # wo per head
            pl.BlockSpec((1, H), lambda b, q: (0, 0)),                   # bo
            pl.BlockSpec((1, H), lambda b, q: (0, 0)),                   # ln gamma
            pl.BlockSpec((1, H), lambda b, q: (0, 0)),                   # ln beta
            pl.BlockSpec((None, nkv, 1, tkv), lambda b, q: (b, 0, 0, 0)),  # mask
        ],
        out_specs=pl.BlockSpec((None, tq, H), lambda b, q: (b, q, 0)),
        scratch_shapes=[
            pltpu.VMEM((NH, S, HD), jnp.bfloat16),   # K per head
            pltpu.VMEM((NH, S, HD), jnp.bfloat16),   # V per head
            pltpu.VMEM((tq, H), jnp.float32),        # residual + Wo accumulator
        ],
        compiler_params=pltpu.CompilerParams(
            dimension_semantics=("parallel", "arbitrary"),
            vmem_limit_bytes=_VMEM_LIMIT),
    )(x, wq, wk, wv, bq, bk, bv, wo, bo.reshape(1, H),
      ln_g.reshape(1, H), ln_b.reshape(1, H), mask4)


# ---------------------------------------------------------------------------
# 3) Fused FFN block: gelu(x@wi+bi)@wo2+bo2 + residual + LN,
#    tiled over rows AND over the INTERMEDIATE axis (f32 accumulator).
# ---------------------------------------------------------------------------
def _ffn_block_kernel(x_ref, wi_ref, bi_ref, wo2_ref, bo2_ref, g_ref, beta_ref,
                      o_ref, acc_ref):
    j = pl.program_id(1)
    x = x_ref[...]                                  # (tm, H) bf16

    @pl.when(j == 0)
    def _():
        acc_ref[...] = x.astype(jnp.float32) + bo2_ref[...]   # residual + out bias

    h = jnp.dot(x, wi_ref[...], preferred_element_type=jnp.float32) + bi_ref[...]
    h = 0.5 * h * (1.0 + lax.erf(h * _SQRT1_2))      # exact (erf) GELU, f32
    acc_ref[...] += jnp.dot(h.astype(jnp.bfloat16), wo2_ref[...],
                            preferred_element_type=jnp.float32)

    @pl.when(j == pl.num_programs(1) - 1)
    def _():
        o_ref[...] = _layernorm_f32(acc_ref[...], g_ref[...],
                                    beta_ref[...]).astype(o_ref.dtype)


def ffn_block(x, wi, bi, wo2, bo2, ln_g, ln_b, *, tm=256, ti=512):
    M, H = x.shape
    _, I = wi.shape
    tm = _pick_tile(M, tm)
    ti = _pick_tile(I, ti)
    return pl.pallas_call(
        _ffn_block_kernel,
        out_shape=jax.ShapeDtypeStruct((M, H), jnp.bfloat16),
        grid=(M // tm, I // ti),
        in_specs=[
            pl.BlockSpec((tm, H), lambda i, j: (i, 0)),
            pl.BlockSpec((H, ti), lambda i, j: (0, j)),
            pl.BlockSpec((1, ti), lambda i, j: (0, j)),
            pl.BlockSpec((ti, H), lambda i, j: (j, 0)),
            pl.BlockSpec((1, H), lambda i, j: (0, 0)),
            pl.BlockSpec((1, H), lambda i, j: (0, 0)),
            pl.BlockSpec((1, H), lambda i, j: (0, 0)),
        ],
        out_specs=pl.BlockSpec((tm, H), lambda i, j: (i, 0)),
        scratch_shapes=[pltpu.VMEM((tm, H), jnp.float32)],
        compiler_params=pltpu.CompilerParams(
            dimension_semantics=("parallel", "arbitrary"),
            vmem_limit_bytes=_VMEM_LIMIT),
    )(x, wi, bi.reshape(1, I), wo2, bo2.reshape(1, H),
      ln_g.reshape(1, H), ln_b.reshape(1, H))


# ---------------------------------------------------------------------------
# 4) Fused tail: pooler tanh(W_p h_cls + b_p) -> Dropout(identity) -> Linear(H,1)
#    (final H->1 projection done as a VPU reduction, not a degenerate matmul)
# ---------------------------------------------------------------------------
def _pooler_out_kernel(cls_ref, pw_ref, pb_ref, ow_ref, ob_ref, o_ref):
    pooled = jnp.tanh(
        jnp.dot(cls_ref[...], pw_ref[...], preferred_element_type=jnp.float32)
        + pb_ref[...])
    # bert_drop = nn.Dropout(0.3): identity at inference.
    # TODO(synk): training-mode stochastic dropout (pltpu.stateful_bernoulli) not wired in.
    w_row = ow_ref[...].astype(jnp.float32)                         # (1, H)
    logit = jnp.sum(pooled * w_row, axis=-1, keepdims=True) + ob_ref[...]
    o_ref[...] = logit


def pooler_out(cls, pool_w, pool_b, out_w_row, out_b):
    B, H = cls.shape
    return pl.pallas_call(
        _pooler_out_kernel,
        out_shape=jax.ShapeDtypeStruct((B, 1), jnp.float32),
        in_specs=[_VMEM, _VMEM, _VMEM, _VMEM, _VMEM],
        out_specs=_VMEM,
        compiler_params=pltpu.CompilerParams(vmem_limit_bytes=_VMEM_LIMIT),
    )(cls, pool_w, pool_b.reshape(1, H), out_w_row, out_b.reshape(1, 1))


# ---------------------------------------------------------------------------
# Parameters (deterministic synthetic init). PyTorch nn.Linear weights are
# stored pre-transposed for the MXU path; Q/K/V/Wo are stored per-head:
#   w_q/w_k/w_v : (num_heads, hidden, head_dim)
#   wo          : (num_heads, head_dim, hidden)
# ---------------------------------------------------------------------------
def init_params(key):
    keys = iter(jax.random.split(key, 8 + 8 * NUM_LAYERS))

    def dense(*shape):
        w = 0.02 * jax.random.normal(next(keys), shape, jnp.float32)
        return w.astype(jnp.bfloat16)

    p = {
        "word_emb": 0.02 * jax.random.normal(next(keys), (VOCAB, HIDDEN), jnp.float32),
        "pos_emb": 0.02 * jax.random.normal(next(keys), (MAX_POS, HIDDEN), jnp.float32),
        "type_emb": 0.02 * jax.random.normal(next(keys), (TYPE_VOCAB, HIDDEN), jnp.float32),
        "emb_ln_g": jnp.ones((HIDDEN,), jnp.float32),
        "emb_ln_b": jnp.zeros((HIDDEN,), jnp.float32),
        "layers": [],
    }
    for _ in range(NUM_LAYERS):
        p["layers"].append({
            "w_q": dense(NUM_HEADS, HIDDEN, HEAD_DIM),
            "w_k": dense(NUM_HEADS, HIDDEN, HEAD_DIM),
            "w_v": dense(NUM_HEADS, HIDDEN, HEAD_DIM),
            "b_q": jnp.zeros((NUM_HEADS, 1, HEAD_DIM), jnp.float32),
            "b_k": jnp.zeros((NUM_HEADS, 1, HEAD_DIM), jnp.float32),
            "b_v": jnp.zeros((NUM_HEADS, 1, HEAD_DIM), jnp.float32),
            "wo": dense(NUM_HEADS, HEAD_DIM, HIDDEN),
            "bo": jnp.zeros((HIDDEN,), jnp.float32),
            "ln1_g": jnp.ones((HIDDEN,), jnp.float32),
            "ln1_b": jnp.zeros((HIDDEN,), jnp.float32),
            "wi": dense(HIDDEN, INTERMEDIATE),
            "bi": jnp.zeros((INTERMEDIATE,), jnp.float32),
            "wo2": dense(INTERMEDIATE, HIDDEN),
            "bo2": jnp.zeros((HIDDEN,), jnp.float32),
            "ln2_g": jnp.ones((HIDDEN,), jnp.float32),
            "ln2_b": jnp.zeros((HIDDEN,), jnp.float32),
        })
    p["pool_w"] = dense(HIDDEN, HIDDEN)
    p["pool_b"] = jnp.zeros((HIDDEN,), jnp.float32)
    p["out_w"] = dense(1, HIDDEN)                    # self.out = nn.Linear(768, 1), as a row
    p["out_b"] = jnp.zeros((1,), jnp.float32)
    return p


# ---------------------------------------------------------------------------
# Forward pass (mirrors BERTBaseUncased.forward at inference)
# ---------------------------------------------------------------------------
def bert_base_uncased_forward(params, ids, mask, token_type_ids):
    B, S = ids.shape

    # --- embeddings: XLA gathers, fused add + LayerNorm Pallas kernel ---
    word_g = params["word_emb"][ids]                          # (B,S,H) f32
    type_g = params["type_emb"][token_type_ids]               # (B,S,H) f32
    pos_tab = params["pos_emb"][:S]                           # (S,H) f32
    x = emb_add_layernorm(word_g, type_g, pos_tab,
                          params["emb_ln_g"], params["emb_ln_b"])   # (B,S,H) bf16
    # embedding dropout: identity at inference

    # BERT extended attention mask: 0 where attended, -10000 where padded
    add_mask = (1.0 - mask.astype(jnp.float32)) * -10000.0    # (B, S)

    # --- encoder layers: 2 fused pallas_calls per layer ---
    # TODO(synk): cross-pallas_call prefetch of layer l+1 weights (P10) not wired in.
    for lp in params["layers"]:
        x = attn_block(x, lp["w_q"], lp["w_k"], lp["w_v"],
                       lp["b_q"], lp["b_k"], lp["b_v"],
                       lp["wo"], lp["bo"], lp["ln1_g"], lp["ln1_b"],
                       add_mask)                                       # QKV+attn+Wo+add&LN
        x = ffn_block(x.reshape(B * S, HIDDEN), lp["wi"], lp["bi"],
                      lp["wo2"], lp["bo2"], lp["ln2_g"], lp["ln2_b"]
                      ).reshape(B, S, HIDDEN)                          # FFN+add&LN

    # --- pooler(tanh) + dropout(identity) + Linear(H,1), fused tail ---
    cls = x[:, 0, :]                                           # (B, H) bf16
    return pooler_out(cls, params["pool_w"], params["pool_b"],
                      params["out_w"], params["out_b"])        # (B, 1) f32


# ---------------------------------------------------------------------------
if __name__ == "__main__":
    key = jax.random.PRNGKey(0)
    pkey, ikey = jax.random.split(key)
    params = init_params(pkey)

    B, S = 2, 8
    ids = jax.random.randint(ikey, (B, S), 0, VOCAB, dtype=jnp.int32)
    # attention_mask: second example has 2 padding positions
    mask = jnp.array([[1, 1, 1, 1, 1, 1, 1, 1],
                      [1, 1, 1, 1, 1, 1, 0, 0]], dtype=jnp.int32)
    token_type_ids = jnp.array([[0, 0, 0, 0, 1, 1, 1, 1],
                                [0, 0, 0, 0, 0, 0, 0, 0]], dtype=jnp.int32)

    fwd = jax.jit(bert_base_uncased_forward)
    out = fwd(params, ids, mask, token_type_ids)
    out = jax.block_until_ready(out)
    assert out.shape == (B, 1) and out.dtype == jnp.float32
    print("KERNEL_OK")
</pallas_src>

<mosaic_0001>
module attributes {stable_mosaic.version = 11 : i64} {
  func.func @_emb_add_ln_kernel(%arg0: i32, %arg1: i32, %arg2: memref<1x8x128xf32, #tpu.memory_space<vmem>>, %arg3: memref<1x8x128xf32, #tpu.memory_space<vmem>>, %arg4: memref<8x128xf32, #tpu.memory_space<vmem>>, %arg5: memref<1x128xf32, #tpu.memory_space<vmem>>, %arg6: memref<1x128xf32, #tpu.memory_space<vmem>>, %arg7: memref<1x8x128xbf16, #tpu.memory_space<vmem>>) attributes {dimension_semantics = [#tpu.dimension_semantics<parallel>, #tpu.dimension_semantics<parallel>], iteration_bounds = array<i64: 2, 1>, scalar_prefetch = 0 : i64, scratch_operands = 0 : i64, tpu.core_type = #tpu.core_type<tc>, window_params = [{transform_indices = @transform_0, window_bounds = array<i64: 1, 8, 128>}, {transform_indices = @transform_1, window_bounds = array<i64: 1, 8, 128>}, {transform_indices = @transform_2, window_bounds = array<i64: 8, 128>}, {pipeline_mode = #tpu.pipeline_mode<synchronous>, transform_indices = @transform_3, window_bounds = array<i64: 1, 128>}, {pipeline_mode = #tpu.pipeline_mode<synchronous>, transform_indices = @transform_4, window_bounds = array<i64: 1, 128>}, {transform_indices = @transform_5, window_bounds = array<i64: 1, 8, 128>}]} {
    %c0 = arith.constant 0 : index
    %c0_0 = arith.constant 0 : index
    %c0_1 = arith.constant 0 : index
    %0 = vector.load %arg2[%c0, %c0_0, %c0_1] : memref<1x8x128xf32, #tpu.memory_space<vmem>>, vector<1x8x128xf32>
    %1 = vector.shape_cast %0 : vector<1x8x128xf32> to vector<8x128xf32>
    %c0_2 = arith.constant 0 : index
    %c0_3 = arith.constant 0 : index
    %c0_4 = arith.constant 0 : index
    %2 = vector.load %arg3[%c0_2, %c0_3, %c0_4] : memref<1x8x128xf32, #tpu.memory_space<vmem>>, vector<1x8x128xf32>
    %3 = vector.shape_cast %2 : vector<1x8x128xf32> to vector<8x128xf32>
    %4 = arith.addf %1, %3 : vector<8x128xf32>
    %c0_5 = arith.constant 0 : index
    %c0_6 = arith.constant 0 : index
    %5 = vector.load %arg4[%c0_5, %c0_6] : memref<8x128xf32, #tpu.memory_space<vmem>>, vector<8x128xf32>
    %6 = arith.addf %4, %5 : vector<8x128xf32>
    %c0_7 = arith.constant 0 : index
    %c0_8 = arith.constant 0 : index
    %7 = vector.load %arg5[%c0_7, %c0_8] : memref<1x128xf32, #tpu.memory_space<vmem>>, vector<1x128xf32>
    %c0_9 = arith.constant 0 : index
    %c0_10 = arith.constant 0 : index
    %8 = vector.load %arg6[%c0_9, %c0_10] : memref<1x128xf32, #tpu.memory_space<vmem>>, vector<1x128xf32>
    %cst = arith.constant dense<0.000000e+00> : vector<8xf32>
    %9 = vector.multi_reduction <add>, %6, %cst [1] : vector<8x128xf32> to vector<8xf32>
    %10 = vector.shape_cast %9 : vector<8xf32> to vector<8x1xf32>
    %cst_11 = arith.constant 1.280000e+02 : f32
    %11 = vector.broadcast %cst_11 : f32 to vector<8x1xf32>
    %12 = arith.divf %10, %11 : vector<8x1xf32>
    %13 = vector.broadcast %12 : vector<8x1xf32> to vector<8x128xf32>
    %14 = arith.subf %6, %13 : vector<8x128xf32>
    %15 = arith.mulf %14, %14 : vector<8x128xf32>
    %cst_12 = arith.constant dense<0.000000e+00> : vector<8xf32>
    %16 = vector.multi_reduction <add>, %15, %cst_12 [1] : vector<8x128xf32> to vector<8xf32>
    %17 = vector.shape_cast %16 : vector<8xf32> to vector<8x1xf32>
    %cst_13 = arith.constant 1.280000e+02 : f32
    %18 = vector.broadcast %cst_13 : f32 to vector<8x1xf32>
    %19 = arith.divf %17, %18 : vector<8x1xf32>
    %cst_14 = arith.constant 9.99999996E-13 : f32
    %20 = vector.broadcast %cst_14 : f32 to vector<8x1xf32>
    %21 = arith.addf %19, %20 : vector<8x1xf32>
    %22 = math.rsqrt %21 : vector<8x1xf32>
    %23 = vector.broadcast %22 : vector<8x1xf32> to vector<8x128xf32>
    %24 = arith.mulf %14, %23 : vector<8x128xf32>
    %25 = vector.broadcast %7 : vector<1x128xf32> to vector<8x128xf32>
    %26 = arith.mulf %24, %25 : vector<8x128xf32>
    %27 = vector.broadcast %8 : vector<1x128xf32> to vector<8x128xf32>
    %28 = arith.addf %26, %27 : vector<8x128xf32>
    %29 = arith.truncf %28 : vector<8x128xf32> to vector<8x128xbf16>
    %c0_15 = arith.constant 0 : index
    %c0_16 = arith.constant 0 : index
    %c0_17 = arith.constant 0 : index
    %30 = vector.load %arg7[%c0_15, %c0_16, %c0_17] : memref<1x8x128xbf16, #tpu.memory_space<vmem>>, vector<1x8x128xbf16>
    %31 = vector.shape_cast %30 : vector<1x8x128xbf16> to vector<8x128xbf16>
    %32 = vector.shape_cast %29 : vector<8x128xbf16> to vector<1x8x128xbf16>
    tpu.vector_store %arg7[%c0_15, %c0_16, %c0_17], %32 {strides = array<i32>} : memref<1x8x128xbf16, #tpu.memory_space<vmem>>, vector<1x8x128xbf16>,
    return
  }
  func.func @transform_0(%arg0: i32, %arg1: i32) -> (i32, i32, i32) {
    %c0_i32 = arith.constant 0 : i32
    %c0_i32_0 = arith.constant 0 : i32
    return %arg0, %arg1, %c0_i32 : i32, i32, i32
  }
  func.func @transform_1(%arg0: i32, %arg1: i32) -> (i32, i32, i32) {
    %c0_i32 = arith.constant 0 : i32
    %c0_i32_0 = arith.constant 0 : i32
    return %arg0, %arg1, %c0_i32 : i32, i32, i32
  }
  func.func @transform_2(%arg0: i32, %arg1: i32) -> (i32, i32) {
    %c0_i32 = arith.constant 0 : i32
    %c0_i32_0 = arith.constant 0 : i32
    return %arg1, %c0_i32 : i32, i32
  }
  func.func @transform_3(%arg0: i32, %arg1: i32) -> (i32, i32) {
    %c0_i32 = arith.constant 0 : i32
    %c0_i32_0 = arith.constant 0 : i32
    %c0_i32_1 = arith.constant 0 : i32
    return %c0_i32, %c0_i32_0 : i32, i32
  }
  func.func @transform_4(%arg0: i32, %arg1: i32) -> (i32, i32) {
    %c0_i32 = arith.constant 0 : i32
    %c0_i32_0 = arith.constant 0 : i32
    %c0_i32_1 = arith.constant 0 : i32
    return %c0_i32, %c0_i32_0 : i32, i32
  }
  func.func @transform_5(%arg0: i32, %arg1: i32) -> (i32, i32, i32) {
    %c0_i32 = arith.constant 0 : i32
    %c0_i32_0 = arith.constant 0 : i32
    return %arg0, %arg1, %c0_i32 : i32, i32, i32
  }
}

module attributes {stable_mosaic.version = 11 : i64} {
  func.func @_ffn_block_kernel(%arg0: i32, %arg1: i32, %arg2: memref<16x128xbf16, #tpu.memory_space<vmem>>, %arg3: memref<128x512xbf16, #tpu.memory_space<vmem>>, %arg4: memref<1x512xf32, #tpu.memory_space<vmem>>, %arg5: memref<512x128xbf16, #tpu.memory_space<vmem>>, %arg6: memref<1x128xf32, #tpu.memory_space<vmem>>, %arg7: memref<1x128xf32, #tpu.memory_space<vmem>>, %arg8: memref<1x128xf32, #tpu.memory_space<vmem>>, %arg9: memref<16x128xbf16, #tpu.memory_space<vmem>>, %arg10: memref<16x128xf32, #tpu.memory_space<vmem>>) attributes {dimension_semantics = [#tpu.dimension_semantics<parallel>, #tpu.dimension_semantics<arbitrary>], iteration_bounds = array<i64: 1, 1>, scalar_prefetch = 0 : i64, scratch_operands = 1 : i64, tpu.core_type = #tpu.core_type<tc>, window_params = [{transform_indices = @transform_0, window_bounds = array<i64: 16, 128>}, {transform_indices = @transform_1, window_bounds = array<i64: 128, 512>}, {transform_indices = @transform_2, window_bounds = array<i64: 1, 512>}, {transform_indices = @transform_3, window_bounds = array<i64: 512, 128>}, {pipeline_mode = #tpu.pipeline_mode<synchronous>, transform_indices = @transform_4, window_bounds = array<i64: 1, 128>}, {pipeline_mode = #tpu.pipeline_mode<synchronous>, transform_indices = @transform_5, window_bounds = array<i64: 1, 128>}, {pipeline_mode = #tpu.pipeline_mode<synchronous>, transform_indices = @transform_6, window_bounds = array<i64: 1, 128>}, {transform_indices = @transform_7, window_bounds = array<i64: 16, 128>}]} {
    %c0 = arith.constant 0 : index
    %c0_0 = arith.constant 0 : index
    %0 = vector.load %arg2[%c0, %c0_0] : memref<16x128xbf16, #tpu.memory_space<vmem>>, vector<16x128xbf16>
    %c0_i32 = arith.constant 0 : i32
    %1 = arith.cmpi eq, %arg1, %c0_i32 : i32
    %2 = arith.extui %1 : i1 to i32
    %c0_i32_1 = arith.constant 0 : i32
    %3 = arith.cmpi ne, %2, %c0_i32_1 : i32
    scf.if %3 {
      %26 = arith.extf %0 : vector<16x128xbf16> to vector<16x128xf32>
      %c0_18 = arith.constant 0 : index
      %c0_19 = arith.constant 0 : index
      %27 = vector.load %arg6[%c0_18, %c0_19] : memref<1x128xf32, #tpu.memory_space<vmem>>, vector<1x128xf32>
      %28 = vector.broadcast %27 : vector<1x128xf32> to vector<16x128xf32>
      %29 = arith.addf %26, %28 : vector<16x128xf32>
      %c0_20 = arith.constant 0 : index
      %c0_21 = arith.constant 0 : index
      %30 = vector.load %arg10[%c0_20, %c0_21] : memref<16x128xf32, #tpu.memory_space<vmem>>, vector<16x128xf32>
      tpu.vector_store %arg10[%c0_20, %c0_21], %29 {strides = array<i32>} : memref<16x128xf32, #tpu.memory_space<vmem>>, vector<16x128xf32>,
    } else {
    }
    %c0_2 = arith.constant 0 : index
    %c0_3 = arith.constant 0 : index
    %4 = vector.load %arg3[%c0_2, %c0_3] : memref<128x512xbf16, #tpu.memory_space<vmem>>, vector<128x512xbf16>
    %cst = arith.constant dense<0.000000e+00> : vector<16x512xf32>
    %5 = tpu.matmul %0, %4, %cst {dimension_numbers = #tpu.dot_dimension_numbers<[1], [0], [0], [1], [0, 0, 1, 1], [], []>} : vector<16x128xbf16>, vector<128x512xbf16>, vector<16x512xf32> -> vector<16x512xf32>
    %c0_4 = arith.constant 0 : index
    %c0_5 = arith.constant 0 : index
    %6 = vector.load %arg4[%c0_4, %c0_5] : memref<1x512xf32, #tpu.memory_space<vmem>>, vector<1x512xf32>
    %7 = vector.broadcast %6 : vector<1x512xf32> to vector<16x512xf32>
    %8 = arith.addf %5, %7 : vector<16x512xf32>
    %cst_6 = arith.constant 5.000000e-01 : f32
    %9 = vector.broadcast %cst_6 : f32 to vector<16x512xf32>
    %10 = arith.mulf %9, %8 : vector<16x512xf32>
    %cst_7 = arith.constant 0.707106769 : f32
    %11 = vector.broadcast %cst_7 : f32 to vector<16x512xf32>
    %12 = arith.mulf %8, %11 : vector<16x512xf32>
    %13 = math.erf %12 : vector<16x512xf32>
    %cst_8 = arith.constant 1.000000e+00 : f32
    %14 = vector.broadcast %cst_8 : f32 to vector<16x512xf32>
    %15 = arith.addf %14, %13 : vector<16x512xf32>
    %16 = arith.mulf %10, %15 : vector<16x512xf32>
    %c0_9 = arith.constant 0 : index
    %c0_10 = arith.constant 0 : index
    %17 = vector.load %arg10[%c0_9, %c0_10] : memref<16x128xf32, #tpu.memory_space<vmem>>, vector<16x128xf32>
    %18 = arith.truncf %16 : vector<16x512xf32> to vector<16x512xbf16>
    %c0_11 = arith.constant 0 : index
    %c0_12 = arith.constant 0 : index
    %19 = vector.load %arg5[%c0_11, %c0_12] : memref<512x128xbf16, #tpu.memory_space<vmem>>, vector<512x128xbf16>
    %cst_13 = arith.constant dense<0.000000e+00> : vector<16x128xf32>
    %20 = tpu.matmul %18, %19, %cst_13 {dimension_numbers = #tpu.dot_dimension_numbers<[1], [0], [0], [1], [0, 0, 1, 1], [], []>} : vector<16x512xbf16>, vector<512x128xbf16>, vector<16x128xf32> -> vector<16x128xf32>
    %21 = arith.addf %17, %20 : vector<16x128xf32>
    %c0_14 = arith.constant 0 : index
    %c0_15 = arith.constant 0 : index
    %22 = vector.load %arg10[%c0_14, %c0_15] : memref<16x128xf32, #tpu.memory_space<vmem>>, vector<16x128xf32>
    tpu.vector_store %arg10[%c0_14, %c0_15], %21 {strides = array<i32>} : memref<16x128xf32, #tpu.memory_space<vmem>>, vector<16x128xf32>,
    %c0_i32_16 = arith.constant 0 : i32
    %23 = arith.cmpi eq, %arg1, %c0_i32_16 : i32
    %24 = arith.extui %23 : i1 to i32
    %c0_i32_17 = arith.constant 0 : i32
    %25 = arith.cmpi ne, %24, %c0_i32_17 : i32
    scf.if %25 {
      %c0_18 = arith.constant 0 : index
      %c0_19 = arith.constant 0 : index
      %26 = vector.load %arg10[%c0_18, %c0_19] : memref<16x128xf32, #tpu.memory_space<vmem>>, vector<16x128xf32>
      %c0_20 = arith.constant 0 : index
      %c0_21 = arith.constant 0 : index
      %27 = vector.load %arg7[%c0_20, %c0_21] : memref<1x128xf32, #tpu.memory_space<vmem>>, vector<1x128xf32>
      %c0_22 = arith.constant 0 : index
      %c0_23 = arith.constant 0 : index
      %28 = vector.load %arg8[%c0_22, %c0_23] : memref<1x128xf32, #tpu.memory_space<vmem>>, vector<1x128xf32>
      %cst_24 = arith.constant dense<0.000000e+00> : vector<16xf32>
      %29 = vector.multi_reduction <add>, %26, %cst_24 [1] : vector<16x128xf32> to vector<16xf32>
      %30 = vector.shape_cast %29 : vector<16xf32> to vector<16x1xf32>
      %cst_25 = arith.constant 1.280000e+02 : f32
      %31 = vector.broadcast %cst_25 : f32 to vector<16x1xf32>
      %32 = arith.divf %30, %31 : vector<16x1xf32>
      %33 = vector.broadcast %32 : vector<16x1xf32> to vector<16x128xf32>
      %34 = arith.subf %26, %33 : vector<16x128xf32>
      %35 = arith.mulf %34, %34 : vector<16x128xf32>
      %cst_26 = arith.constant dense<0.000000e+00> : vector<16xf32>
      %36 = vector.multi_reduction <add>, %35, %cst_26 [1] : vector<16x128xf32> to vector<16xf32>
      %37 = vector.shape_cast %36 : vector<16xf32> to vector<16x1xf32>
      %cst_27 = arith.constant 1.280000e+02 : f32
      %38 = vector.broadcast %cst_27 : f32 to vector<16x1xf32>
      %39 = arith.divf %37, %38 : vector<16x1xf32>
      %cst_28 = arith.constant 9.99999996E-13 : f32
      %40 = vector.broadcast %cst_28 : f32 to vector<16x1xf32>
      %41 = arith.addf %39, %40 : vector<16x1xf32>
      %42 = math.rsqrt %41 : vector<16x1xf32>
      %43 = vector.broadcast %42 : vector<16x1xf32> to vector<16x128xf32>
      %44 = arith.mulf %34, %43 : vector<16x128xf32>
      %45 = vector.broadcast %27 : vector<1x128xf32> to vector<16x128xf32>
      %46 = arith.mulf %44, %45 : vector<16x128xf32>
      %47 = vector.broadcast %28 : vector<1x128xf32> to vector<16x128xf32>
      %48 = arith.addf %46, %47 : vector<16x128xf32>
      %49 = arith.truncf %48 : vector<16x128xf32> to vector<16x128xbf16>
      %c0_29 = arith.constant 0 : index
      %c0_30 = arith.constant 0 : index
      %50 = vector.load %arg9[%c0_29, %c0_30] : memref<16x128xbf16, #tpu.memory_space<vmem>>, vector<16x128xbf16>
      tpu.vector_store %arg9[%c0_29, %c0_30], %49 {strides = array<i32>} : memref<16x128xbf16, #tpu.memory_space<vmem>>, vector<16x128xbf16>,
    } else {
    }
    return
  }
  func.func @transform_0(%arg0: i32, %arg1: i32) -> (i32, i32) {
    %c0_i32 = arith.constant 0 : i32
    %c0_i32_0 = arith.constant 0 : i32
    return %arg0, %c0_i32 : i32, i32
  }
  func.func @transform_1(%arg0: i32, %arg1: i32) -> (i32, i32) {
    %c0_i32 = arith.constant 0 : i32
    %c0_i32_0 = arith.constant 0 : i32
    return %c0_i32, %arg1 : i32, i32
  }
  func.func @transform_2(%arg0: i32, %arg1: i32) -> (i32, i32) {
    %c0_i32 = arith.constant 0 : i32
    %c0_i32_0 = arith.constant 0 : i32
    return %c0_i32, %arg1 : i32, i32
  }
  func.func @transform_3(%arg0: i32, %arg1: i32) -> (i32, i32) {
    %c0_i32 = arith.constant 0 : i32
    %c0_i32_0 = arith.constant 0 : i32
    return %arg1, %c0_i32 : i32, i32
  }
  func.func @transform_4(%arg0: i32, %arg1: i32) -> (i32, i32) {
    %c0_i32 = arith.constant 0 : i32
    %c0_i32_0 = arith.constant 0 : i32
    %c0_i32_1 = arith.constant 0 : i32
    return %c0_i32, %c0_i32_0 : i32, i32
  }
  func.func @transform_5(%arg0: i32, %arg1: i32) -> (i32, i32) {
    %c0_i32 = arith.constant 0 : i32
    %c0_i32_0 = arith.constant 0 : i32
    %c0_i32_1 = arith.constant 0 : i32
    return %c0_i32, %c0_i32_0 : i32, i32
  }
  func.func @transform_6(%arg0: i32, %arg1: i32) -> (i32, i32) {
    %c0_i32 = arith.constant 0 : i32
    %c0_i32_0 = arith.constant 0 : i32
    %c0_i32_1 = arith.constant 0 : i32
    return %c0_i32, %c0_i32_0 : i32, i32
  }
  func.func @transform_7(%arg0: i32, %arg1: i32) -> (i32, i32) {
    %c0_i32 = arith.constant 0 : i32
    %c0_i32_0 = arith.constant 0 : i32
    return %arg0, %c0_i32 : i32, i32
  }
}

module attributes {stable_mosaic.version = 11 : i64} {
  func.func @_attn_block_kernel(%arg0: i32, %arg1: i32, %arg2: memref<1x8x128xbf16, #tpu.memory_space<vmem>>, %arg3: memref<4x128x32xbf16, #tpu.memory_space<vmem>>, %arg4: memref<4x128x32xbf16, #tpu.memory_space<vmem>>, %arg5: memref<4x128x32xbf16, #tpu.memory_space<vmem>>, %arg6: memref<4x1x32xf32, #tpu.memory_space<vmem>>, %arg7: memref<4x1x32xf32, #tpu.memory_space<vmem>>, %arg8: memref<4x1x32xf32, #tpu.memory_space<vmem>>, %arg9: memref<4x32x128xbf16, #tpu.memory_space<vmem>>, %arg10: memref<1x128xf32, #tpu.memory_space<vmem>>, %arg11: memref<1x128xf32, #tpu.memory_space<vmem>>, %arg12: memref<1x128xf32, #tpu.memory_space<vmem>>, %arg13: memref<1x1x1x8xf32, #tpu.memory_space<vmem>>, %arg14: memref<1x8x128xbf16, #tpu.memory_space<vmem>>, %arg15: memref<4x8x32xbf16, #tpu.memory_space<vmem>>, %arg16: memref<4x8x32xbf16, #tpu.memory_space<vmem>>, %arg17: memref<8x128xf32, #tpu.memory_space<vmem>>) attributes {dimension_semantics = [#tpu.dimension_semantics<parallel>, #tpu.dimension_semantics<arbitrary>], iteration_bounds = array<i64: 2, 1>, scalar_prefetch = 0 : i64, scratch_operands = 3 : i64, tpu.core_type = #tpu.core_type<tc>, window_params = [{transform_indices = @transform_0, window_bounds = array<i64: 1, 8, 128>}, {pipeline_mode = #tpu.pipeline_mode<synchronous>, transform_indices = @transform_1, window_bounds = array<i64: 4, 128, 32>}, {pipeline_mode = #tpu.pipeline_mode<synchronous>, transform_indices = @transform_2, window_bounds = array<i64: 4, 128, 32>}, {pipeline_mode = #tpu.pipeline_mode<synchronous>, transform_indices = @transform_3, window_bounds = array<i64: 4, 128, 32>}, {pipeline_mode = #tpu.pipeline_mode<synchronous>, transform_indices = @transform_4, window_bounds = array<i64: 4, 1, 32>}, {pipeline_mode = #tpu.pipeline_mode<synchronous>, transform_indices = @transform_5, window_bounds = array<i64: 4, 1, 32>}, {pipeline_mode = #tpu.pipeline_mode<synchronous>, transform_indices = @transform_6, window_bounds = array<i64: 4, 1, 32>}, {pipeline_mode = #tpu.pipeline_mode<synchronous>, transform_indices = @transform_7, window_bounds = array<i64: 4, 32, 128>}, {pipeline_mode = #tpu.pipeline_mode<synchronous>, transform_indices = @transform_8, window_bounds = array<i64: 1, 128>}, {pipeline_mode = #tpu.pipeline_mode<synchronous>, transform_indices = @transform_9, window_bounds = array<i64: 1, 128>}, {pipeline_mode = #tpu.pipeline_mode<synchronous>, transform_indices = @transform_10, window_bounds = array<i64: 1, 128>}, {transform_indices = @transform_11, window_bounds = array<i64: 1, 1, 1, 8>}, {transform_indices = @transform_12, window_bounds = array<i64: 1, 8, 128>}]} {
    %c0_i32 = arith.constant 0 : i32
    %0 = arith.cmpi eq, %arg1, %c0_i32 : i32
    %1 = arith.extui %0 : i1 to i32
    %c0_i32_0 = arith.constant 0 : i32
    %2 = arith.cmpi ne, %1, %c0_i32_0 : i32
    scf.if %2 {
      %c0_21 = arith.constant 0 : index
      %c0_22 = arith.constant 0 : index
      %c0_23 = arith.constant 0 : index
      %41 = vector.load %arg2[%c0_21, %c0_22, %c0_23] : memref<1x8x128xbf16, #tpu.memory_space<vmem>>, vector<1x8x128xbf16>
      %42 = vector.shape_cast %41 : vector<1x8x128xbf16> to vector<8x128xbf16>
      %c0_i32_24 = arith.constant 0 : i32
      %c4_i32_25 = arith.constant 4 : i32
      %43 = arith.addi %c0_i32_24, %c4_i32_25 : i32
      %c1_i32_26 = arith.constant 1 : i32
      scf.for %arg18 = %c0_i32_24 to %43 step %c1_i32_26  : i32 {
        %c1_i32_28 = arith.constant 1 : i32
        %44 = arith.muli %arg18, %c1_i32_28 : i32
        %c0_i32_29 = arith.constant 0 : i32
        %45 = arith.addi %c0_i32_29, %44 : i32
        %46 = arith.index_cast %45 : i32 to index
        %c0_30 = arith.constant 0 : index
        %c0_31 = arith.constant 0 : index
        %47 = vector.load %arg4[%46, %c0_30, %c0_31] : memref<4x128x32xbf16, #tpu.memory_space<vmem>>, vector<1x128x32xbf16>
        %48 = vector.shape_cast %47 : vector<1x128x32xbf16> to vector<128x32xbf16>
        %cst_32 = arith.constant dense<0.000000e+00> : vector<8x32xf32>
        %49 = tpu.matmul %42, %48, %cst_32 {dimension_numbers = #tpu.dot_dimension_numbers<[1], [0], [0], [1], [0, 0, 1, 1], [], []>} : vector<8x128xbf16>, vector<128x32xbf16>, vector<8x32xf32> -> vector<8x32xf32>
        %50 = arith.index_cast %45 : i32 to index
        %c0_33 = arith.constant 0 : index
        %c0_34 = arith.constant 0 : index
        %51 = vector.load %arg7[%50, %c0_33, %c0_34] : memref<4x1x32xf32, #tpu.memory_space<vmem>>, vector<1x1x32xf32>
        %52 = vector.shape_cast %51 : vector<1x1x32xf32> to vector<1x32xf32>
        %53 = vector.broadcast %52 : vector<1x32xf32> to vector<8x32xf32>
        %54 = arith.addf %49, %53 : vector<8x32xf32>
        %55 = arith.truncf %54 : vector<8x32xf32> to vector<8x32xbf16>
        %56 = arith.index_cast %45 : i32 to index
        %c0_35 = arith.constant 0 : index
        %c0_36 = arith.constant 0 : index
        %57 = vector.load %arg15[%56, %c0_35, %c0_36] : memref<4x8x32xbf16, #tpu.memory_space<vmem>>, vector<1x8x32xbf16>
        %58 = vector.shape_cast %57 : vector<1x8x32xbf16> to vector<8x32xbf16>
        %59 = vector.shape_cast %55 : vector<8x32xbf16> to vector<1x8x32xbf16>
        tpu.vector_store %arg15[%56, %c0_35, %c0_36], %59 {strides = array<i32>} : memref<4x8x32xbf16, #tpu.memory_space<vmem>>, vector<1x8x32xbf16>,
        %60 = arith.index_cast %45 : i32 to index
        %c0_37 = arith.constant 0 : index
        %c0_38 = arith.constant 0 : index
        %61 = vector.load %arg5[%60, %c0_37, %c0_38] : memref<4x128x32xbf16, #tpu.memory_space<vmem>>, vector<1x128x32xbf16>
        %62 = vector.shape_cast %61 : vector<1x128x32xbf16> to vector<128x32xbf16>
        %cst_39 = arith.constant dense<0.000000e+00> : vector<8x32xf32>
        %63 = tpu.matmul %42, %62, %cst_39 {dimension_numbers = #tpu.dot_dimension_numbers<[1], [0], [0], [1], [0, 0, 1, 1], [], []>} : vector<8x128xbf16>, vector<128x32xbf16>, vector<8x32xf32> -> vector<8x32xf32>
        %64 = arith.index_cast %45 : i32 to index
        %c0_40 = arith.constant 0 : index
        %c0_41 = arith.constant 0 : index
        %65 = vector.load %arg8[%64, %c0_40, %c0_41] : memref<4x1x32xf32, #tpu.memory_space<vmem>>, vector<1x1x32xf32>
        %66 = vector.shape_cast %65 : vector<1x1x32xf32> to vector<1x32xf32>
        %67 = vector.broadcast %66 : vector<1x32xf32> to vector<8x32xf32>
        %68 = arith.addf %63, %67 : vector<8x32xf32>
        %69 = arith.truncf %68 : vector<8x32xf32> to vector<8x32xbf16>
        %70 = arith.index_cast %45 : i32 to index
        %c0_42 = arith.constant 0 : index
        %c0_43 = arith.constant 0 : index
        %71 = vector.load %arg16[%70, %c0_42, %c0_43] : memref<4x8x32xbf16, #tpu.memory_space<vmem>>, vector<1x8x32xbf16>
        %72 = vector.shape_cast %71 : vector<1x8x32xbf16> to vector<8x32xbf16>
        %73 = vector.shape_cast %69 : vector<8x32xbf16> to vector<1x8x32xbf16>
        tpu.vector_store %arg16[%70, %c0_42, %c0_43], %73 {strides = array<i32>} : memref<4x8x32xbf16, #tpu.memory_space<vmem>>, vector<1x8x32xbf16>,
      }
      %c4_i32_27 = arith.constant 4 : i32
    } else {
    }
    %c8_i32 = arith.constant 8 : i32
    %3 = arith.muli %arg1, %c8_i32 : i32
    %4 = tpu.assume_multiple %3, 8 : i32
    %c0 = arith.constant 0 : index
    %5 = arith.index_cast %4 : i32 to index
    %c0_1 = arith.constant 0 : index
    %6 = vector.load %arg2[%c0, %5, %c0_1] : memref<1x8x128xbf16, #tpu.memory_space<vmem>>, vector<1x8x128xbf16>
    %7 = vector.shape_cast %6 : vector<1x8x128xbf16> to vector<8x128xbf16>
    %8 = arith.extf %7 : vector<8x128xbf16> to vector<8x128xf32>
    %c0_2 = arith.constant 0 : index
    %c0_3 = arith.constant 0 : index
    %9 = vector.load %arg10[%c0_2, %c0_3] : memref<1x128xf32, #tpu.memory_space<vmem>>, vector<1x128xf32>
    %10 = vector.broadcast %9 : vector<1x128xf32> to vector<8x128xf32>
    %11 = arith.addf %8, %10 : vector<8x128xf32>
    %c0_4 = arith.constant 0 : index
    %c0_5 = arith.constant 0 : index
    %12 = vector.load %arg17[%c0_4, %c0_5] : memref<8x128xf32, #tpu.memory_space<vmem>>, vector<8x128xf32>
    tpu.vector_store %arg17[%c0_4, %c0_5], %11 {strides = array<i32>} : memref<8x128xf32, #tpu.memory_space<vmem>>, vector<8x128xf32>,
    %c0_i32_6 = arith.constant 0 : i32
    %c4_i32 = arith.constant 4 : i32
    %13 = arith.addi %c0_i32_6, %c4_i32 : i32
    %c1_i32 = arith.constant 1 : i32
    scf.for %arg18 = %c0_i32_6 to %13 step %c1_i32  : i32 {
      %c1_i32_21 = arith.constant 1 : i32
      %41 = arith.muli %arg18, %c1_i32_21 : i32
      %c0_i32_22 = arith.constant 0 : i32
      %42 = arith.addi %c0_i32_22, %41 : i32
      %43 = arith.index_cast %42 : i32 to index
      %c0_23 = arith.constant 0 : index
      %c0_24 = arith.constant 0 : index
      %44 = vector.load %arg3[%43, %c0_23, %c0_24] : memref<4x128x32xbf16, #tpu.memory_space<vmem>>, vector<1x128x32xbf16>
      %45 = vector.shape_cast %44 : vector<1x128x32xbf16> to vector<128x32xbf16>
      %cst_25 = arith.constant dense<0.000000e+00> : vector<8x32xf32>
      %46 = tpu.matmul %7, %45, %cst_25 {dimension_numbers = #tpu.dot_dimension_numbers<[1], [0], [0], [1], [0, 0, 1, 1], [], []>} : vector<8x128xbf16>, vector<128x32xbf16>, vector<8x32xf32> -> vector<8x32xf32>
      %47 = arith.index_cast %42 : i32 to index
      %c0_26 = arith.constant 0 : index
      %c0_27 = arith.constant 0 : index
      %48 = vector.load %arg6[%47, %c0_26, %c0_27] : memref<4x1x32xf32, #tpu.memory_space<vmem>>, vector<1x1x32xf32>
      %49 = vector.shape_cast %48 : vector<1x1x32xf32> to vector<1x32xf32>
      %50 = vector.broadcast %49 : vector<1x32xf32> to vector<8x32xf32>
      %51 = arith.addf %46, %50 : vector<8x32xf32>
      %52 = arith.truncf %51 : vector<8x32xf32> to vector<8x32xbf16>
      %cst_28 = arith.constant 0xFF800000 : f32
      %53 = vector.broadcast %cst_28 : f32 to vector<8x1xf32>
      %cst_29 = arith.constant 0.000000e+00 : f32
      %54 = vector.broadcast %cst_29 : f32 to vector<8x1xf32>
      %cst_30 = arith.constant 0.000000e+00 : f32
      %55 = vector.broadcast %cst_30 : f32 to vector<8x32xf32>
      %c0_i32_31 = arith.constant 0 : i32
      %c8_i32_32 = arith.constant 8 : i32
      %56 = arith.muli %c0_i32_31, %c8_i32_32 : i32
      %57 = tpu.assume_multiple %56, 8 : i32
      %58 = arith.index_cast %42 : i32 to index
      %59 = arith.index_cast %57 : i32 to index
      %c0_33 = arith.constant 0 : index
      %60 = vector.load %arg15[%58, %59, %c0_33] : memref<4x8x32xbf16, #tpu.memory_space<vmem>>, vector<1x8x32xbf16>
      %61 = vector.shape_cast %60 : vector<1x8x32xbf16> to vector<8x32xbf16>
      %62 = arith.index_cast %42 : i32 to index
      %63 = arith.index_cast %57 : i32 to index
      %c0_34 = arith.constant 0 : index
      %64 = vector.load %arg16[%62, %63, %c0_34] : memref<4x8x32xbf16, #tpu.memory_space<vmem>>, vector<1x8x32xbf16>
      %65 = vector.shape_cast %64 : vector<1x8x32xbf16> to vector<8x32xbf16>
      %cst_35 = arith.constant dense<0.000000e+00> : vector<8x8xf32>
      %66 = tpu.matmul %52, %61, %cst_35 {dimension_numbers = #tpu.dot_dimension_numbers<[1], [1], [0], [0], [0, 0, 1, 0], [], []>} : vector<8x32xbf16>, vector<8x32xbf16>, vector<8x8xf32> -> vector<8x8xf32>
      %cst_36 = arith.constant 0.176776692 : f32
      %67 = vector.broadcast %cst_36 : f32 to vector<8x8xf32>
      %68 = arith.mulf %66, %67 : vector<8x8xf32>
      %c0_37 = arith.constant 0 : index
      %69 = arith.index_cast %c0_i32_31 : i32 to index
      %c0_38 = arith.constant 0 : index
      %c0_39 = arith.constant 0 : index
      %70 = vector.load %arg13[%c0_37, %69, %c0_38, %c0_39] : memref<1x1x1x8xf32, #tpu.memory_space<vmem>>, vector<1x1x1x8xf32>
      %71 = vector.shape_cast %70 : vector<1x1x1x8xf32> to vector<1x8xf32>
      %72 = vector.broadcast %71 : vector<1x8xf32> to vector<8x8xf32>
      %73 = arith.addf %68, %72 : vector<8x8xf32>
      %cst_40 = arith.constant dense<0xFF800000> : vector<8xf32>
      %74 = vector.multi_reduction <maximumf>, %73, %cst_40 [1] : vector<8x8xf32> to vector<8xf32>
      %75 = vector.shape_cast %74 : vector<8xf32> to vector<8x1xf32>
      %76 = arith.maximumf %53, %75 : vector<8x1xf32>
      %77 = arith.subf %53, %76 : vector<8x1xf32>
      %78 = math.exp %77 : vector<8x1xf32>
      %79 = vector.broadcast %76 : vector<8x1xf32> to vector<8x8xf32>
      %80 = arith.subf %73, %79 : vector<8x8xf32>
      %81 = math.exp %80 : vector<8x8xf32>
      %82 = arith.mulf %78, %54 : vector<8x1xf32>
      %cst_41 = arith.constant dense<0.000000e+00> : vector<8xf32>
      %83 = vector.multi_reduction <add>, %81, %cst_41 [1] : vector<8x8xf32> to vector<8xf32>
      %84 = vector.shape_cast %83 : vector<8xf32> to vector<8x1xf32>
      %85 = arith.addf %82, %84 : vector<8x1xf32>
      %86 = vector.broadcast %78 : vector<8x1xf32> to vector<8x32xf32>
      %87 = arith.mulf %86, %55 : vector<8x32xf32>
      %88 = arith.truncf %81 : vector<8x8xf32> to vector<8x8xbf16>
      %cst_42 = arith.constant dense<0.000000e+00> : vector<8x32xf32>
      %89 = tpu.matmul %88, %65, %cst_42 {dimension_numbers = #tpu.dot_dimension_numbers<[1], [0], [0], [1], [0, 0, 1, 1], [], []>} : vector<8x8xbf16>, vector<8x32xbf16>, vector<8x32xf32> -> vector<8x32xf32>
      %90 = arith.addf %87, %89 : vector<8x32xf32>
      %c1_i32_43 = arith.constant 1 : i32
      %91 = tpu.reciprocal %85 {approx = true} : vector<8x1xf32> -> vector<8x1xf32>
      %92 = vector.broadcast %91 : vector<8x1xf32> to vector<8x32xf32>
      %93 = arith.mulf %90, %92 : vector<8x32xf32>
      %94 = arith.truncf %93 : vector<8x32xf32> to vector<8x32xbf16>
      %c0_44 = arith.constant 0 : index
      %c0_45 = arith.constant 0 : index
      %95 = vector.load %arg17[%c0_44, %c0_45] : memref<8x128xf32, #tpu.memory_space<vmem>>, vector<8x128xf32>
      %96 = arith.index_cast %42 : i32 to index
      %c0_46 = arith.constant 0 : index
      %c0_47 = arith.constant 0 : index
      %97 = vector.load %arg9[%96, %c0_46, %c0_47] : memref<4x32x128xbf16, #tpu.memory_space<vmem>>, vector<1x32x128xbf16>
      %98 = vector.shape_cast %97 : vector<1x32x128xbf16> to vector<32x128xbf16>
      %cst_48 = arith.constant dense<0.000000e+00> : vector<8x128xf32>
      %99 = tpu.matmul %94, %98, %cst_48 {dimension_numbers = #tpu.dot_dimension_numbers<[1], [0], [0], [1], [0, 0, 1, 1], [], []>} : vector<8x32xbf16>, vector<32x128xbf16>, vector<8x128xf32> -> vector<8x128xf32>
      %100 = arith.addf %95, %99 : vector<8x128xf32>
      %c0_49 = arith.constant 0 : index
      %c0_50 = arith.constant 0 : index
      %101 = vector.load %arg17[%c0_49, %c0_50] : memref<8x128xf32, #tpu.memory_space<vmem>>, vector<8x128xf32>
      tpu.vector_store %arg17[%c0_49, %c0_50], %100 {strides = array<i32>} : memref<8x128xf32, #tpu.memory_space<vmem>>, vector<8x128xf32>,
    }
    %c4_i32_7 = arith.constant 4 : i32
    %c0_8 = arith.constant 0 : index
    %c0_9 = arith.constant 0 : index
    %14 = vector.load %arg17[%c0_8, %c0_9] : memref<8x128xf32, #tpu.memory_space<vmem>>, vector<8x128xf32>
    %c0_10 = arith.constant 0 : index
    %c0_11 = arith.constant 0 : index
    %15 = vector.load %arg11[%c0_10, %c0_11] : memref<1x128xf32, #tpu.memory_space<vmem>>, vector<1x128xf32>
    %c0_12 = arith.constant 0 : index
    %c0_13 = arith.constant 0 : index
    %16 = vector.load %arg12[%c0_12, %c0_13] : memref<1x128xf32, #tpu.memory_space<vmem>>, vector<1x128xf32>
    %cst = arith.constant dense<0.000000e+00> : vector<8xf32>
    %17 = vector.multi_reduction <add>, %14, %cst [1] : vector<8x128xf32> to vector<8xf32>
    %18 = vector.shape_cast %17 : vector<8xf32> to vector<8x1xf32>
    %cst_14 = arith.constant 1.280000e+02 : f32
    %19 = vector.broadcast %cst_14 : f32 to vector<8x1xf32>
    %20 = arith.divf %18, %19 : vector<8x1xf32>
    %21 = vector.broadcast %20 : vector<8x1xf32> to vector<8x128xf32>
    %22 = arith.subf %14, %21 : vector<8x128xf32>
    %23 = arith.mulf %22, %22 : vector<8x128xf32>
    %cst_15 = arith.constant dense<0.000000e+00> : vector<8xf32>
    %24 = vector.multi_reduction <add>, %23, %cst_15 [1] : vector<8x128xf32> to vector<8xf32>
    %25 = vector.shape_cast %24 : vector<8xf32> to vector<8x1xf32>
    %cst_16 = arith.constant 1.280000e+02 : f32
    %26 = vector.broadcast %cst_16 : f32 to vector<8x1xf32>
    %27 = arith.divf %25, %26 : vector<8x1xf32>
    %cst_17 = arith.constant 9.99999996E-13 : f32
    %28 = vector.broadcast %cst_17 : f32 to vector<8x1xf32>
    %29 = arith.addf %27, %28 : vector<8x1xf32>
    %30 = math.rsqrt %29 : vector<8x1xf32>
    %31 = vector.broadcast %30 : vector<8x1xf32> to vector<8x128xf32>
    %32 = arith.mulf %22, %31 : vector<8x128xf32>
    %33 = vector.broadcast %15 : vector<1x128xf32> to vector<8x128xf32>
    %34 = arith.mulf %32, %33 : vector<8x128xf32>
    %35 = vector.broadcast %16 : vector<1x128xf32> to vector<8x128xf32>
    %36 = arith.addf %34, %35 : vector<8x128xf32>
    %37 = arith.truncf %36 : vector<8x128xf32> to vector<8x128xbf16>
    %c0_18 = arith.constant 0 : index
    %c0_19 = arith.constant 0 : index
    %c0_20 = arith.constant 0 : index
    %38 = vector.load %arg14[%c0_18, %c0_19, %c0_20] : memref<1x8x128xbf16, #tpu.memory_space<vmem>>, vector<1x8x128xbf16>
    %39 = vector.shape_cast %38 : vector<1x8x128xbf16> to vector<8x128xbf16>
    %40 = vector.shape_cast %37 : vector<8x128xbf16> to vector<1x8x128xbf16>
    tpu.vector_store %arg14[%c0_18, %c0_19, %c0_20], %40 {strides = array<i32>} : memref<1x8x128xbf16, #tpu.memory_space<vmem>>, vector<1x8x128xbf16>,
    return
  }
  func.func @transform_0(%arg0: i32, %arg1: i32) -> (i32, i32, i32) {
    %c0_i32 = arith.constant 0 : i32
    %c0_i32_0 = arith.constant 0 : i32
    %c0_i32_1 = arith.constant 0 : i32
    return %arg0, %c0_i32, %c0_i32_0 : i32, i32, i32
  }
  func.func @transform_1(%arg0: i32, %arg1: i32) -> (i32, i32, i32) {
    %c0_i32 = arith.constant 0 : i32
    %c0_i32_0 = arith.constant 0 : i32
    %c0_i32_1 = arith.constant 0 : i32
    %c0_i32_2 = arith.constant 0 : i32
    return %c0_i32, %c0_i32_0, %c0_i32_1 : i32, i32, i32
  }
  func.func @transform_2(%arg0: i32, %arg1: i32) -> (i32, i32, i32) {
    %c0_i32 = arith.constant 0 : i32
    %c0_i32_0 = arith.constant 0 : i32
    %c0_i32_1 = arith.constant 0 : i32
    %c0_i32_2 = arith.constant 0 : i32
    return %c0_i32, %c0_i32_0, %c0_i32_1 : i32, i32, i32
  }
  func.func @transform_3(%arg0: i32, %arg1: i32) -> (i32, i32, i32) {
    %c0_i32 = arith.constant 0 : i32
    %c0_i32_0 = arith.constant 0 : i32
    %c0_i32_1 = arith.constant 0 : i32
    %c0_i32_2 = arith.constant 0 : i32
    return %c0_i32, %c0_i32_0, %c0_i32_1 : i32, i32, i32
  }
  func.func @transform_4(%arg0: i32, %arg1: i32) -> (i32, i32, i32) {
    %c0_i32 = arith.constant 0 : i32
    %c0_i32_0 = arith.constant 0 : i32
    %c0_i32_1 = arith.constant 0 : i32
    %c0_i32_2 = arith.constant 0 : i32
    return %c0_i32, %c0_i32_0, %c0_i32_1 : i32, i32, i32
  }
  func.func @transform_5(%arg0: i32, %arg1: i32) -> (i32, i32, i32) {
    %c0_i32 = arith.constant 0 : i32
    %c0_i32_0 = arith.constant 0 : i32
    %c0_i32_1 = arith.constant 0 : i32
    %c0_i32_2 = arith.constant 0 : i32
    return %c0_i32, %c0_i32_0, %c0_i32_1 : i32, i32, i32
  }
  func.func @transform_6(%arg0: i32, %arg1: i32) -> (i32, i32, i32) {
    %c0_i32 = arith.constant 0 : i32
    %c0_i32_0 = arith.constant 0 : i32
    %c0_i32_1 = arith.constant 0 : i32
    %c0_i32_2 = arith.constant 0 : i32
    return %c0_i32, %c0_i32_0, %c0_i32_1 : i32, i32, i32
  }
  func.func @transform_7(%arg0: i32, %arg1: i32) -> (i32, i32, i32) {
    %c0_i32 = arith.constant 0 : i32
    %c0_i32_0 = arith.constant 0 : i32
    %c0_i32_1 = arith.constant 0 : i32
    %c0_i32_2 = arith.constant 0 : i32
    return %c0_i32, %c0_i32_0, %c0_i32_1 : i32, i32, i32
  }
  func.func @transform_8(%arg0: i32, %arg1: i32) -> (i32, i32) {
    %c0_i32 = arith.constant 0 : i32
    %c0_i32_0 = arith.constant 0 : i32
    %c0_i32_1 = arith.constant 0 : i32
    return %c0_i32, %c0_i32_0 : i32, i32
  }
  func.func @transform_9(%arg0: i32, %arg1: i32) -> (i32, i32) {
    %c0_i32 = arith.constant 0 : i32
    %c0_i32_0 = arith.constant 0 : i32
    %c0_i32_1 = arith.constant 0 : i32
    return %c0_i32, %c0_i32_0 : i32, i32
  }
  func.func @transform_10(%arg0: i32, %arg1: i32) -> (i32, i32) {
    %c0_i32 = arith.constant 0 : i32
    %c0_i32_0 = arith.constant 0 : i32
    %c0_i32_1 = arith.constant 0 : i32
    return %c0_i32, %c0_i32_0 : i32, i32
  }
  func.func @transform_11(%arg0: i32, %arg1: i32) -> (i32, i32, i32, i32) {
    %c0_i32 = arith.constant 0 : i32
    %c0_i32_0 = arith.constant 0 : i32
    %c0_i32_1 = arith.constant 0 : i32
    %c0_i32_2 = arith.constant 0 : i32
    return %arg0, %c0_i32, %c0_i32_0, %c0_i32_1 : i32, i32, i32, i32
  }
  func.func @transform_12(%arg0: i32, %arg1: i32) -> (i32, i32, i32) {
    %c0_i32 = arith.constant 0 : i32
    %c0_i32_0 = arith.constant 0 : i32
    return %arg0, %arg1, %c0_i32 : i32, i32, i32
  }
}

module attributes {stable_mosaic.version = 11 : i64} {
  func.func @_pooler_out_kernel(%arg0: memref<2x128xbf16, #tpu.memory_space<vmem>>, %arg1: memref<128x128xbf16, #tpu.memory_space<vmem>>, %arg2: memref<1x128xf32, #tpu.memory_space<vmem>>, %arg3: memref<1x128xbf16, #tpu.memory_space<vmem>>, %arg4: memref<1x1xf32, #tpu.memory_space<vmem>>, %arg5: memref<2x1xf32, #tpu.memory_space<vmem>>) attributes {dimension_semantics = [], scalar_prefetch = 0 : i64, scratch_operands = 0 : i64, tpu.core_type = #tpu.core_type<tc>} {
    %c0 = arith.constant 0 : index
    %c0_0 = arith.constant 0 : index
    %0 = vector.load %arg0[%c0, %c0_0] : memref<2x128xbf16, #tpu.memory_space<vmem>>, vector<2x128xbf16>
    %c0_1 = arith.constant 0 : index
    %c0_2 = arith.constant 0 : index
    %1 = vector.load %arg1[%c0_1, %c0_2] : memref<128x128xbf16, #tpu.memory_space<vmem>>, vector<128x128xbf16>
    %cst = arith.constant dense<0.000000e+00> : vector<2x128xf32>
    %2 = tpu.matmul %0, %1, %cst {dimension_numbers = #tpu.dot_dimension_numbers<[1], [0], [0], [1], [0, 0, 1, 1], [], []>} : vector<2x128xbf16>, vector<128x128xbf16>, vector<2x128xf32> -> vector<2x128xf32>
    %c0_3 = arith.constant 0 : index
    %c0_4 = arith.constant 0 : index
    %3 = vector.load %arg2[%c0_3, %c0_4] : memref<1x128xf32, #tpu.memory_space<vmem>>, vector<1x128xf32>
    %4 = vector.broadcast %3 : vector<1x128xf32> to vector<2x128xf32>
    %5 = arith.addf %2, %4 : vector<2x128xf32>
    %6 = math.tanh %5 : vector<2x128xf32>
    %c0_5 = arith.constant 0 : index
    %c0_6 = arith.constant 0 : index
    %7 = vector.load %arg3[%c0_5, %c0_6] : memref<1x128xbf16, #tpu.memory_space<vmem>>, vector<1x128xbf16>
    %8 = arith.extf %7 : vector<1x128xbf16> to vector<1x128xf32>
    %9 = vector.broadcast %8 : vector<1x128xf32> to vector<2x128xf32>
    %10 = arith.mulf %6, %9 : vector<2x128xf32>
    %cst_7 = arith.constant dense<0.000000e+00> : vector<2xf32>
    %11 = vector.multi_reduction <add>, %10, %cst_7 [1] : vector<2x128xf32> to vector<2xf32>
    %12 = vector.shape_cast %11 : vector<2xf32> to vector<2x1xf32>
    %c0_8 = arith.constant 0 : index
    %c0_9 = arith.constant 0 : index
    %13 = vector.load %arg4[%c0_8, %c0_9] : memref<1x1xf32, #tpu.memory_space<vmem>>, vector<1x1xf32>
    %14 = vector.broadcast %13 : vector<1x1xf32> to vector<2x1xf32>
    %15 = arith.addf %12, %14 : vector<2x1xf32>
    %c0_10 = arith.constant 0 : index
    %c0_11 = arith.constant 0 : index
    %16 = vector.load %arg5[%c0_10, %c0_11] : memref<2x1xf32, #tpu.memory_space<vmem>>, vector<2x1xf32>
    tpu.vector_store %arg5[%c0_10, %c0_11], %15 {strides = array<i32>} : memref<2x1xf32, #tpu.memory_space<vmem>>, vector<2x1xf32>,
    return
  }
}

</mosaic_0001>

<llo_original>
// kernel: bert_base_uncased_forward.6
$region0: #{bert_base_uncased_forward.6}
  #allocation0 [shape = 'u32[]', space=smem, size = 0x4, offset = 0x4, fixed_abs, tag = 'smem constant byte address 0x4 - core index']
  #allocation1 [shape = 'u32[72,128]{1,0:T(1,128)}', space=vmem, size = 0x9000, scoped, tag = 'internal scratch']
  %s0 = inlined_call_operand.vmem [shape: f32[2,8,128], index: 0, kind: input, shape index: {}]
  %s1 = inlined_call_operand.vmem [shape: f32[2,8,128], index: 1, kind: input, shape index: {}]
  %s2 = inlined_call_operand.vmem [shape: f32[8,128], index: 2, kind: input, shape index: {}]
  %s3 = inlined_call_operand.vmem [shape: f32[1,128], index: 3, kind: input, shape index: {}]
  %s4 = inlined_call_operand.vmem [shape: f32[1,128], index: 4, kind: input, shape index: {}]
  %s5 = inlined_call_operand.vmem [shape: bf16[2,8,128], index: 5, kind: output, shape index: {}]
  %s6 = sld [smem:[#allocation0]]
  $region53: #{bert_base_uncased_forward.6} parent=0
    _
  %s8 = ssub.s32 1, %s6
  %s9 = scalar_select 0, %s8, %s6
  loop: start=0, step=1, limit=4
  $region2: #{bert_base_uncased_forward.6} parent=0 // loop_pre_header
    _
  $region3: #{bert_base_uncased_forward.6} parent=0 // loop_header
    %s11 = sphi 0, %s15
    %p12 = scmp.ge.s32.totalorder %s11, 4
    %s18 = sphi 0, %s30
    %s19 = sphi 0, %s26
    %s20 = sphi 0, %s18
    %s21 = sphi 0, %s19
    %s22 = sphi 0, %s20
    %s23 = sphi 0, %s21
    %s35 = sphi 0, %s37
    %s38 = sphi 0, %s35
    %s39 = sphi 0, %s38
    %s55 = sphi 0, %s39
    %s63 = sphi 0, %s65
    %s66 = sphi 0, %s63
    %s67 = sphi 0, %s66
    %s83 = sphi 0, %s67
    %s89 = sphi 0, %s91
    %s92 = sphi 0, %s89
    %s93 = sphi 0, %s92
    %s109 = sphi 0, %s93
    %s113 = sphi 0, %s113
    %s115 = sphi 0, %s113
    %s116 = sphi 0, %s115
    %s130 = sphi 0, %s116
    %s134 = sphi 0, %s134
    %s136 = sphi 0, %s134
    %s137 = sphi 0, %s136
    %s151 = sphi 0, %s137
    %s159 = sphi 0, %s161
    %s162 = sphi 0, %s159
    %s163 = sphi 0, %s162
    %s179 = sphi 0, %s163
  $region4: #{bert_base_uncased_forward.6} parent=0 // loop_header_branch
    %14 = sbr.rel (%p12) target = $region8
  $region5: #{bert_base_uncased_forward.6} parent=0 // loop_body
    %s16 = ssub.s32 %s11, 1
    %s17 = ssub.s32 %s11, 2
    %s24 = sadd.s32 1, %s19
    %p25 = scmp.ge.s32.totalorder %s24, 1
    %s26 = scalar_select %p25, 0, %s24
    %s27 = sadd.s32 1, %s18
    %s28 = scalar_select %p25, %s27, %s18
    %p29 = scmp.ge.s32.totalorder %s28, 2
    %s30 = scalar_select %p29, 0, %s28
    %s31 = ssub.s32 %s18, %s30
    %s32 = ssub.s32 %s19, %s26
    %s33 = sor.u32 %s31, %s32
    %p34 = scmp.eq.s32.totalorder %s33, 0
    %s36 = sadd.s32 %s35, 1
    %s37 = scalar_select %p34, %s35, %s36
    %p40 = pneg %p34
    %p41 = scmp.eq.s32.totalorder %s11, 1
    %p42 = por %p40, %p41
    %p43 = scmp.ne.s32.totalorder %s35, %s38
    %p44 = scmp.eq.s32.totalorder %s11, 0
    %p45 = por %p43, %p44
    %p46 = scmp.ne.s32.totalorder %s35, %s38
    %p47 = scmp.eq.s32.totalorder %s16, 1
    %p48 = por %p46, %p47
    %p49 = scmp.ne.s32.totalorder %s38, %s39
    %p50 = scmp.eq.s32.totalorder %s16, 0
    %p51 = por %p49, %p50
    %p52 = scmp.ne.s32.totalorder %s38, %s39
    %p53 = scmp.eq.s32.totalorder %s17, 1
    %p54 = por %p52, %p53
    %p56 = scmp.ne.s32.totalorder %s39, %s55
    %p57 = scmp.eq.s32.totalorder %s17, 0
    %p58 = por %p56, %p57
    %s59 = ssub.s32 %s18, %s30
    %s60 = ssub.s32 %s19, %s26
    %s61 = sor.u32 %s59, %s60
    %p62 = scmp.eq.s32.totalorder %s61, 0
    %s64 = sadd.s32 %s63, 1
    %s65 = scalar_select %p62, %s63, %s64
    %p68 = pneg %p62
    %p69 = scmp.eq.s32.totalorder %s11, 1
    %p70 = por %p68, %p69
    %p71 = scmp.ne.s32.totalorder %s63, %s66
    %p72 = scmp.eq.s32.totalorder %s11, 0
    %p73 = por %p71, %p72
    %p74 = scmp.ne.s32.totalorder %s63, %s66
    %p75 = scmp.eq.s32.totalorder %s16, 1
    %p76 = por %p74, %p75
    %p77 = scmp.ne.s32.totalorder %s66, %s67
    %p78 = scmp.eq.s32.totalorder %s16, 0
    %p79 = por %p77, %p78
    %p80 = scmp.ne.s32.totalorder %s66, %s67
    %p81 = scmp.eq.s32.totalorder %s17, 1
    %p82 = por %p80, %p81
    %p84 = scmp.ne.s32.totalorder %s67, %s83
    %p85 = scmp.eq.s32.totalorder %s17, 0
    %p86 = por %p84, %p85
    %s87 = ssub.s32 %s19, %s26
    %p88 = scmp.eq.s32.totalorder %s87, 0
    %s90 = sadd.s32 %s89, 1
    %s91 = scalar_select %p88, %s89, %s90
    %p94 = pneg %p88
    %p95 = scmp.eq.s32.totalorder %s11, 1
    %p96 = por %p94, %p95
    %p97 = scmp.ne.s32.totalorder %s89, %s92
    %p98 = scmp.eq.s32.totalorder %s11, 0
    %p99 = por %p97, %p98
    %p100 = scmp.ne.s32.totalorder %s89, %s92
    %p101 = scmp.eq.s32.totalorder %s16, 1
    %p102 = por %p100, %p101
    %p103 = scmp.ne.s32.totalorder %s92, %s93
    %p104 = scmp.eq.s32.totalorder %s16, 0
    %p105 = por %p103, %p104
    %p106 = scmp.ne.s32.totalorder %s92, %s93
    %p107 = scmp.eq.s32.totalorder %s17, 1
    %p108 = por %p106, %p107
    %p110 = scmp.ne.s32.totalorder %s93, %s109
    %p111 = scmp.eq.s32.totalorder %s17, 0
    %p112 = por %p110, %p111
    %s114 = sadd.s32 %s113, 1
    %p117 = scmp.eq.s32.totalorder %s11, 1
    %p118 = scmp.ne.s32.totalorder %s113, %s115
    %p119 = scmp.eq.s32.totalorder %s11, 0
    %p120 = por %p118, %p119
    %p121 = scmp.ne.s32.totalorder %s113, %s115
    %p122 = scmp.eq.s32.totalorder %s16, 1
    %p123 = por %p121, %p122
    %p124 = scmp.ne.s32.totalorder %s115, %s116
    %p125 = scmp.eq.s32.totalorder %s16, 0
    %p126 = por %p124, %p125
    %p127 = scmp.ne.s32.totalorder %s115, %s116
    %p128 = scmp.eq.s32.totalorder %s17, 1
    %p129 = por %p127, %p128
    %p131 = scmp.ne.s32.totalorder %s116, %s130
    %p132 = scmp.eq.s32.totalorder %s17, 0
    %p133 = por %p131, %p132
    %s135 = sadd.s32 %s134, 1
    %p138 = scmp.eq.s32.totalorder %s11, 1
    %p139 = scmp.ne.s32.totalorder %s134, %s136
    %p140 = scmp.eq.s32.totalorder %s11, 0
    %p141 = por %p139, %p140
    %p142 = scmp.ne.s32.totalorder %s134, %s136
    %p143 = scmp.eq.s32.totalorder %s16, 1
    %p144 = por %p142, %p143
    %p145 = scmp.ne.s32.totalorder %s136, %s137
    %p146 = scmp.eq.s32.totalorder %s16, 0
    %p147 = por %p145, %p146
    %p148 = scmp.ne.s32.totalorder %s136, %s137
    %p149 = scmp.eq.s32.totalorder %s17, 1
    %p150 = por %p148, %p149
    %p152 = scmp.ne.s32.totalorder %s137, %s151
    %p153 = scmp.eq.s32.totalorder %s17, 0
    %p154 = por %p152, %p153
    %s155 = ssub.s32 %s18, %s30
    %s156 = ssub.s32 %s19, %s26
    %s157 = sor.u32 %s155, %s156
    %p158 = scmp.eq.s32.totalorder %s157, 0
    %s160 = sadd.s32 %s159, 1
    %s161 = scalar_select %p158, %s159, %s160
    %p164 = pneg %p158
    %p165 = scmp.eq.s32.totalorder %s11, 1
    %p166 = por %p164, %p165
    %p167 = scmp.ne.s32.totalorder %s159, %s162
    %p168 = scmp.eq.s32.totalorder %s11, 0
    %p169 = por %p167, %p168
    %p170 = scmp.ne.s32.totalorder %s159, %s162
    %p171 = scmp.eq.s32.totalorder %s16, 1
    %p172 = por %p170, %p171
    %p173 = scmp.ne.s32.totalorder %s162, %s163
    %p174 = scmp.eq.s32.totalorder %s16, 0
    %p175 = por %p173, %p174
    %p176 = scmp.ne.s32.totalorder %s162, %s163
    %p177 = scmp.eq.s32.totalorder %s17, 1
    %p178 = por %p176, %p177
    %p180 = scmp.ne.s32.totalorder %s163, %s179
    %p181 = scmp.eq.s32.totalorder %s17, 0
    %p182 = por %p180, %p181
    %p183 = scmp.le.s32.totalorder 1, %s11
    %p184 = scmp.lt.s32.totalorder %s11, 3
    %p185 = pnand %p183, %p184
    %p186 = pneg %p185
    // Predicated region
    $region9: #{bert_base_uncased_forward.6} parent=5 // pred_check
      _
    $region10: #{bert_base_uncased_forward.6} parent=5 // pred_check_branch
      %188 = sbr.rel (%p185) target = $region12
    $region11: #{bert_base_uncased_forward.6} parent=5 // pred_region
      %s189 = ssub.s32 %s11, 1
      // Predicated region
      $region13: #{bert_base_uncased_forward.6} parent=11 // pred_check
        %p190 = pneg %p105
      $region14: #{bert_base_uncased_forward.6} parent=11 // pred_check_branch
        %192 = sbr.rel (%p190) target = $region16
      $region15: #{bert_base_uncased_forward.6} parent=11 // pred_region
        %p193 = scmp.lt.s32.totalorder %s21, 0
        %s194 = scalar_select %p193, %s21, 0
        %s195 = smul.addr %s194, 8
        %s196 = scalar_lea.vmem %s2, %s195
      $region16: #{bert_base_uncased_forward.6} parent=11 // pred_fallthru
        _
      // Predicated region
      $region17: #{bert_base_uncased_forward.6} parent=11 // pred_check
        %p197 = pneg %p126
      $region18: #{bert_base_uncased_forward.6} parent=11 // pred_check_branch
        %199 = sbr.rel (%p197) target = $region20
      $region19: #{bert_base_uncased_forward.6} parent=11 // pred_region
        _
      $region20: #{bert_base_uncased_forward.6} parent=11 // pred_fallthru
        _
      // Predicated region
      $region21: #{bert_base_uncased_forward.6} parent=11 // pred_check
        %p200 = pneg %p147
      $region22: #{bert_base_uncased_forward.6} parent=11 // pred_check_branch
        %202 = sbr.rel (%p200) target = $region24
      $region23: #{bert_base_uncased_forward.6} parent=11 // pred_region
        _
      $region24: #{bert_base_uncased_forward.6} parent=11 // pred_fallthru
        _
    $region12: #{bert_base_uncased_forward.6} parent=5 // pred_fallthru
      _
    %p203 = scmp.lt.s32.totalorder %s11, 2
    // Predicated region
    $region25: #{bert_base_uncased_forward.6} parent=5 // pred_check
      %p204 = pneg %p203
    $region26: #{bert_base_uncased_forward.6} parent=5 // pred_check_branch
      %206 = sbr.rel (%p204) target = $region28
    $region27: #{bert_base_uncased_forward.6} parent=5 // pred_region
      // Predicated region
      $region29: #{bert_base_uncased_forward.6} parent=27 // pred_check
        %p207 = pneg %p45
      $region30: #{bert_base_uncased_forward.6} parent=27 // pred_check_branch
        %209 = sbr.rel (%p207) target = $region32
      $region31: #{bert_base_uncased_forward.6} parent=27 // pred_region
        %p210 = scmp.lt.s32.totalorder %s18, 1
        %s211 = scalar_select %p210, %s18, 1
        %p212 = scmp.lt.s32.totalorder %s19, 0
        %s213 = scalar_select %p212, %s19, 0
        %s214 = sadd.s32 %s213, %s211
        %s215 = smul.addr %s214, 8
        %s216 = scalar_lea.vmem %s0, %s215
      $region32: #{bert_base_uncased_forward.6} parent=27 // pred_fallthru
        _
      // Predicated region
      $region33: #{bert_base_uncased_forward.6} parent=27 // pred_check
        %p217 = pneg %p73
      $region34: #{bert_base_uncased_forward.6} parent=27 // pred_check_branch
        %219 = sbr.rel (%p217) target = $region36
      $region35: #{bert_base_uncased_forward.6} parent=27 // pred_region
        %p220 = scmp.lt.s32.totalorder %s18, 1
        %s221 = scalar_select %p220, %s18, 1
        %p222 = scmp.lt.s32.totalorder %s19, 0
        %s223 = scalar_select %p222, %s19, 0
        %s224 = sadd.s32 %s223, %s221
        %s225 = smul.addr %s224, 8
        %s226 = scalar_lea.vmem %s1, %s225
      $region36: #{bert_base_uncased_forward.6} parent=27 // pred_fallthru
        _
    $region28: #{bert_base_uncased_forward.6} parent=5 // pred_fallthru
      _
    %p227 = scmp.le.s32.totalorder 1, %s11
    %p228 = scmp.lt.s32.totalorder %s11, 3
    %p229 = pnand %p227, %p228
    %p230 = pneg %p229
    // Predicated region
    $region37: #{bert_base_uncased_forward.6} parent=5 // pred_check
      _
    $region38: #{bert_base_uncased_forward.6} parent=5 // pred_check_branch
      %232 = sbr.rel (%p229) target = $region40
    $region39: #{bert_base_uncased_forward.6} parent=5 // pred_region
      %s233 = ssub.s32 %s11, 1
      %p234 = scmp.lt.s32.totalorder %s20, 1
      %s235 = scalar_select %p234, %s20, 1
      %p236 = scmp.lt.s32.totalorder %s21, 0
      %s237 = scalar_select %p236, %s21, 0
      %s238 = sadd.s32 %s237, %s235
      %s239 = smul.addr %s238, 8
      %s240 = scalar_lea.vmem %s0, %s239
      %p241 = pneg %p51
      %p242 = pneg %p48
      %p243 = scmp.lt.s32.totalorder %s20, 1
      %s244 = scalar_select %p243, %s20, 1
      %p245 = scmp.lt.s32.totalorder %s21, 0
      %s246 = scalar_select %p245, %s21, 0
      %s247 = sadd.s32 %s246, %s244
      %s248 = smul.addr %s247, 8
      %s249 = scalar_lea.vmem %s1, %s248
      %p250 = pneg %p79
      %p251 = pneg %p76
      %p252 = scmp.lt.s32.totalorder %s21, 0
      %s253 = scalar_select %p252, %s21, 0
      %s254 = smul.addr %s253, 8
      %s255 = scalar_lea.vmem %s2, %s254
      %p256 = pneg %p105
      %p257 = pneg %p102
      %p258 = pneg %p126
      %p259 = pneg %p123
      %p260 = pneg %p147
      %p261 = pneg %p144
      %p262 = pneg %p175
      %p263 = pneg %p172
      %p264 = scmp.lt.s32.totalorder %s20, 1
      %s265 = scalar_select %p264, %s20, 1
      %p266 = scmp.lt.s32.totalorder %s21, 0
      %s267 = scalar_select %p266, %s21, 0
      %s268 = sadd.s32 %s267, %s265
      %s269 = smul.addr %s268, 4
      %s270 = scalar_lea.vmem %s5, %s269
      %p271 = scmp.lt.s32.totalorder %s20, 1
      %s272 = scalar_select %p271, %s20, 1
      %p273 = scmp.lt.s32.totalorder %s21, 0
      %s274 = scalar_select %p273, %s21, 0
      %s275 = sadd.s32 %s274, %s272
      %s276 = smul.addr %s275, 8
      %s277 = scalar_lea.vmem %s0, %s276
      %p278 = scmp.lt.s32.totalorder %s20, 1
      %s279 = scalar_select %p278, %s20, 1
      %p280 = scmp.lt.s32.totalorder %s21, 0
      %s281 = scalar_select %p280, %s21, 0
      %s282 = sadd.s32 %s281, %s279
      %s283 = smul.addr %s282, 8
      %s284 = scalar_lea.vmem %s1, %s283
      %p285 = scmp.lt.s32.totalorder %s21, 0
      %s286 = scalar_select %p285, %s21, 0
      %s287 = smul.addr %s286, 8
      %s288 = scalar_lea.vmem %s2, %s287
      %p289 = scmp.lt.s32.totalorder %s20, 1
      %s290 = scalar_select %p289, %s20, 1
      %p291 = scmp.lt.s32.totalorder %s21, 0
      %s292 = scalar_select %p291, %s21, 0
      %s293 = sadd.s32 %s292, %s290
      %s294 = smul.addr %s293, 4
      %s295 = scalar_lea.vmem %s5, %s294
      %v296 = vld [vmem:[%s277] sm:$0xff]
      %v297 = vld [vmem:[%s284] sm:$0xff]
      %v298 = vadd.f32 %v296, %v297
      %v299 = vld [vmem:[%s288] sm:$0xff]
      %v300 = vadd.f32 %v298, %v299
      %v301 = vld [vmem:[%s3] sm:$0x1]
      %v302 = vld [vmem:[%s4] sm:$0x1]
      %303 = vadd.xlane.f32.xlu0 %v300
      %v304 = vpop.xlane.xlu0 %303
      %v305 = vrcp.pop 128.0
      %v306 = vmul.f32 128.0, %v305
      %v307 = vsub.f32 1.0, %v306
      %v308 = vmul.f32 %v305, %v307
      %v309 = vadd.f32 %v305, %v308
      %vm310 = vweird.f32 %v305
      %v311 = vsel %vm310, %v305, %v309
      %v312 = vmul.f32 %v304, %v311
      %v313 = vsub.f32 %v300, %v312
      %v314 = vmul.f32 %v313, %v313
      %315 = vadd.xlane.f32.xlu0 %v314
      %v316 = vpop.xlane.xlu0 %315
      %v317 = vmul.f32 %v316, %v311
      %v318 = vadd.f32 %v317, 1e-12
      %v319 = vrsqrt.pop %v318
      %v320 = vmul.f32 %v319, %v318
      %v321 = vmul.f32 %v320, %v319
      %v322 = vmul.f32 0.5, %v321
      %v323 = vsub.f32 1.5, %v322
      %v324 = vmul.f32 %v319, %v323
      %vm325 = vweird.f32 %v318
      %vm326 = vweird.f32 %v319
      %vm327 = vmor %vm325, %vm326
      %v328 = vsel %vm327, %v319, %v324
      %v329 = vmul.f32 %v313, %v328
      %v331 = vperm.slane %v301, 0
      %v333 = vmul.f32 %v329, %v331
      %v335 = vperm.slane %v302, 0
      %v337 = vadd.f32 %v333, %v335
      %v338 = vpack.c.bf16 %v337, %v337
      %339 = vst [vmem:[%s295] sm:$0xf] %v338
      %p340 = scmp.lt.s32.totalorder %s20, 1
      %s341 = scalar_select %p340, %s20, 1
      %p342 = scmp.lt.s32.totalorder %s21, 0
      %s343 = scalar_select %p342, %s21, 0
      %s344 = sadd.s32 %s343, %s341
      %s345 = smul.addr %s344, 4
      %s346 = scalar_lea.vmem %s5, %s345
      // Predicated region
      $region41: #{bert_base_uncased_forward.6} parent=39 // pred_check
        %p347 = pneg %p172
      $region42: #{bert_base_uncased_forward.6} parent=39 // pred_check_branch
        %349 = sbr.rel (%p347) target = $region44
      $region43: #{bert_base_uncased_forward.6} parent=39 // pred_region
        _
      $region44: #{bert_base_uncased_forward.6} parent=39 // pred_fallthru
        _
    $region40: #{bert_base_uncased_forward.6} parent=5 // pred_fallthru
      _
    %p350 = scmp.le.s32.totalorder 2, %s11
    // Predicated region
    $region45: #{bert_base_uncased_forward.6} parent=5 // pred_check
      %p351 = pneg %p350
    $region46: #{bert_base_uncased_forward.6} parent=5 // pred_check_branch
      %353 = sbr.rel (%p351) target = $region48
    $region47: #{bert_base_uncased_forward.6} parent=5 // pred_region
      %s354 = ssub.s32 %s11, 2
      // Predicated region
      $region49: #{bert_base_uncased_forward.6} parent=47 // pred_check
        %p355 = pneg %p178
      $region50: #{bert_base_uncased_forward.6} parent=47 // pred_check_branch
        %357 = sbr.rel (%p355) target = $region52
      $region51: #{bert_base_uncased_forward.6} parent=47 // pred_region
        %p358 = scmp.lt.s32.totalorder %s22, 1
        %s359 = scalar_select %p358, %s22, 1
        %p360 = scmp.lt.s32.totalorder %s23, 0
        %s361 = scalar_select %p360, %s23, 0
        %s362 = sadd.s32 %s361, %s359
        %s363 = smul.addr %s362, 4
        %s364 = scalar_lea.vmem %s5, %s363
      $region52: #{bert_base_uncased_forward.6} parent=47 // pred_fallthru
        _
    $region48: #{bert_base_uncased_forward.6} parent=5 // pred_fallthru
      _
  $region6: #{bert_base_uncased_forward.6} parent=0 // loop_footer
    %s15 = sadd.s32 1, %s11
  $region7: #{bert_base_uncased_forward.6} parent=0 // loop_footer_branch
    %10 = sbr.rel target = $region3
  $region8: #{bert_base_uncased_forward.6} parent=0 // loop_exit
    _

// kernel: bert_base_uncased_forward.11
$region0: #{bert_base_uncased_forward.11}
  #allocation0 [shape = 'u32[]', space=smem, size = 0x4, offset = 0x4, fixed_abs, tag = 'smem constant byte address 0x4 - core index']
  #allocation1 [shape = 'u32[72,128]{1,0:T(1,128)}', space=vmem, size = 0x9000, scoped, tag = 'internal scratch']
  #allocation2 [shape = 'f32[1,1]{1,0:T(1,128)S(1)}', space=vmem, size = 0x200, scoped, tag = 'scoped memory for bert_base_uncased_forward.11']
  %s0 = inlined_call_operand.vmem [shape: bf16[2,128], index: 0, kind: input, shape index: {}]
  %s1 = inlined_call_operand.vmem [shape: bf16[128,128], index: 1, kind: input, shape index: {}]
  %s2 = inlined_call_operand.vmem [shape: f32[1,128], index: 2, kind: input, shape index: {}]
  %s3 = inlined_call_operand.vmem [shape: bf16[1,128], index: 3, kind: input, shape index: {}]
  %s4 = inlined_call_operand.<no memory space> [shape: f32[1,1], index: 4, kind: input, shape index: {}]
  %s5 = inlined_call_operand.vmem [shape: f32[2,1], index: 5, kind: output, shape index: {}]
  %s6 = sld [smem:[#allocation0]]
  $region30: #{bert_base_uncased_forward.11} parent=0
    _
  %s8 = ssub.s32 1, %s6
  %s9 = scalar_select 0, %s8, %s6
  %v10 = vstv %s4
  %11 = vst [vmem:[#allocation2] sm:$0x1] %v10
  // Predicated region
  $region2: #{bert_base_uncased_forward.11} parent=0 // pred_check
    _
  $region3: #{bert_base_uncased_forward.11} parent=0 // pred_check_branch
    %13 = sbr.rel (0) target = $region5
  $region4: #{bert_base_uncased_forward.11} parent=0 // pred_region
    _
  $region5: #{bert_base_uncased_forward.11} parent=0 // pred_fallthru
    _
  // Predicated region
  $region6: #{bert_base_uncased_forward.11} parent=0 // pred_check
    _
  $region7: #{bert_base_uncased_forward.11} parent=0 // pred_check_branch
    %15 = sbr.rel (0) target = $region9
  $region8: #{bert_base_uncased_forward.11} parent=0 // pred_region
    _
  $region9: #{bert_base_uncased_forward.11} parent=0 // pred_fallthru
    _
  // Predicated region
  $region10: #{bert_base_uncased_forward.11} parent=0 // pred_check
    _
  $region11: #{bert_base_uncased_forward.11} parent=0 // pred_check_branch
    %17 = sbr.rel (0) target = $region13
  $region12: #{bert_base_uncased_forward.11} parent=0 // pred_region
    _
  $region13: #{bert_base_uncased_forward.11} parent=0 // pred_fallthru
    _
  // Predicated region
  $region14: #{bert_base_uncased_forward.11} parent=0 // pred_check
    _
  $region15: #{bert_base_uncased_forward.11} parent=0 // pred_check_branch
    %19 = sbr.rel (0) target = $region17
  $region16: #{bert_base_uncased_forward.11} parent=0 // pred_region
    _
  $region17: #{bert_base_uncased_forward.11} parent=0 // pred_fallthru
    _
  // Predicated region
  $region18: #{bert_base_uncased_forward.11} parent=0 // pred_check
    _
  $region19: #{bert_base_uncased_forward.11} parent=0 // pred_check_branch
    %21 = sbr.rel (0) target = $region21
  $region20: #{bert_base_uncased_forward.11} parent=0 // pred_region
    _
  $region21: #{bert_base_uncased_forward.11} parent=0 // pred_fallthru
    _
  %v22 = vld [vmem:[%s0] sm:$0x1]
  %v23 = vld [vmem:[%s1] sm:$0xf]
  %v24 = vld [vmem:[%s1 + $0x4] sm:$0xf]
  %v25 = vld [vmem:[%s1 + $0x8] sm:$0xf]
  %v26 = vld [vmem:[%s1 + $0xc] sm:$0xf]
  %v27 = vld [vmem:[%s1 + $0x10] sm:$0xf]
  %v28 = vld [vmem:[%s1 + $0x14] sm:$0xf]
  %v29 = vld [vmem:[%s1 + $0x18] sm:$0xf]
  %v30 = vld [vmem:[%s1 + $0x1c] sm:$0xf]
  %v31 = vld [vmem:[%s1 + $0x20] sm:$0xf]
  %v32 = vld [vmem:[%s1 + $0x24] sm:$0xf]
  %v33 = vld [vmem:[%s1 + $0x28] sm:$0xf]
  %v34 = vld [vmem:[%s1 + $0x2c] sm:$0xf]
  %v35 = vld [vmem:[%s1 + $0x30] sm:$0xf]
  %v36 = vld [vmem:[%s1 + $0x34] sm:$0xf]
  %v37 = vld [vmem:[%s1 + $0x38] sm:$0xf]
  %v38 = vld [vmem:[%s1 + $0x3c] sm:$0xf]
  %v39 = vld [vmem:[%s2] sm:$0x1]
  %v41 = vperm.slane %v39, 0
  %v59 = vunpack.c.l.b16 %v23
  %v60 = vunpack.c.l.b16 %v24
  %v61 = vunpack.c.l.b16 %v25
  %v62 = vunpack.c.l.b16 %v26
  %v63 = vunpack.c.l.b16 %v27
  %v64 = vunpack.c.l.b16 %v28
  %v65 = vunpack.c.l.b16 %v29
  %v66 = vunpack.c.l.b16 %v30
  %v67 = vunpack.c.l.b16 %v31
  %v68 = vunpack.c.l.b16 %v32
  %v69 = vunpack.c.l.b16 %v33
  %v70 = vunpack.c.l.b16 %v34
  %v71 = vunpack.c.l.b16 %v35
  %v72 = vunpack.c.l.b16 %v36
  %v73 = vunpack.c.l.b16 %v37
  %v74 = vunpack.c.l.b16 %v38
  %v75 = vpack.c.b16 %v60, %v59
  %v76 = vpack.c.b16 %v62, %v61
  %v77 = vpack.c.b16 %v64, %v63
  %v78 = vpack.c.b16 %v66, %v65
  %v79 = vpack.c.b16 %v68, %v67
  %v80 = vpack.c.b16 %v70, %v69
  %v81 = vpack.c.b16 %v72, %v71
  %v82 = vpack.c.b16 %v74, %v73
  %91 = vmatpush.bf16.msra.mxu0 %v82
  %92 = vmatpush.bf16.msra.mxu0 %v81
  %93 = vmatpush.bf16.msra.mxu0 %v80
  %94 = vmatpush.bf16.msra.mxu0 %v79
  %95 = vmatpush.bf16.msra.mxu0 %v78
  %96 = vmatpush.bf16.msra.mxu0 %v77
  %97 = vmatpush.bf16.msra.mxu0 %v76
  %98 = vmatpush.bf16.msra.mxu0 %v75
  %99 = vmatmul.bf16.gmra.mxu0 %v22
  %v100 = vpop.f32.mrf.mxu0
  %v101 = vadd.f32 %v41, %v100
  %v102 = vpop.f32.mrf.mxu0
  %103 = vdwg.mxu0
  %v104 = vtanh.pop %v101
  %v105 = vld [vmem:[%s3] sm:$0x1]
  %v106 = vunpack.c.l.bf16 %v105
  %v107 = vperm.slane %v106, 0
  %v108 = vmul.f32 %v104, %v107
  %vm109 = vcmask 1041408
  %v110 = vsel %vm109, %v108, 0.0
  %111 = vadd.xlane.f32.xlu0 %v110
  %v112 = vpop.xlane.xlu0 %111
  %v113 = vld [vmem:[#allocation2] sm:$0x1]
  %v115 = vperm.slane %v113, 0
  %v117 = vadd.f32 %v112, %v115
  %vm118 = vcmask 1024
  %119 = vst.msk [vmem:[%s5] sm:$0x3] %vm118, %v117
  // Predicated region
  $region22: #{bert_base_uncased_forward.11} parent=0 // pred_check
    _
  $region23: #{bert_base_uncased_forward.11} parent=0 // pred_check_branch
    %121 = sbr.rel (0) target = $region25
  $region24: #{bert_base_uncased_forward.11} parent=0 // pred_region
    _
  $region25: #{bert_base_uncased_forward.11} parent=0 // pred_fallthru
    _
  // Predicated region
  $region26: #{bert_base_uncased_forward.11} parent=0 // pred_check
    _
  $region27: #{bert_base_uncased_forward.11} parent=0 // pred_check_branch
    %123 = sbr.rel (0) target = $region29
  $region28: #{bert_base_uncased_forward.11} parent=0 // pred_region
    _
  $region29: #{bert_base_uncased_forward.11} parent=0 // pred_fallthru
    _

// kernel: bert_base_uncased_forward.8
$region0: #{bert_base_uncased_forward.8}
  #allocation0 [shape = 'u32[]', space=smem, size = 0x4, offset = 0x4, fixed_abs, tag = 'smem constant byte address 0x4 - core index']
  #allocation1 [shape = 'u32[72,128]{1,0:T(1,128)}', space=vmem, size = 0x9000, scoped, tag = 'internal scratch']
  #allocation2 [shape = 'f32[16,128]{1,0:T(8,128)}', space=vmem, size = 0x2000, scoped, tag = 'scratch operand']
  %s0 = inlined_call_operand.vmem [shape: bf16[16,128], index: 0, kind: input, shape index: {}]
  %s1 = inlined_call_operand.vmem [shape: bf16[128,512], index: 1, kind: input, shape index: {}]
  %s2 = inlined_call_operand.vmem [shape: f32[1,512], index: 2, kind: input, shape index: {}]
  %s3 = inlined_call_operand.vmem [shape: bf16[512,128], index: 3, kind: input, shape index: {}]
  %s4 = inlined_call_operand.vmem [shape: f32[1,128], index: 4, kind: input, shape index: {}]
  %s5 = inlined_call_operand.vmem [shape: f32[1,128], index: 5, kind: input, shape index: {}]
  %s6 = inlined_call_operand.vmem [shape: f32[1,128], index: 6, kind: input, shape index: {}]
  %s7 = inlined_call_operand.vmem [shape: bf16[16,128], index: 7, kind: output, shape index: {}]
  %s8 = sld [smem:[#allocation0]]
  $region46: #{bert_base_uncased_forward.8} parent=0
    _
  %s10 = ssub.s32 1, %s8
  %s11 = scalar_select 0, %s10, %s8
  // Predicated region
  $region2: #{bert_base_uncased_forward.8} parent=0 // pred_check
    _
  $region3: #{bert_base_uncased_forward.8} parent=0 // pred_check_branch
    %13 = sbr.rel (0) target = $region5
  $region4: #{bert_base_uncased_forward.8} parent=0 // pred_region
    _
  $region5: #{bert_base_uncased_forward.8} parent=0 // pred_fallthru
    _
  // Predicated region
  $region6: #{bert_base_uncased_forward.8} parent=0 // pred_check
    _
  $region7: #{bert_base_uncased_forward.8} parent=0 // pred_check_branch
    %15 = sbr.rel (0) target = $region9
  $region8: #{bert_base_uncased_forward.8} parent=0 // pred_region
    _
  $region9: #{bert_base_uncased_forward.8} parent=0 // pred_fallthru
    _
  // Predicated region
  $region10: #{bert_base_uncased_forward.8} parent=0 // pred_check
    _
  $region11: #{bert_base_uncased_forward.8} parent=0 // pred_check_branch
    %17 = sbr.rel (0) target = $region13
  $region12: #{bert_base_uncased_forward.8} parent=0 // pred_region
    _
  $region13: #{bert_base_uncased_forward.8} parent=0 // pred_fallthru
    _
  // Predicated region
  $region14: #{bert_base_uncased_forward.8} parent=0 // pred_check
    _
  $region15: #{bert_base_uncased_forward.8} parent=0 // pred_check_branch
    %19 = sbr.rel (0) target = $region17
  $region16: #{bert_base_uncased_forward.8} parent=0 // pred_region
    _
  $region17: #{bert_base_uncased_forward.8} parent=0 // pred_fallthru
    _
  // Predicated region
  $region18: #{bert_base_uncased_forward.8} parent=0 // pred_check
    _
  $region19: #{bert_base_uncased_forward.8} parent=0 // pred_check_branch
    %21 = sbr.rel (0) target = $region21
  $region20: #{bert_base_uncased_forward.8} parent=0 // pred_region
    _
  $region21: #{bert_base_uncased_forward.8} parent=0 // pred_fallthru
    _
  // Predicated region
  $region22: #{bert_base_uncased_forward.8} parent=0 // pred_check
    _
  $region23: #{bert_base_uncased_forward.8} parent=0 // pred_check_branch
    %23 = sbr.rel (0) target = $region25
  $region24: #{bert_base_uncased_forward.8} parent=0 // pred_region
    _
  $region25: #{bert_base_uncased_forward.8} parent=0 // pred_fallthru
    _
  // Predicated region
  $region26: #{bert_base_uncased_forward.8} parent=0 // pred_check
    _
  $region27: #{bert_base_uncased_forward.8} parent=0 // pred_check_branch
    %25 = sbr.rel (0) target = $region29
  $region28: #{bert_base_uncased_forward.8} parent=0 // pred_region
    _
  $region29: #{bert_base_uncased_forward.8} parent=0 // pred_fallthru
    _
  %v26 = vld [vmem:[%s0] sm:$0xf]
  %v27 = vld [vmem:[%s0 + $0x4] sm:$0xf]
  %p28 = scmp.eq.s32.totalorder 0, 0
  // Predicated region
  $region30: #{bert_base_uncased_forward.8} parent=0 // pred_check
    %p29 = pneg %p28
  $region31: #{bert_base_uncased_forward.8} parent=0 // pred_check_branch
    %31 = sbr.rel (%p29) target = $region33
  $region32: #{bert_base_uncased_forward.8} parent=0 // pred_region
    %v32 = vunpack.c.l.bf16 %v26
    %v33 = vunpack.c.l.bf16 %v27
    %v34 = vld [vmem:[%s4] sm:$0x1]
    %v36 = vperm.slane %v34, 0
    %v38 = vadd.f32 %v32, %v36
    %v39 = vadd.f32 %v33, %v36
    %40 = vst [vmem:[#allocation2] sm:$0xff] %v38
    %41 = vst [vmem:[#allocation2 + $0x8] sm:$0xff] %v39
  $region33: #{bert_base_uncased_forward.8} parent=0 // pred_fallthru
    _
  %v42 = vld [vmem:[%s1] sm:$0xff]
  %v43 = vld [vmem:[%s1 + $0x8] sm:$0xff]
  %v44 = vld [vmem:[%s1 + $0x10] sm:$0xff]
  %v45 = vld [vmem:[%s1 + $0x18] sm:$0xff]
  %v46 = vld [vmem:[%s1 + $0x20] sm:$0xff]
  %v47 = vld [vmem:[%s1 + $0x28] sm:$0xff]
  %v48 = vld [vmem:[%s1 + $0x30] sm:$0xff]
  %v49 = vld [vmem:[%s1 + $0x38] sm:$0xff]
  %v50 = vld [vmem:[%s1 + $0x40] sm:$0xff]
  %v51 = vld [vmem:[%s1 + $0x48] sm:$0xff]
  %v52 = vld [vmem:[%s1 + $0x50] sm:$0xff]
  %v53 = vld [vmem:[%s1 + $0x58] sm:$0xff]
  %v54 = vld [vmem:[%s1 + $0x60] sm:$0xff]
  %v55 = vld [vmem:[%s1 + $0x68] sm:$0xff]
  %v56 = vld [vmem:[%s1 + $0x70] sm:$0xff]
  %v57 = vld [vmem:[%s1 + $0x78] sm:$0xff]
  %v58 = vld [vmem:[%s1 + $0x80] sm:$0xff]
  %v59 = vld [vmem:[%s1 + $0x88] sm:$0xff]
  %v60 = vld [vmem:[%s1 + $0x90] sm:$0xff]
  %v61 = vld [vmem:[%s1 + $0x98] sm:$0xff]
  %v62 = vld [vmem:[%s1 + $0xa0] sm:$0xff]
  %v63 = vld [vmem:[%s1 + $0xa8] sm:$0xff]
  %v64 = vld [vmem:[%s1 + $0xb0] sm:$0xff]
  %v65 = vld [vmem:[%s1 + $0xb8] sm:$0xff]
  %v66 = vld [vmem:[%s1 + $0xc0] sm:$0xff]
  %v67 = vld [vmem:[%s1 + $0xc8] sm:$0xff]
  %v68 = vld [vmem:[%s1 + $0xd0] sm:$0xff]
  %v69 = vld [vmem:[%s1 + $0xd8] sm:$0xff]
  %v70 = vld [vmem:[%s1 + $0xe0] sm:$0xff]
  %v71 = vld [vmem:[%s1 + $0xe8] sm:$0xff]
  %v72 = vld [vmem:[%s1 + $0xf0] sm:$0xff]
  %v73 = vld [vmem:[%s1 + $0xf8] sm:$0xff]
  %v74 = vld [vmem:[%s2] sm:$0xf]
  %v76 = vperm.slane %v74, 0
  %v77 = vperm.slane %v74, 1
  %v78 = vperm.slane %v74, 2
  %v79 = vperm.slane %v74, 3
  %v86 = vunpack.c.l.b16 %v26
  %v87 = vunpack.c.l.b16 %v27
  %v88 = vpack.c.b16 %v87, %v86
  %v122 = vunpack.c.l.b16 %v42
  %v123 = vunpack.c.h.b16 %v42
  %v124 = vunpack.c.l.b16 %v43
  %v125 = vunpack.c.h.b16 %v43
  %v126 = vunpack.c.l.b16 %v44
  %v127 = vunpack.c.h.b16 %v44
  %v128 = vunpack.c.l.b16 %v45
  %v129 = vunpack.c.h.b16 %v45
  %v130 = vunpack.c.l.b16 %v46
  %v131 = vunpack.c.h.b16 %v46
  %v132 = vunpack.c.l.b16 %v47
  %v133 = vunpack.c.h.b16 %v47
  %v134 = vunpack.c.l.b16 %v48
  %v135 = vunpack.c.h.b16 %v48
  %v136 = vunpack.c.l.b16 %v49
  %v137 = vunpack.c.h.b16 %v49
  %v138 = vunpack.c.l.b16 %v50
  %v139 = vunpack.c.h.b16 %v50
  %v140 = vunpack.c.l.b16 %v51
  %v141 = vunpack.c.h.b16 %v51
  %v142 = vunpack.c.l.b16 %v52
  %v143 = vunpack.c.h.b16 %v52
  %v144 = vunpack.c.l.b16 %v53
  %v145 = vunpack.c.h.b16 %v53
  %v146 = vunpack.c.l.b16 %v54
  %v147 = vunpack.c.h.b16 %v54
  %v148 = vunpack.c.l.b16 %v55
  %v149 = vunpack.c.h.b16 %v55
  %v150 = vunpack.c.l.b16 %v56
  %v151 = vunpack.c.h.b16 %v56
  %v152 = vunpack.c.l.b16 %v57
  %v153 = vunpack.c.h.b16 %v57
  %v154 = vunpack.c.l.b16 %v58
  %v155 = vunpack.c.h.b16 %v58
  %v156 = vunpack.c.l.b16 %v59
  %v157 = vunpack.c.h.b16 %v59
  %v158 = vunpack.c.l.b16 %v60
  %v159 = vunpack.c.h.b16 %v60
  %v160 = vunpack.c.l.b16 %v61
  %v161 = vunpack.c.h.b16 %v61
  %v162 = vunpack.c.l.b16 %v62
  %v163 = vunpack.c.h.b16 %v62
  %v164 = vunpack.c.l.b16 %v63
  %v165 = vunpack.c.h.b16 %v63
  %v166 = vunpack.c.l.b16 %v64
  %v167 = vunpack.c.h.b16 %v64
  %v168 = vunpack.c.l.b16 %v65
  %v169 = vunpack.c.h.b16 %v65
  %v170 = vunpack.c.l.b16 %v66
  %v171 = vunpack.c.h.b16 %v66
  %v172 = vunpack.c.l.b16 %v67
  %v173 = vunpack.c.h.b16 %v67
  %v174 = vunpack.c.l.b16 %v68
  %v175 = vunpack.c.h.b16 %v68
  %v176 = vunpack.c.l.b16 %v69
  %v177 = vunpack.c.h.b16 %v69
  %v178 = vunpack.c.l.b16 %v70
  %v179 = vunpack.c.h.b16 %v70
  %v180 = vunpack.c.l.b16 %v71
  %v181 = vunpack.c.h.b16 %v71
  %v182 = vunpack.c.l.b16 %v72
  %v183 = vunpack.c.h.b16 %v72
  %v184 = vunpack.c.l.b16 %v73
  %v185 = vunpack.c.h.b16 %v73
  %v186 = vpack.c.b16 %v126, %v122
  %v187 = vpack.c.b16 %v127, %v123
  %v188 = vpack.c.b16 %v128, %v124
  %v189 = vpack.c.b16 %v129, %v125
  %v190 = vpack.c.b16 %v134, %v130
  %v191 = vpack.c.b16 %v135, %v131
  %v192 = vpack.c.b16 %v136, %v132
  %v193 = vpack.c.b16 %v137, %v133
  %v194 = vpack.c.b16 %v142, %v138
  %v195 = vpack.c.b16 %v143, %v139
  %v196 = vpack.c.b16 %v144, %v140
  %v197 = vpack.c.b16 %v145, %v141
  %v198 = vpack.c.b16 %v150, %v146
  %v199 = vpack.c.b16 %v151, %v147
  %v200 = vpack.c.b16 %v152, %v148
  %v201 = vpack.c.b16 %v153, %v149
  %v202 = vpack.c.b16 %v158, %v154
  %v203 = vpack.c.b16 %v159, %v155
  %v204 = vpack.c.b16 %v160, %v156
  %v205 = vpack.c.b16 %v161, %v157
  %v206 = vpack.c.b16 %v166, %v162
  %v207 = vpack.c.b16 %v167, %v163
  %v208 = vpack.c.b16 %v168, %v164
  %v209 = vpack.c.b16 %v169, %v165
  %v210 = vpack.c.b16 %v174, %v170
  %v211 = vpack.c.b16 %v175, %v171
  %v212 = vpack.c.b16 %v176, %v172
  %v213 = vpack.c.b16 %v177, %v173
  %v214 = vpack.c.b16 %v182, %v178
  %v215 = vpack.c.b16 %v183, %v179
  %v216 = vpack.c.b16 %v184, %v180
  %v217 = vpack.c.b16 %v185, %v181
  %250 = vmatpush.bf16.msra.mxu0 %v214
  %251 = vmatpush.bf16.msra.mxu0 %v210
  %252 = vmatpush.bf16.msra.mxu0 %v206
  %253 = vmatpush.bf16.msra.mxu0 %v202
  %254 = vmatpush.bf16.msra.mxu0 %v198
  %255 = vmatpush.bf16.msra.mxu0 %v194
  %256 = vmatpush.bf16.msra.mxu0 %v190
  %257 = vmatpush.bf16.msra.mxu0 %v186
  %258 = vmatmul.bf16.gmra.mxu0 %v88
  %v259 = vpop.f32.mrf.mxu0
  %v260 = vadd.f32 %v76, %v259
  %v261 = vpop.f32.mrf.mxu0
  %v262 = vadd.f32 %v76, %v261
  %263 = vdwg.mxu0
  %264 = vmatpush.bf16.msra.mxu0 %v215
  %265 = vmatpush.bf16.msra.mxu0 %v211
  %266 = vmatpush.bf16.msra.mxu0 %v207
  %267 = vmatpush.bf16.msra.mxu0 %v203
  %268 = vmatpush.bf16.msra.mxu0 %v199
  %269 = vmatpush.bf16.msra.mxu0 %v195
  %270 = vmatpush.bf16.msra.mxu0 %v191
  %271 = vmatpush.bf16.msra.mxu0 %v187
  %272 = vmatmul.bf16.gmra.mxu0 %v88
  %v273 = vpop.f32.mrf.mxu0
  %v274 = vadd.f32 %v77, %v273
  %v275 = vpop.f32.mrf.mxu0
  %v276 = vadd.f32 %v77, %v275
  %277 = vdwg.mxu0
  %278 = vmatpush.bf16.msra.mxu0 %v216
  %279 = vmatpush.bf16.msra.mxu0 %v212
  %280 = vmatpush.bf16.msra.mxu0 %v208
  %281 = vmatpush.bf16.msra.mxu0 %v204
  %282 = vmatpush.bf16.msra.mxu0 %v200
  %283 = vmatpush.bf16.msra.mxu0 %v196
  %284 = vmatpush.bf16.msra.mxu0 %v192
  %285 = vmatpush.bf16.msra.mxu0 %v188
  %286 = vmatmul.bf16.gmra.mxu0 %v88
  %v287 = vpop.f32.mrf.mxu0
  %v288 = vadd.f32 %v78, %v287
  %v289 = vpop.f32.mrf.mxu0
  %v290 = vadd.f32 %v78, %v289
  %291 = vdwg.mxu0
  %292 = vmatpush.bf16.msra.mxu0 %v217
  %293 = vmatpush.bf16.msra.mxu0 %v213
  %294 = vmatpush.bf16.msra.mxu0 %v209
  %295 = vmatpush.bf16.msra.mxu0 %v205
  %296 = vmatpush.bf16.msra.mxu0 %v201
  %297 = vmatpush.bf16.msra.mxu0 %v197
  %298 = vmatpush.bf16.msra.mxu0 %v193
  %299 = vmatpush.bf16.msra.mxu0 %v189
  %300 = vmatmul.bf16.gmra.mxu0 %v88
  %v301 = vpop.f32.mrf.mxu0
  %v302 = vadd.f32 %v79, %v301
  %v303 = vpop.f32.mrf.mxu0
  %v304 = vadd.f32 %v79, %v303
  %305 = vdwg.mxu0
  %v306 = vmul.f32 %v260, 0.5
  %v307 = vmul.f32 %v274, 0.5
  %v308 = vmul.f32 %v288, 0.5
  %v309 = vmul.f32 %v302, 0.5
  %v310 = vmul.f32 %v262, 0.5
  %v311 = vmul.f32 %v276, 0.5
  %v312 = vmul.f32 %v290, 0.5
  %v313 = vmul.f32 %v304, 0.5
  %v314 = vmul.f32 %v260, 0.70710677
  %v315 = vmul.f32 %v274, 0.70710677
  %v316 = vmul.f32 %v288, 0.70710677
  %v317 = vmul.f32 %v302, 0.70710677
  %v318 = vmul.f32 %v262, 0.70710677
  %v319 = vmul.f32 %v276, 0.70710677
  %v320 = vmul.f32 %v290, 0.70710677
  %v321 = vmul.f32 %v304, 0.70710677
  %v322 = vmul.f32 %v314, %v314
  %v323 = vmin.f32 16.0, %v322
  %v324 = vmul.f32 %v323, 2.1237322e-06
  %v325 = vadd.f32 %v324, 0.00028619796
  %v326 = vmul.f32 %v323, %v325
  %v327 = vadd.f32 %v326, 0.0036580483
  %v328 = vmul.f32 %v323, %v327
  %v329 = vadd.f32 %v328, 0.05243302
  %v330 = vmul.f32 %v323, %v329
  %v331 = vadd.f32 %v330, 0.18741608
  %v332 = vmul.f32 %v323, %v331
  %v333 = vadd.f32 %v332, 1.1283791
  %v334 = vmul.f32 %v314, %v333
  %v335 = vmul.f32 %v323, 3.8918573e-05
  %v336 = vadd.f32 %v335, 0.001143296
  %v337 = vmul.f32 %v323, %v336
  %v338 = vadd.f32 %v337, 0.014752088
  %v339 = vmul.f32 %v323, %v338
  %v340 = vadd.f32 %v339, 0.112945676
  %v341 = vmul.f32 %v323, %v340
  %v342 = vadd.f32 %v341, 0.4994258
  %v343 = vmul.f32 %v323, %v342
  %v344 = vadd.f32 %v343, 1.0
  %v345 = vrcp.pop %v344
  %v346 = vmul.f32 %v344, %v345
  %v347 = vsub.f32 1.0, %v346
  %v348 = vmul.f32 %v345, %v347
  %v349 = vadd.f32 %v345, %v348
  %vm350 = vweird.f32 %v344
  %vm351 = vweird.f32 %v345
  %vm352 = vmor %vm350, %vm351
  %v353 = vsel %vm352, %v345, %v349
  %v354 = vand.u32 2147483647, %v344
  %vm355 = vcmp.eq.f32.partialorder %v354, 8.507059e+37
  %v356 = vand.u32 %v344, 2147483648
  %v357 = vor.u32 1.1754944e-38, %v356
  %v358 = vsel %vm355, %v357, %v353
  %v359 = vmul.f32 %v334, %v358
  %v360 = vmin.f32 %v359, 1.0
  %v361 = vmax.f32 %v360, -1.0
  %v362 = vmul.f32 %v315, %v315
  %v363 = vmin.f32 16.0, %v362
  %v364 = vmul.f32 %v363, 2.1237322e-06
  %v365 = vadd.f32 %v364, 0.00028619796
  %v366 = vmul.f32 %v363, %v365
  %v367 = vadd.f32 %v366, 0.0036580483
  %v368 = vmul.f32 %v363, %v367
  %v369 = vadd.f32 %v368, 0.05243302
  %v370 = vmul.f32 %v363, %v369
  %v371 = vadd.f32 %v370, 0.18741608
  %v372 = vmul.f32 %v363, %v371
  %v373 = vadd.f32 %v372, 1.1283791
  %v374 = vmul.f32 %v315, %v373
  %v375 = vmul.f32 %v363, 3.8918573e-05
  %v376 = vadd.f32 %v375, 0.001143296
  %v377 = vmul.f32 %v363, %v376
  %v378 = vadd.f32 %v377, 0.014752088
  %v379 = vmul.f32 %v363, %v378
  %v380 = vadd.f32 %v379, 0.112945676
  %v381 = vmul.f32 %v363, %v380
  %v382 = vadd.f32 %v381, 0.4994258
  %v383 = vmul.f32 %v363, %v382
  %v384 = vadd.f32 %v383, 1.0
  %v385 = vrcp.pop %v384
  %v386 = vmul.f32 %v384, %v385
  %v387 = vsub.f32 1.0, %v386
  %v388 = vmul.f32 %v385, %v387
  %v389 = vadd.f32 %v385, %v388
  %vm390 = vweird.f32 %v384
  %vm391 = vweird.f32 %v385
  %vm392 = vmor %vm390, %vm391
  %v393 = vsel %vm392, %v385, %v389
  %v394 = vand.u32 2147483647, %v384
  %vm395 = vcmp.eq.f32.partialorder %v394, 8.507059e+37
  %v396 = vand.u32 %v384, 2147483648
  %v397 = vor.u32 1.1754944e-38, %v396
  %v398 = vsel %vm395, %v397, %v393
  %v399 = vmul.f32 %v374, %v398
  %v400 = vmin.f32 %v399, 1.0
  %v401 = vmax.f32 %v400, -1.0
  %v402 = vmul.f32 %v316, %v316
  %v403 = vmin.f32 16.0, %v402
  %v404 = vmul.f32 %v403, 2.1237322e-06
  %v405 = vadd.f32 %v404, 0.00028619796
  %v406 = vmul.f32 %v403, %v405
  %v407 = vadd.f32 %v406, 0.0036580483
  %v408 = vmul.f32 %v403, %v407
  %v409 = vadd.f32 %v408, 0.05243302
  %v410 = vmul.f32 %v403, %v409
  %v411 = vadd.f32 %v410, 0.18741608
  %v412 = vmul.f32 %v403, %v411
  %v413 = vadd.f32 %v412, 1.1283791
  %v414 = vmul.f32 %v316, %v413
  %v415 = vmul.f32 %v403, 3.8918573e-05
  %v416 = vadd.f32 %v415, 0.001143296
  %v417 = vmul.f32 %v403, %v416
  %v418 = vadd.f32 %v417, 0.014752088
  %v419 = vmul.f32 %v403, %v418
  %v420 = vadd.f32 %v419, 0.112945676
  %v421 = vmul.f32 %v403, %v420
  %v422 = vadd.f32 %v421, 0.4994258
  %v423 = vmul.f32 %v403, %v422
  %v424 = vadd.f32 %v423, 1.0
  %v425 = vrcp.pop %v424
  %v426 = vmul.f32 %v424, %v425
  %v427 = vsub.f32 1.0, %v426
  %v428 = vmul.f32 %v425, %v427
  %v429 = vadd.f32 %v425, %v428
  %vm430 = vweird.f32 %v424
  %vm431 = vweird.f32 %v425
  %vm432 = vmor %vm430, %vm431
  %v433 = vsel %vm432, %v425, %v429
  %v434 = vand.u32 2147483647, %v424
  %vm435 = vcmp.eq.f32.partialorder %v434, 8.507059e+37
  %v436 = vand.u32 %v424, 2147483648
  %v437 = vor.u32 1.1754944e-38, %v436
  %v438 = vsel %vm435, %v437, %v433
  %v439 = vmul.f32 %v414, %v438
  %v440 = vmin.f32 %v439, 1.0
  %v441 = vmax.f32 %v440, -1.0
  %v442 = vmul.f32 %v317, %v317
  %v443 = vmin.f32 16.0, %v442
  %v444 = vmul.f32 %v443, 2.1237322e-06
  %v445 = vadd.f32 %v444, 0.00028619796
  %v446 = vmul.f32 %v443, %v445
  %v447 = vadd.f32 %v446, 0.0036580483
  %v448 = vmul.f32 %v443, %v447
  %v449 = vadd.f32 %v448, 0.05243302
  %v450 = vmul.f32 %v443, %v449
  %v451 = vadd.f32 %v450, 0.18741608
  %v452 = vmul.f32 %v443, %v451
  %v453 = vadd.f32 %v452, 1.1283791
  %v454 = vmul.f32 %v317, %v453
  %v455 = vmul.f32 %v443, 3.8918573e-05
  %v456 = vadd.f32 %v455, 0.001143296
  %v457 = vmul.f32 %v443, %v456
  %v458 = vadd.f32 %v457, 0.014752088
  %v459 = vmul.f32 %v443, %v458
  %v460 = vadd.f32 %v459, 0.112945676
  %v461 = vmul.f32 %v443, %v460
  %v462 = vadd.f32 %v461, 0.4994258
  %v463 = vmul.f32 %v443, %v462
  %v464 = vadd.f32 %v463, 1.0
  %v465 = vrcp.pop %v464
  %v466 = vmul.f32 %v464, %v465
  %v467 = vsub.f32 1.0, %v466
  %v468 = vmul.f32 %v465, %v467
  %v469 = vadd.f32 %v465, %v468
  %vm470 = vweird.f32 %v464
  %vm471 = vweird.f32 %v465
  %vm472 = vmor %vm470, %vm471
  %v473 = vsel %vm472, %v465, %v469
  %v474 = vand.u32 2147483647, %v464
  %vm475 = vcmp.eq.f32.partialorder %v474, 8.507059e+37
  %v476 = vand.u32 %v464, 2147483648
  %v477 = vor.u32 1.1754944e-38, %v476
  %v478 = vsel %vm475, %v477, %v473
  %v479 = vmul.f32 %v454, %v478
  %v480 = vmin.f32 %v479, 1.0
  %v481 = vmax.f32 %v480, -1.0
  %v482 = vmul.f32 %v318, %v318
  %v483 = vmin.f32 16.0, %v482
  %v484 = vmul.f32 %v483, 2.1237322e-06
  %v485 = vadd.f32 %v484, 0.00028619796
  %v486 = vmul.f32 %v483, %v485
  %v487 = vadd.f32 %v486, 0.0036580483
  %v488 = vmul.f32 %v483, %v487
  %v489 = vadd.f32 %v488, 0.05243302
  %v490 = vmul.f32 %v483, %v489
  %v491 = vadd.f32 %v490, 0.18741608
  %v492 = vmul.f32 %v483, %v491
  %v493 = vadd.f32 %v492, 1.1283791
  %v494 = vmul.f32 %v318, %v493
  %v495 = vmul.f32 %v483, 3.8918573e-05
  %v496 = vadd.f32 %v495, 0.001143296
  %v497 = vmul.f32 %v483, %v496
  %v498 = vadd.f32 %v497, 0.014752088
  %v499 = vmul.f32 %v483, %v498
  %v500 = vadd.f32 %v499, 0.112945676
  %v501 = vmul.f32 %v483, %v500
  %v502 = vadd.f32 %v501, 0.4994258
  %v503 = vmul.f32 %v483, %v502
  %v504 = vadd.f32 %v503, 1.0
  %v505 = vrcp.pop %v504
  %v506 = vmul.f32 %v504, %v505
  %v507 = vsub.f32 1.0, %v506
  %v508 = vmul.f32 %v505, %v507
  %v509 = vadd.f32 %v505, %v508
  %vm510 = vweird.f32 %v504
  %vm511 = vweird.f32 %v505
  %vm512 = vmor %vm510, %vm511
  %v513 = vsel %vm512, %v505, %v509
  %v514 = vand.u32 2147483647, %v504
  %vm515 = vcmp.eq.f32.partialorder %v514, 8.507059e+37
  %v516 = vand.u32 %v504, 2147483648
  %v517 = vor.u32 1.1754944e-38, %v516
  %v518 = vsel %vm515, %v517, %v513
  %v519 = vmul.f32 %v494, %v518
  %v520 = vmin.f32 %v519, 1.0
  %v521 = vmax.f32 %v520, -1.0
  %v522 = vmul.f32 %v319, %v319
  %v523 = vmin.f32 16.0, %v522
  %v524 = vmul.f32 %v523, 2.1237322e-06
  %v525 = vadd.f32 %v524, 0.00028619796
  %v526 = vmul.f32 %v523, %v525
  %v527 = vadd.f32 %v526, 0.0036580483
  %v528 = vmul.f32 %v523, %v527
  %v529 = vadd.f32 %v528, 0.05243302
  %v530 = vmul.f32 %v523, %v529
  %v531 = vadd.f32 %v530, 0.18741608
  %v532 = vmul.f32 %v523, %v531
  %v533 = vadd.f32 %v532, 1.1283791
  %v534 = vmul.f32 %v319, %v533
  %v535 = vmul.f32 %v523, 3.8918573e-05
  %v536 = vadd.f32 %v535, 0.001143296
  %v537 = vmul.f32 %v523, %v536
  %v538 = vadd.f32 %v537, 0.014752088
  %v539 = vmul.f32 %v523, %v538
  %v540 = vadd.f32 %v539, 0.112945676
  %v541 = vmul.f32 %v523, %v540
  %v542 = vadd.f32 %v541, 0.4994258
  %v543 = vmul.f32 %v523, %v542
  %v544 = vadd.f32 %v543, 1.0
  %v545 = vrcp.pop %v544
  %v546 = vmul.f32 %v544, %v545
  %v547 = vsub.f32 1.0, %v546
  %v548 = vmul.f32 %v545, %v547
  %v549 = vadd.f32 %v545, %v548
  %vm550 = vweird.f32 %v544
  %vm551 = vweird.f32 %v545
  %vm552 = vmor %vm550, %vm551
  %v553 = vsel %vm552, %v545, %v549
  %v554 = vand.u32 2147483647, %v544
  %vm555 = vcmp.eq.f32.partialorder %v554, 8.507059e+37
  %v556 = vand.u32 %v544, 2147483648
  %v557 = vor.u32 1.1754944e-38, %v556
  %v558 = vsel %vm555, %v557, %v553
  %v559 = vmul.f32 %v534, %v558
  %v560 = vmin.f32 %v559, 1.0
  %v561 = vmax.f32 %v560, -1.0
  %v562 = vmul.f32 %v320, %v320
  %v563 = vmin.f32 16.0, %v562
  %v564 = vmul.f32 %v563, 2.1237322e-06
  %v565 = vadd.f32 %v564, 0.00028619796
  %v566 = vmul.f32 %v563, %v565
  %v567 = vadd.f32 %v566, 0.0036580483
  %v568 = vmul.f32 %v563, %v567
  %v569 = vadd.f32 %v568, 0.05243302
  %v570 = vmul.f32 %v563, %v569
  %v571 = vadd.f32 %v570, 0.18741608
  %v572 = vmul.f32 %v563, %v571
  %v573 = vadd.f32 %v572, 1.1283791
  %v574 = vmul.f32 %v320, %v573
  %v575 = vmul.f32 %v563, 3.8918573e-05
  %v576 = vadd.f32 %v575, 0.001143296
  %v577 = vmul.f32 %v563, %v576
  %v578 = vadd.f32 %v577, 0.014752088
  %v579 = vmul.f32 %v563, %v578
  %v580 = vadd.f32 %v579, 0.112945676
  %v581 = vmul.f32 %v563, %v580
  %v582 = vadd.f32 %v581, 0.4994258
  %v583 = vmul.f32 %v563, %v582
  %v584 = vadd.f32 %v583, 1.0
  %v585 = vrcp.pop %v584
  %v586 = vmul.f32 %v584, %v585
  %v587 = vsub.f32 1.0, %v586
  %v588 = vmul.f32 %v585, %v587
  %v589 = vadd.f32 %v585, %v588
  %vm590 = vweird.f32 %v584
  %vm591 = vweird.f32 %v585
  %vm592 = vmor %vm590, %vm591
  %v593 = vsel %vm592, %v585, %v589
  %v594 = vand.u32 2147483647, %v584
  %vm595 = vcmp.eq.f32.partialorder %v594, 8.507059e+37
  %v596 = vand.u32 %v584, 2147483648
  %v597 = vor.u32 1.1754944e-38, %v596
  %v598 = vsel %vm595, %v597, %v593
  %v599 = vmul.f32 %v574, %v598
  %v600 = vmin.f32 %v599, 1.0
  %v601 = vmax.f32 %v600, -1.0
  %v602 = vmul.f32 %v321, %v321
  %v603 = vmin.f32 16.0, %v602
  %v604 = vmul.f32 %v603, 2.1237322e-06
  %v605 = vadd.f32 %v604, 0.00028619796
  %v606 = vmul.f32 %v603, %v605
  %v607 = vadd.f32 %v606, 0.0036580483
  %v608 = vmul.f32 %v603, %v607
  %v609 = vadd.f32 %v608, 0.05243302
  %v610 = vmul.f32 %v603, %v609
  %v611 = vadd.f32 %v610, 0.18741608
  %v612 = vmul.f32 %v603, %v611
  %v613 = vadd.f32 %v612, 1.1283791
  %v614 = vmul.f32 %v321, %v613
  %v615 = vmul.f32 %v603, 3.8918573e-05
  %v616 = vadd.f32 %v615, 0.001143296
  %v617 = vmul.f32 %v603, %v616
  %v618 = vadd.f32 %v617, 0.014752088
  %v619 = vmul.f32 %v603, %v618
  %v620 = vadd.f32 %v619, 0.112945676
  %v621 = vmul.f32 %v603, %v620
  %v622 = vadd.f32 %v621, 0.4994258
  %v623 = vmul.f32 %v603, %v622
  %v624 = vadd.f32 %v623, 1.0
  %v625 = vrcp.pop %v624
  %v626 = vmul.f32 %v624, %v625
  %v627 = vsub.f32 1.0, %v626
  %v628 = vmul.f32 %v625, %v627
  %v629 = vadd.f32 %v625, %v628
  %vm630 = vweird.f32 %v624
  %vm631 = vweird.f32 %v625
  %vm632 = vmor %vm630, %vm631
  %v633 = vsel %vm632, %v625, %v629
  %v634 = vand.u32 2147483647, %v624
  %vm635 = vcmp.eq.f32.partialorder %v634, 8.507059e+37
  %v636 = vand.u32 %v624, 2147483648
  %v637 = vor.u32 1.1754944e-38, %v636
  %v638 = vsel %vm635, %v637, %v633
  %v639 = vmul.f32 %v614, %v638
  %v640 = vmin.f32 %v639, 1.0
  %v641 = vmax.f32 %v640, -1.0
  %v642 = vadd.f32 %v361, 1.0
  %v643 = vadd.f32 %v401, 1.0
  %v644 = vadd.f32 %v441, 1.0
  %v645 = vadd.f32 %v481, 1.0
  %v646 = vadd.f32 %v521, 1.0
  %v647 = vadd.f32 %v561, 1.0
  %v648 = vadd.f32 %v601, 1.0
  %v649 = vadd.f32 %v641, 1.0
  %v650 = vmul.f32 %v306, %v642
  %v651 = vmul.f32 %v307, %v643
  %v652 = vmul.f32 %v308, %v644
  %v653 = vmul.f32 %v309, %v645
  %v654 = vmul.f32 %v310, %v646
  %v655 = vmul.f32 %v311, %v647
  %v656 = vmul.f32 %v312, %v648
  %v657 = vmul.f32 %v313, %v649
  %v658 = vld [vmem:[#allocation2] sm:$0xff]
  %v659 = vld [vmem:[#allocation2 + $0x8] sm:$0xff]
  %v660 = vpack.c.bf16 %v654, %v650
  %v661 = vpack.c.bf16 %v655, %v651
  %v662 = vpack.c.bf16 %v656, %v652
  %v663 = vpack.c.bf16 %v657, %v653
  %v664 = vld [vmem:[%s3] sm:$0xf]
  %v665 = vld [vmem:[%s3 + $0x4] sm:$0xf]
  %v666 = vld [vmem:[%s3 + $0x8] sm:$0xf]
  %v667 = vld [vmem:[%s3 + $0xc] sm:$0xf]
  %v668 = vld [vmem:[%s3 + $0x10] sm:$0xf]
  %v669 = vld [vmem:[%s3 + $0x14] sm:$0xf]
  %v670 = vld [vmem:[%s3 + $0x18] sm:$0xf]
  %v671 = vld [vmem:[%s3 + $0x1c] sm:$0xf]
  %v672 = vld [vmem:[%s3 + $0x20] sm:$0xf]
  %v673 = vld [vmem:[%s3 + $0x24] sm:$0xf]
  %v674 = vld [vmem:[%s3 + $0x28] sm:$0xf]
  %v675 = vld [vmem:[%s3 + $0x2c] sm:$0xf]
  %v676 = vld [vmem:[%s3 + $0x30] sm:$0xf]
  %v677 = vld [vmem:[%s3 + $0x34] sm:$0xf]
  %v678 = vld [vmem:[%s3 + $0x38] sm:$0xf]
  %v679 = vld [vmem:[%s3 + $0x3c] sm:$0xf]
  %v680 = vld [vmem:[%s3 + $0x40] sm:$0xf]
  %v681 = vld [vmem:[%s3 + $0x44] sm:$0xf]
  %v682 = vld [vmem:[%s3 + $0x48] sm:$0xf]
  %v683 = vld [vmem:[%s3 + $0x4c] sm:$0xf]
  %v684 = vld [vmem:[%s3 + $0x50] sm:$0xf]
  %v685 = vld [vmem:[%s3 + $0x54] sm:$0xf]
  %v686 = vld [vmem:[%s3 + $0x58] sm:$0xf]
  %v687 = vld [vmem:[%s3 + $0x5c] sm:$0xf]
  %v688 = vld [vmem:[%s3 + $0x60] sm:$0xf]
  %v689 = vld [vmem:[%s3 + $0x64] sm:$0xf]
  %v690 = vld [vmem:[%s3 + $0x68] sm:$0xf]
  %v691 = vld [vmem:[%s3 + $0x6c] sm:$0xf]
  %v692 = vld [vmem:[%s3 + $0x70] sm:$0xf]
  %v693 = vld [vmem:[%s3 + $0x74] sm:$0xf]
  %v694 = vld [vmem:[%s3 + $0x78] sm:$0xf]
  %v695 = vld [vmem:[%s3 + $0x7c] sm:$0xf]
  %v696 = vld [vmem:[%s3 + $0x80] sm:$0xf]
  %v697 = vld [vmem:[%s3 + $0x84] sm:$0xf]
  %v698 = vld [vmem:[%s3 + $0x88] sm:$0xf]
  %v699 = vld [vmem:[%s3 + $0x8c] sm:$0xf]
  %v700 = vld [vmem:[%s3 + $0x90] sm:$0xf]
  %v701 = vld [vmem:[%s3 + $0x94] sm:$0xf]
  %v702 = vld [vmem:[%s3 + $0x98] sm:$0xf]
  %v703 = vld [vmem:[%s3 + $0x9c] sm:$0xf]
  %v704 = vld [vmem:[%s3 + $0xa0] sm:$0xf]
  %v705 = vld [vmem:[%s3 + $0xa4] sm:$0xf]
  %v706 = vld [vmem:[%s3 + $0xa8] sm:$0xf]
  %v707 = vld [vmem:[%s3 + $0xac] sm:$0xf]
  %v708 = vld [vmem:[%s3 + $0xb0] sm:$0xf]
  %v709 = vld [vmem:[%s3 + $0xb4] sm:$0xf]
  %v710 = vld [vmem:[%s3 + $0xb8] sm:$0xf]
  %v711 = vld [vmem:[%s3 + $0xbc] sm:$0xf]
  %v712 = vld [vmem:[%s3 + $0xc0] sm:$0xf]
  %v713 = vld [vmem:[%s3 + $0xc4] sm:$0xf]
  %v714 = vld [vmem:[%s3 + $0xc8] sm:$0xf]
  %v715 = vld [vmem:[%s3 + $0xcc] sm:$0xf]
  %v716 = vld [vmem:[%s3 + $0xd0] sm:$0xf]
  %v717 = vld [vmem:[%s3 + $0xd4] sm:$0xf]
  %v718 = vld [vmem:[%s3 + $0xd8] sm:$0xf]
  %v719 = vld [vmem:[%s3 + $0xdc] sm:$0xf]
  %v720 = vld [vmem:[%s3 + $0xe0] sm:$0xf]
  %v721 = vld [vmem:[%s3 + $0xe4] sm:$0xf]
  %v722 = vld [vmem:[%s3 + $0xe8] sm:$0xf]
  %v723 = vld [vmem:[%s3 + $0xec] sm:$0xf]
  %v724 = vld [vmem:[%s3 + $0xf0] sm:$0xf]
  %v725 = vld [vmem:[%s3 + $0xf4] sm:$0xf]
  %v726 = vld [vmem:[%s3 + $0xf8] sm:$0xf]
  %v727 = vld [vmem:[%s3 + $0xfc] sm:$0xf]
  %v792 = vunpack.c.l.b16 %v664
  %v793 = vunpack.c.l.b16 %v665
  %v794 = vunpack.c.l.b16 %v666
  %v795 = vunpack.c.l.b16 %v667
  %v796 = vunpack.c.l.b16 %v668
  %v797 = vunpack.c.l.b16 %v669
  %v798 = vunpack.c.l.b16 %v670
  %v799 = vunpack.c.l.b16 %v671
  %v800 = vunpack.c.l.b16 %v672
  %v801 = vunpack.c.l.b16 %v673
  %v802 = vunpack.c.l.b16 %v674
  %v803 = vunpack.c.l.b16 %v675
  %v804 = vunpack.c.l.b16 %v676
  %v805 = vunpack.c.l.b16 %v677
  %v806 = vunpack.c.l.b16 %v678
  %v807 = vunpack.c.l.b16 %v679
  %v808 = vunpack.c.l.b16 %v680
  %v809 = vunpack.c.l.b16 %v681
  %v810 = vunpack.c.l.b16 %v682
  %v811 = vunpack.c.l.b16 %v683
  %v812 = vunpack.c.l.b16 %v684
  %v813 = vunpack.c.l.b16 %v685
  %v814 = vunpack.c.l.b16 %v686
  %v815 = vunpack.c.l.b16 %v687
  %v816 = vunpack.c.l.b16 %v688
  %v817 = vunpack.c.l.b16 %v689
  %v818 = vunpack.c.l.b16 %v690
  %v819 = vunpack.c.l.b16 %v691
  %v820 = vunpack.c.l.b16 %v692
  %v821 = vunpack.c.l.b16 %v693
  %v822 = vunpack.c.l.b16 %v694
  %v823 = vunpack.c.l.b16 %v695
  %v824 = vunpack.c.l.b16 %v696
  %v825 = vunpack.c.l.b16 %v697
  %v826 = vunpack.c.l.b16 %v698
  %v827 = vunpack.c.l.b16 %v699
  %v828 = vunpack.c.l.b16 %v700
  %v829 = vunpack.c.l.b16 %v701
  %v830 = vunpack.c.l.b16 %v702
  %v831 = vunpack.c.l.b16 %v703
  %v832 = vunpack.c.l.b16 %v704
  %v833 = vunpack.c.l.b16 %v705
  %v834 = vunpack.c.l.b16 %v706
  %v835 = vunpack.c.l.b16 %v707
  %v836 = vunpack.c.l.b16 %v708
  %v837 = vunpack.c.l.b16 %v709
  %v838 = vunpack.c.l.b16 %v710
  %v839 = vunpack.c.l.b16 %v711
  %v840 = vunpack.c.l.b16 %v712
  %v841 = vunpack.c.l.b16 %v713
  %v842 = vunpack.c.l.b16 %v714
  %v843 = vunpack.c.l.b16 %v715
  %v844 = vunpack.c.l.b16 %v716
  %v845 = vunpack.c.l.b16 %v717
  %v846 = vunpack.c.l.b16 %v718
  %v847 = vunpack.c.l.b16 %v719
  %v848 = vunpack.c.l.b16 %v720
  %v849 = vunpack.c.l.b16 %v721
  %v850 = vunpack.c.l.b16 %v722
  %v851 = vunpack.c.l.b16 %v723
  %v852 = vunpack.c.l.b16 %v724
  %v853 = vunpack.c.l.b16 %v725
  %v854 = vunpack.c.l.b16 %v726
  %v855 = vunpack.c.l.b16 %v727
  %v856 = vpack.c.b16 %v793, %v792
  %v857 = vpack.c.b16 %v795, %v794
  %v858 = vpack.c.b16 %v797, %v796
  %v859 = vpack.c.b16 %v799, %v798
  %v860 = vpack.c.b16 %v801, %v800
  %v861 = vpack.c.b16 %v803, %v802
  %v862 = vpack.c.b16 %v805, %v804
  %v863 = vpack.c.b16 %v807, %v806
  %v864 = vpack.c.b16 %v809, %v808
  %v865 = vpack.c.b16 %v811, %v810
  %v866 = vpack.c.b16 %v813, %v812
  %v867 = vpack.c.b16 %v815, %v814
  %v868 = vpack.c.b16 %v817, %v816
  %v869 = vpack.c.b16 %v819, %v818
  %v870 = vpack.c.b16 %v821, %v820
  %v871 = vpack.c.b16 %v823, %v822
  %v872 = vpack.c.b16 %v825, %v824
  %v873 = vpack.c.b16 %v827, %v826
  %v874 = vpack.c.b16 %v829, %v828
  %v875 = vpack.c.b16 %v831, %v830
  %v876 = vpack.c.b16 %v833, %v832
  %v877 = vpack.c.b16 %v835, %v834
  %v878 = vpack.c.b16 %v837, %v836
  %v879 = vpack.c.b16 %v839, %v838
  %v880 = vpack.c.b16 %v841, %v840
  %v881 = vpack.c.b16 %v843, %v842
  %v882 = vpack.c.b16 %v845, %v844
  %v883 = vpack.c.b16 %v847, %v846
  %v884 = vpack.c.b16 %v849, %v848
  %v885 = vpack.c.b16 %v851, %v850
  %v886 = vpack.c.b16 %v853, %v852
  %v887 = vpack.c.b16 %v855, %v854
  %920 = vmatpush.bf16.msra.mxu0 %v863
  %921 = vmatpush.bf16.msra.mxu0 %v862
  %922 = vmatpush.bf16.msra.mxu0 %v861
  %923 = vmatpush.bf16.msra.mxu0 %v860
  %924 = vmatpush.bf16.msra.mxu0 %v859
  %925 = vmatpush.bf16.msra.mxu0 %v858
  %926 = vmatpush.bf16.msra.mxu0 %v857
  %927 = vmatpush.bf16.msra.mxu0 %v856
  %928 = vmatmul.bf16.gmra.mxu0 %v660
  %v929 = vpop.f32.mrf.mxu0
  %v930 = vadd.f32 0.0, %v929
  %v931 = vpop.f32.mrf.mxu0
  %v932 = vadd.f32 0.0, %v931
  %933 = vdwg.mxu0
  %934 = vmatpush.bf16.msra.mxu0 %v871
  %935 = vmatpush.bf16.msra.mxu0 %v870
  %936 = vmatpush.bf16.msra.mxu0 %v869
  %937 = vmatpush.bf16.msra.mxu0 %v868
  %938 = vmatpush.bf16.msra.mxu0 %v867
  %939 = vmatpush.bf16.msra.mxu0 %v866
  %940 = vmatpush.bf16.msra.mxu0 %v865
  %941 = vmatpush.bf16.msra.mxu0 %v864
  %942 = vmatmul.bf16.gmra.mxu0 %v661
  %v943 = vpop.f32.mrf.mxu0
  %v944 = vadd.f32 %v930, %v943
  %v945 = vpop.f32.mrf.mxu0
  %v946 = vadd.f32 %v932, %v945
  %947 = vdwg.mxu0
  %948 = vmatpush.bf16.msra.mxu0 %v879
  %949 = vmatpush.bf16.msra.mxu0 %v878
  %950 = vmatpush.bf16.msra.mxu0 %v877
  %951 = vmatpush.bf16.msra.mxu0 %v876
  %952 = vmatpush.bf16.msra.mxu0 %v875
  %953 = vmatpush.bf16.msra.mxu0 %v874
  %954 = vmatpush.bf16.msra.mxu0 %v873
  %955 = vmatpush.bf16.msra.mxu0 %v872
  %956 = vmatmul.bf16.gmra.mxu0 %v662
  %v957 = vpop.f32.mrf.mxu0
  %v958 = vadd.f32 %v944, %v957
  %v959 = vpop.f32.mrf.mxu0
  %v960 = vadd.f32 %v946, %v959
  %961 = vdwg.mxu0
  %962 = vmatpush.bf16.msra.mxu0 %v887
  %963 = vmatpush.bf16.msra.mxu0 %v886
  %964 = vmatpush.bf16.msra.mxu0 %v885
  %965 = vmatpush.bf16.msra.mxu0 %v884
  %966 = vmatpush.bf16.msra.mxu0 %v883
  %967 = vmatpush.bf16.msra.mxu0 %v882
  %968 = vmatpush.bf16.msra.mxu0 %v881
  %969 = vmatpush.bf16.msra.mxu0 %v880
  %970 = vmatmul.bf16.gmra.mxu0 %v663
  %v971 = vpop.f32.mrf.mxu0
  %v972 = vadd.f32 %v958, %v971
  %v973 = vpop.f32.mrf.mxu0
  %v974 = vadd.f32 %v960, %v973
  %975 = vdwg.mxu0
  %v976 = vadd.f32 %v658, %v972
  %v977 = vadd.f32 %v659, %v974
  %978 = vst [vmem:[#allocation2] sm:$0xff] %v976
  %979 = vst [vmem:[#allocation2 + $0x8] sm:$0xff] %v977
  // Predicated region
  $region34: #{bert_base_uncased_forward.8} parent=0 // pred_check
    %p980 = pneg %p28
  $region35: #{bert_base_uncased_forward.8} parent=0 // pred_check_branch
    %982 = sbr.rel (%p980) target = $region37
  $region36: #{bert_base_uncased_forward.8} parent=0 // pred_region
    %v983 = vld [vmem:[#allocation2] sm:$0xff]
    %v984 = vld [vmem:[#allocation2 + $0x8] sm:$0xff]
    %v985 = vld [vmem:[%s5] sm:$0x1]
    %v986 = vld [vmem:[%s6] sm:$0x1]
    %987 = vadd.xlane.f32.xlu0 %v983
    %v988 = vpop.xlane.xlu0 %987
    %989 = vadd.xlane.f32.xlu0 %v984
    %v990 = vpop.xlane.xlu0 %989
    %v991 = vrcp.pop 128.0
    %v992 = vmul.f32 128.0, %v991
    %v993 = vsub.f32 1.0, %v992
    %v994 = vmul.f32 %v991, %v993
    %v995 = vadd.f32 %v991, %v994
    %vm996 = vweird.f32 %v991
    %v997 = vsel %vm996, %v991, %v995
    %v998 = vmul.f32 %v988, %v997
    %v999 = vmul.f32 %v990, %v997
    %v1000 = vsub.f32 %v983, %v998
    %v1001 = vsub.f32 %v984, %v999
    %v1002 = vmul.f32 %v1000, %v1000
    %v1003 = vmul.f32 %v1001, %v1001
    %1004 = vadd.xlane.f32.xlu0 %v1002
    %v1005 = vpop.xlane.xlu0 %1004
    %1006 = vadd.xlane.f32.xlu0 %v1003
    %v1007 = vpop.xlane.xlu0 %1006
    %v1008 = vmul.f32 %v1005, %v997
    %v1009 = vmul.f32 %v1007, %v997
    %v1010 = vadd.f32 %v1008, 1e-12
    %v1011 = vadd.f32 %v1009, 1e-12
    %v1012 = vrsqrt.pop %v1010
    %v1013 = vmul.f32 %v1012, %v1010
    %v1014 = vmul.f32 %v1013, %v1012
    %v1015 = vmul.f32 0.5, %v1014
    %v1016 = vsub.f32 1.5, %v1015
    %v1017 = vmul.f32 %v1012, %v1016
    %vm1018 = vweird.f32 %v1010
    %vm1019 = vweird.f32 %v1012
    %vm1020 = vmor %vm1018, %vm1019
    %v1021 = vsel %vm1020, %v1012, %v1017
    %v1022 = vrsqrt.pop %v1011
    %v1023 = vmul.f32 %v1022, %v1011
    %v1024 = vmul.f32 %v1023, %v1022
    %v1025 = vmul.f32 0.5, %v1024
    %v1026 = vsub.f32 1.5, %v1025
    %v1027 = vmul.f32 %v1022, %v1026
    %vm1028 = vweird.f32 %v1011
    %vm1029 = vweird.f32 %v1022
    %vm1030 = vmor %vm1028, %vm1029
    %v1031 = vsel %vm1030, %v1022, %v1027
    %v1032 = vmul.f32 %v1000, %v1021
    %v1033 = vmul.f32 %v1001, %v1031
    %v1035 = vperm.slane %v985, 0
    %v1037 = vmul.f32 %v1032, %v1035
    %v1038 = vmul.f32 %v1033, %v1035
    %v1040 = vperm.slane %v986, 0
    %v1042 = vadd.f32 %v1037, %v1040
    %v1043 = vadd.f32 %v1038, %v1040
    %v1044 = vpack.c.bf16 %v1042, %v1042
    %v1045 = vpack.c.bf16 %v1043, %v1043
    %1046 = vst [vmem:[%s7] sm:$0xf] %v1044
    %1047 = vst [vmem:[%s7 + $0x4] sm:$0xf] %v1045
  $region37: #{bert_base_uncased_forward.8} parent=0 // pred_fallthru
    _
  // Predicated region
  $region38: #{bert_base_uncased_forward.8} parent=0 // pred_check
    _
  $region39: #{bert_base_uncased_forward.8} parent=0 // pred_check_branch
    %1049 = sbr.rel (0) target = $region41
  $region40: #{bert_base_uncased_forward.8} parent=0 // pred_region
    _
  $region41: #{bert_base_uncased_forward.8} parent=0 // pred_fallthru
    _
  // Predicated region
  $region42: #{bert_base_uncased_forward.8} parent=0 // pred_check
    _
  $region43: #{bert_base_uncased_forward.8} parent=0 // pred_check_branch
    %1051 = sbr.rel (0) target = $region45
  $region44: #{bert_base_uncased_forward.8} parent=0 // pred_region
    _
  $region45: #{bert_base_uncased_forward.8} parent=0 // pred_fallthru
    _

// kernel: bert_base_uncased_forward.7
$region0: #{bert_base_uncased_forward.7}
  #allocation0 [shape = 'u32[]', space=smem, size = 0x4, offset = 0x4, fixed_abs, tag = 'smem constant byte address 0x4 - core index']
  #allocation1 [shape = 'u32[72,128]{1,0:T(1,128)}', space=vmem, size = 0x9000, scoped, tag = 'internal scratch']
  #allocation2 [shape = 'bf16[4,8,32]{2,1,0:T(8,128)(2,1)}', space=vmem, size = 0x2000, scoped, tag = 'scratch operand']
  #allocation3 [shape = 'bf16[4,8,32]{2,1,0:T(8,128)(2,1)}', space=vmem, size = 0x2000, scoped, tag = 'scratch operand']
  #allocation4 [shape = 'f32[8,128]{1,0:T(8,128)}', space=vmem, size = 0x1000, scoped, tag = 'scratch operand']
  %s0 = inlined_call_operand.vmem [shape: bf16[2,8,128], index: 0, kind: input, shape index: {}]
  %s1 = inlined_call_operand.vmem [shape: bf16[4,128,32], index: 1, kind: input, shape index: {}]
  %s2 = inlined_call_operand.vmem [shape: bf16[4,128,32], index: 2, kind: input, shape index: {}]
  %s3 = inlined_call_operand.vmem [shape: bf16[4,128,32], index: 3, kind: input, shape index: {}]
  %s4 = inlined_call_operand.vmem [shape: f32[4,1,32], index: 4, kind: input, shape index: {}]
  %s5 = inlined_call_operand.vmem [shape: f32[4,1,32], index: 5, kind: input, shape index: {}]
  %s6 = inlined_call_operand.vmem [shape: f32[4,1,32], index: 6, kind: input, shape index: {}]
  %s7 = inlined_call_operand.vmem [shape: bf16[4,32,128], index: 7, kind: input, shape index: {}]
  %s8 = inlined_call_operand.vmem [shape: f32[1,128], index: 8, kind: input, shape index: {}]
  %s9 = inlined_call_operand.vmem [shape: f32[1,128], index: 9, kind: input, shape index: {}]
  %s10 = inlined_call_operand.vmem [shape: f32[1,128], index: 10, kind: input, shape index: {}]
  %s11 = inlined_call_operand.vmem [shape: f32[2,1,1,8], index: 11, kind: input, shape index: {}]
  %s12 = inlined_call_operand.vmem [shape: bf16[2,8,128], index: 12, kind: output, shape index: {}]
  %s13 = sld [smem:[#allocation0]]
  $region99: #{bert_base_uncased_forward.7} parent=0
    _
  %s15 = ssub.s32 1, %s13
  %s16 = scalar_select 0, %s15, %s13
  loop: start=0, step=1, limit=4
  $region2: #{bert_base_uncased_forward.7} parent=0 // loop_pre_header
    _
  $region3: #{bert_base_uncased_forward.7} parent=0 // loop_header
    %s18 = sphi 0, %s22
    %p19 = scmp.ge.s32.totalorder %s18, 4
    %s25 = sphi 0, %s37
    %s26 = sphi 0, %s33
    %s27 = sphi 0, %s25
    %s28 = sphi 0, %s26
    %s29 = sphi 0, %s27
    %s30 = sphi 0, %s28
    %s40 = sphi 0, %s42
    %s43 = sphi 0, %s40
    %s44 = sphi 0, %s43
    %s60 = sphi 0, %s44
    %s64 = sphi 0, %s64
    %s66 = sphi 0, %s64
    %s67 = sphi 0, %s66
    %s81 = sphi 0, %s67
    %s85 = sphi 0, %s85
    %s87 = sphi 0, %s85
    %s88 = sphi 0, %s87
    %s102 = sphi 0, %s88
    %s106 = sphi 0, %s106
    %s108 = sphi 0, %s106
    %s109 = sphi 0, %s108
    %s123 = sphi 0, %s109
    %s127 = sphi 0, %s127
    %s129 = sphi 0, %s127
    %s130 = sphi 0, %s129
    %s144 = sphi 0, %s130
    %s148 = sphi 0, %s148
    %s150 = sphi 0, %s148
    %s151 = sphi 0, %s150
    %s165 = sphi 0, %s151
    %s169 = sphi 0, %s169
    %s171 = sphi 0, %s169
    %s172 = sphi 0, %s171
    %s186 = sphi 0, %s172
    %s190 = sphi 0, %s190
    %s192 = sphi 0, %s190
    %s193 = sphi 0, %s192
    %s207 = sphi 0, %s193
    %s211 = sphi 0, %s211
    %s213 = sphi 0, %s211
    %s214 = sphi 0, %s213
    %s228 = sphi 0, %s214
    %s232 = sphi 0, %s232
    %s234 = sphi 0, %s232
    %s235 = sphi 0, %s234
    %s249 = sphi 0, %s235
    %s253 = sphi 0, %s253
    %s255 = sphi 0, %s253
    %s256 = sphi 0, %s255
    %s270 = sphi 0, %s256
    %s276 = sphi 0, %s278
    %s279 = sphi 0, %s276
    %s280 = sphi 0, %s279
    %s296 = sphi 0, %s280
    %s304 = sphi 0, %s306
    %s307 = sphi 0, %s304
    %s308 = sphi 0, %s307
    %s324 = sphi 0, %s308
  $region4: #{bert_base_uncased_forward.7} parent=0 // loop_header_branch
    %21 = sbr.rel (%p19) target = $region8
  $region5: #{bert_base_uncased_forward.7} parent=0 // loop_body
    %s23 = ssub.s32 %s18, 1
    %s24 = ssub.s32 %s18, 2
    %s31 = sadd.s32 1, %s26
    %p32 = scmp.ge.s32.totalorder %s31, 1
    %s33 = scalar_select %p32, 0, %s31
    %s34 = sadd.s32 1, %s25
    %s35 = scalar_select %p32, %s34, %s25
    %p36 = scmp.ge.s32.totalorder %s35, 2
    %s37 = scalar_select %p36, 0, %s35
    %s38 = ssub.s32 %s25, %s37
    %p39 = scmp.eq.s32.totalorder %s38, 0
    %s41 = sadd.s32 %s40, 1
    %s42 = scalar_select %p39, %s40, %s41
    %p45 = pneg %p39
    %p46 = scmp.eq.s32.totalorder %s18, 1
    %p47 = por %p45, %p46
    %p48 = scmp.ne.s32.totalorder %s40, %s43
    %p49 = scmp.eq.s32.totalorder %s18, 0
    %p50 = por %p48, %p49
    %p51 = scmp.ne.s32.totalorder %s40, %s43
    %p52 = scmp.eq.s32.totalorder %s23, 1
    %p53 = por %p51, %p52
    %p54 = scmp.ne.s32.totalorder %s43, %s44
    %p55 = scmp.eq.s32.totalorder %s23, 0
    %p56 = por %p54, %p55
    %p57 = scmp.ne.s32.totalorder %s43, %s44
    %p58 = scmp.eq.s32.totalorder %s24, 1
    %p59 = por %p57, %p58
    %p61 = scmp.ne.s32.totalorder %s44, %s60
    %p62 = scmp.eq.s32.totalorder %s24, 0
    %p63 = por %p61, %p62
    %s65 = sadd.s32 %s64, 1
    %p68 = scmp.eq.s32.totalorder %s18, 1
    %p69 = scmp.ne.s32.totalorder %s64, %s66
    %p70 = scmp.eq.s32.totalorder %s18, 0
    %p71 = por %p69, %p70
    %p72 = scmp.ne.s32.totalorder %s64, %s66
    %p73 = scmp.eq.s32.totalorder %s23, 1
    %p74 = por %p72, %p73
    %p75 = scmp.ne.s32.totalorder %s66, %s67
    %p76 = scmp.eq.s32.totalorder %s23, 0
    %p77 = por %p75, %p76
    %p78 = scmp.ne.s32.totalorder %s66, %s67
    %p79 = scmp.eq.s32.totalorder %s24, 1
    %p80 = por %p78, %p79
    %p82 = scmp.ne.s32.totalorder %s67, %s81
    %p83 = scmp.eq.s32.totalorder %s24, 0
    %p84 = por %p82, %p83
    %s86 = sadd.s32 %s85, 1
    %p89 = scmp.eq.s32.totalorder %s18, 1
    %p90 = scmp.ne.s32.totalorder %s85, %s87
    %p91 = scmp.eq.s32.totalorder %s18, 0
    %p92 = por %p90, %p91
    %p93 = scmp.ne.s32.totalorder %s85, %s87
    %p94 = scmp.eq.s32.totalorder %s23, 1
    %p95 = por %p93, %p94
    %p96 = scmp.ne.s32.totalorder %s87, %s88
    %p97 = scmp.eq.s32.totalorder %s23, 0
    %p98 = por %p96, %p97
    %p99 = scmp.ne.s32.totalorder %s87, %s88
    %p100 = scmp.eq.s32.totalorder %s24, 1
    %p101 = por %p99, %p100
    %p103 = scmp.ne.s32.totalorder %s88, %s102
    %p104 = scmp.eq.s32.totalorder %s24, 0
    %p105 = por %p103, %p104
    %s107 = sadd.s32 %s106, 1
    %p110 = scmp.eq.s32.totalorder %s18, 1
    %p111 = scmp.ne.s32.totalorder %s106, %s108
    %p112 = scmp.eq.s32.totalorder %s18, 0
    %p113 = por %p111, %p112
    %p114 = scmp.ne.s32.totalorder %s106, %s108
    %p115 = scmp.eq.s32.totalorder %s23, 1
    %p116 = por %p114, %p115
    %p117 = scmp.ne.s32.totalorder %s108, %s109
    %p118 = scmp.eq.s32.totalorder %s23, 0
    %p119 = por %p117, %p118
    %p120 = scmp.ne.s32.totalorder %s108, %s109
    %p121 = scmp.eq.s32.totalorder %s24, 1
    %p122 = por %p120, %p121
    %p124 = scmp.ne.s32.totalorder %s109, %s123
    %p125 = scmp.eq.s32.totalorder %s24, 0
    %p126 = por %p124, %p125
    %s128 = sadd.s32 %s127, 1
    %p131 = scmp.eq.s32.totalorder %s18, 1
    %p132 = scmp.ne.s32.totalorder %s127, %s129
    %p133 = scmp.eq.s32.totalorder %s18, 0
    %p134 = por %p132, %p133
    %p135 = scmp.ne.s32.totalorder %s127, %s129
    %p136 = scmp.eq.s32.totalorder %s23, 1
    %p137 = por %p135, %p136
    %p138 = scmp.ne.s32.totalorder %s129, %s130
    %p139 = scmp.eq.s32.totalorder %s23, 0
    %p140 = por %p138, %p139
    %p141 = scmp.ne.s32.totalorder %s129, %s130
    %p142 = scmp.eq.s32.totalorder %s24, 1
    %p143 = por %p141, %p142
    %p145 = scmp.ne.s32.totalorder %s130, %s144
    %p146 = scmp.eq.s32.totalorder %s24, 0
    %p147 = por %p145, %p146
    %s149 = sadd.s32 %s148, 1
    %p152 = scmp.eq.s32.totalorder %s18, 1
    %p153 = scmp.ne.s32.totalorder %s148, %s150
    %p154 = scmp.eq.s32.totalorder %s18, 0
    %p155 = por %p153, %p154
    %p156 = scmp.ne.s32.totalorder %s148, %s150
    %p157 = scmp.eq.s32.totalorder %s23, 1
    %p158 = por %p156, %p157
    %p159 = scmp.ne.s32.totalorder %s150, %s151
    %p160 = scmp.eq.s32.totalorder %s23, 0
    %p161 = por %p159, %p160
    %p162 = scmp.ne.s32.totalorder %s150, %s151
    %p163 = scmp.eq.s32.totalorder %s24, 1
    %p164 = por %p162, %p163
    %p166 = scmp.ne.s32.totalorder %s151, %s165
    %p167 = scmp.eq.s32.totalorder %s24, 0
    %p168 = por %p166, %p167
    %s170 = sadd.s32 %s169, 1
    %p173 = scmp.eq.s32.totalorder %s18, 1
    %p174 = scmp.ne.s32.totalorder %s169, %s171
    %p175 = scmp.eq.s32.totalorder %s18, 0
    %p176 = por %p174, %p175
    %p177 = scmp.ne.s32.totalorder %s169, %s171
    %p178 = scmp.eq.s32.totalorder %s23, 1
    %p179 = por %p177, %p178
    %p180 = scmp.ne.s32.totalorder %s171, %s172
    %p181 = scmp.eq.s32.totalorder %s23, 0
    %p182 = por %p180, %p181
    %p183 = scmp.ne.s32.totalorder %s171, %s172
    %p184 = scmp.eq.s32.totalorder %s24, 1
    %p185 = por %p183, %p184
    %p187 = scmp.ne.s32.totalorder %s172, %s186
    %p188 = scmp.eq.s32.totalorder %s24, 0
    %p189 = por %p187, %p188
    %s191 = sadd.s32 %s190, 1
    %p194 = scmp.eq.s32.totalorder %s18, 1
    %p195 = scmp.ne.s32.totalorder %s190, %s192
    %p196 = scmp.eq.s32.totalorder %s18, 0
    %p197 = por %p195, %p196
    %p198 = scmp.ne.s32.totalorder %s190, %s192
    %p199 = scmp.eq.s32.totalorder %s23, 1
    %p200 = por %p198, %p199
    %p201 = scmp.ne.s32.totalorder %s192, %s193
    %p202 = scmp.eq.s32.totalorder %s23, 0
    %p203 = por %p201, %p202
    %p204 = scmp.ne.s32.totalorder %s192, %s193
    %p205 = scmp.eq.s32.totalorder %s24, 1
    %p206 = por %p204, %p205
    %p208 = scmp.ne.s32.totalorder %s193, %s207
    %p209 = scmp.eq.s32.totalorder %s24, 0
    %p210 = por %p208, %p209
    %s212 = sadd.s32 %s211, 1
    %p215 = scmp.eq.s32.totalorder %s18, 1
    %p216 = scmp.ne.s32.totalorder %s211, %s213
    %p217 = scmp.eq.s32.totalorder %s18, 0
    %p218 = por %p216, %p217
    %p219 = scmp.ne.s32.totalorder %s211, %s213
    %p220 = scmp.eq.s32.totalorder %s23, 1
    %p221 = por %p219, %p220
    %p222 = scmp.ne.s32.totalorder %s213, %s214
    %p223 = scmp.eq.s32.totalorder %s23, 0
    %p224 = por %p222, %p223
    %p225 = scmp.ne.s32.totalorder %s213, %s214
    %p226 = scmp.eq.s32.totalorder %s24, 1
    %p227 = por %p225, %p226
    %p229 = scmp.ne.s32.totalorder %s214, %s228
    %p230 = scmp.eq.s32.totalorder %s24, 0
    %p231 = por %p229, %p230
    %s233 = sadd.s32 %s232, 1
    %p236 = scmp.eq.s32.totalorder %s18, 1
    %p237 = scmp.ne.s32.totalorder %s232, %s234
    %p238 = scmp.eq.s32.totalorder %s18, 0
    %p239 = por %p237, %p238
    %p240 = scmp.ne.s32.totalorder %s232, %s234
    %p241 = scmp.eq.s32.totalorder %s23, 1
    %p242 = por %p240, %p241
    %p243 = scmp.ne.s32.totalorder %s234, %s235
    %p244 = scmp.eq.s32.totalorder %s23, 0
    %p245 = por %p243, %p244
    %p246 = scmp.ne.s32.totalorder %s234, %s235
    %p247 = scmp.eq.s32.totalorder %s24, 1
    %p248 = por %p246, %p247
    %p250 = scmp.ne.s32.totalorder %s235, %s249
    %p251 = scmp.eq.s32.totalorder %s24, 0
    %p252 = por %p250, %p251
    %s254 = sadd.s32 %s253, 1
    %p257 = scmp.eq.s32.totalorder %s18, 1
    %p258 = scmp.ne.s32.totalorder %s253, %s255
    %p259 = scmp.eq.s32.totalorder %s18, 0
    %p260 = por %p258, %p259
    %p261 = scmp.ne.s32.totalorder %s253, %s255
    %p262 = scmp.eq.s32.totalorder %s23, 1
    %p263 = por %p261, %p262
    %p264 = scmp.ne.s32.totalorder %s255, %s256
    %p265 = scmp.eq.s32.totalorder %s23, 0
    %p266 = por %p264, %p265
    %p267 = scmp.ne.s32.totalorder %s255, %s256
    %p268 = scmp.eq.s32.totalorder %s24, 1
    %p269 = por %p267, %p268
    %p271 = scmp.ne.s32.totalorder %s256, %s270
    %p272 = scmp.eq.s32.totalorder %s24, 0
    %p273 = por %p271, %p272
    %s274 = ssub.s32 %s25, %s37
    %p275 = scmp.eq.s32.totalorder %s274, 0
    %s277 = sadd.s32 %s276, 1
    %s278 = scalar_select %p275, %s276, %s277
    %p281 = pneg %p275
    %p282 = scmp.eq.s32.totalorder %s18, 1
    %p283 = por %p281, %p282
    %p284 = scmp.ne.s32.totalorder %s276, %s279
    %p285 = scmp.eq.s32.totalorder %s18, 0
    %p286 = por %p284, %p285
    %p287 = scmp.ne.s32.totalorder %s276, %s279
    %p288 = scmp.eq.s32.totalorder %s23, 1
    %p289 = por %p287, %p288
    %p290 = scmp.ne.s32.totalorder %s279, %s280
    %p291 = scmp.eq.s32.totalorder %s23, 0
    %p292 = por %p290, %p291
    %p293 = scmp.ne.s32.totalorder %s279, %s280
    %p294 = scmp.eq.s32.totalorder %s24, 1
    %p295 = por %p293, %p294
    %p297 = scmp.ne.s32.totalorder %s280, %s296
    %p298 = scmp.eq.s32.totalorder %s24, 0
    %p299 = por %p297, %p298
    %s300 = ssub.s32 %s25, %s37
    %s301 = ssub.s32 %s26, %s33
    %s302 = sor.u32 %s300, %s301
    %p303 = scmp.eq.s32.totalorder %s302, 0
    %s305 = sadd.s32 %s304, 1
    %s306 = scalar_select %p303, %s304, %s305
    %p309 = pneg %p303
    %p310 = scmp.eq.s32.totalorder %s18, 1
    %p311 = por %p309, %p310
    %p312 = scmp.ne.s32.totalorder %s304, %s307
    %p313 = scmp.eq.s32.totalorder %s18, 0
    %p314 = por %p312, %p313
    %p315 = scmp.ne.s32.totalorder %s304, %s307
    %p316 = scmp.eq.s32.totalorder %s23, 1
    %p317 = por %p315, %p316
    %p318 = scmp.ne.s32.totalorder %s307, %s308
    %p319 = scmp.eq.s32.totalorder %s23, 0
    %p320 = por %p318, %p319
    %p321 = scmp.ne.s32.totalorder %s307, %s308
    %p322 = scmp.eq.s32.totalorder %s24, 1
    %p323 = por %p321, %p322
    %p325 = scmp.ne.s32.totalorder %s308, %s324
    %p326 = scmp.eq.s32.totalorder %s24, 0
    %p327 = por %p325, %p326
    %p328 = scmp.le.s32.totalorder 1, %s18
    %p329 = scmp.lt.s32.totalorder %s18, 3
    %p330 = pnand %p328, %p329
    %p331 = pneg %p330
    // Predicated region
    $region9: #{bert_base_uncased_forward.7} parent=5 // pred_check
      _
    $region10: #{bert_base_uncased_forward.7} parent=5 // pred_check_branch
      %333 = sbr.rel (%p330) target = $region12
    $region11: #{bert_base_uncased_forward.7} parent=5 // pred_region
      %s334 = ssub.s32 %s18, 1
      // Predicated region
      $region13: #{bert_base_uncased_forward.7} parent=11 // pred_check
        %p335 = pneg %p77
      $region14: #{bert_base_uncased_forward.7} parent=11 // pred_check_branch
        %337 = sbr.rel (%p335) target = $region16
      $region15: #{bert_base_uncased_forward.7} parent=11 // pred_region
        _
      $region16: #{bert_base_uncased_forward.7} parent=11 // pred_fallthru
        _
      // Predicated region
      $region17: #{bert_base_uncased_forward.7} parent=11 // pred_check
        %p338 = pneg %p98
      $region18: #{bert_base_uncased_forward.7} parent=11 // pred_check_branch
        %340 = sbr.rel (%p338) target = $region20
      $region19: #{bert_base_uncased_forward.7} parent=11 // pred_region
        _
      $region20: #{bert_base_uncased_forward.7} parent=11 // pred_fallthru
        _
      // Predicated region
      $region21: #{bert_base_uncased_forward.7} parent=11 // pred_check
        %p341 = pneg %p119
      $region22: #{bert_base_uncased_forward.7} parent=11 // pred_check_branch
        %343 = sbr.rel (%p341) target = $region24
      $region23: #{bert_base_uncased_forward.7} parent=11 // pred_region
        _
      $region24: #{bert_base_uncased_forward.7} parent=11 // pred_fallthru
        _
      // Predicated region
      $region25: #{bert_base_uncased_forward.7} parent=11 // pred_check
        %p344 = pneg %p140
      $region26: #{bert_base_uncased_forward.7} parent=11 // pred_check_branch
        %346 = sbr.rel (%p344) target = $region28
      $region27: #{bert_base_uncased_forward.7} parent=11 // pred_region
        _
      $region28: #{bert_base_uncased_forward.7} parent=11 // pred_fallthru
        _
      // Predicated region
      $region29: #{bert_base_uncased_forward.7} parent=11 // pred_check
        %p347 = pneg %p161
      $region30: #{bert_base_uncased_forward.7} parent=11 // pred_check_branch
        %349 = sbr.rel (%p347) target = $region32
      $region31: #{bert_base_uncased_forward.7} parent=11 // pred_region
        _
      $region32: #{bert_base_uncased_forward.7} parent=11 // pred_fallthru
        _
      // Predicated region
      $region33: #{bert_base_uncased_forward.7} parent=11 // pred_check
        %p350 = pneg %p182
      $region34: #{bert_base_uncased_forward.7} parent=11 // pred_check_branch
        %352 = sbr.rel (%p350) target = $region36
      $region35: #{bert_base_uncased_forward.7} parent=11 // pred_region
        _
      $region36: #{bert_base_uncased_forward.7} parent=11 // pred_fallthru
        _
      // Predicated region
      $region37: #{bert_base_uncased_forward.7} parent=11 // pred_check
        %p353 = pneg %p203
      $region38: #{bert_base_uncased_forward.7} parent=11 // pred_check_branch
        %355 = sbr.rel (%p353) target = $region40
      $region39: #{bert_base_uncased_forward.7} parent=11 // pred_region
        _
      $region40: #{bert_base_uncased_forward.7} parent=11 // pred_fallthru
        _
      // Predicated region
      $region41: #{bert_base_uncased_forward.7} parent=11 // pred_check
        %p356 = pneg %p224
      $region42: #{bert_base_uncased_forward.7} parent=11 // pred_check_branch
        %358 = sbr.rel (%p356) target = $region44
      $region43: #{bert_base_uncased_forward.7} parent=11 // pred_region
        _
      $region44: #{bert_base_uncased_forward.7} parent=11 // pred_fallthru
        _
      // Predicated region
      $region45: #{bert_base_uncased_forward.7} parent=11 // pred_check
        %p359 = pneg %p245
      $region46: #{bert_base_uncased_forward.7} parent=11 // pred_check_branch
        %361 = sbr.rel (%p359) target = $region48
      $region47: #{bert_base_uncased_forward.7} parent=11 // pred_region
        _
      $region48: #{bert_base_uncased_forward.7} parent=11 // pred_fallthru
        _
      // Predicated region
      $region49: #{bert_base_uncased_forward.7} parent=11 // pred_check
        %p362 = pneg %p266
      $region50: #{bert_base_uncased_forward.7} parent=11 // pred_check_branch
        %364 = sbr.rel (%p362) target = $region52
      $region51: #{bert_base_uncased_forward.7} parent=11 // pred_region
        _
      $region52: #{bert_base_uncased_forward.7} parent=11 // pred_fallthru
        _
    $region12: #{bert_base_uncased_forward.7} parent=5 // pred_fallthru
      _
    %p365 = scmp.lt.s32.totalorder %s18, 2
    // Predicated region
    $region53: #{bert_base_uncased_forward.7} parent=5 // pred_check
      %p366 = pneg %p365
    $region54: #{bert_base_uncased_forward.7} parent=5 // pred_check_branch
      %368 = sbr.rel (%p366) target = $region56
    $region55: #{bert_base_uncased_forward.7} parent=5 // pred_region
      // Predicated region
      $region57: #{bert_base_uncased_forward.7} parent=55 // pred_check
        %p369 = pneg %p50
      $region58: #{bert_base_uncased_forward.7} parent=55 // pred_check_branch
        %371 = sbr.rel (%p369) target = $region60
      $region59: #{bert_base_uncased_forward.7} parent=55 // pred_region
        %p372 = scmp.lt.s32.totalorder %s25, 1
        %s373 = scalar_select %p372, %s25, 1
        %s374 = smul.addr %s373, 4
        %s375 = scalar_lea.vmem %s0, %s374
      $region60: #{bert_base_uncased_forward.7} parent=55 // pred_fallthru
        _
      // Predicated region
      $region61: #{bert_base_uncased_forward.7} parent=55 // pred_check
        %p376 = pneg %p286
      $region62: #{bert_base_uncased_forward.7} parent=55 // pred_check_branch
        %378 = sbr.rel (%p376) target = $region64
      $region63: #{bert_base_uncased_forward.7} parent=55 // pred_region
        %p379 = scmp.lt.s32.totalorder %s25, 1
        %s380 = scalar_select %p379, %s25, 1
        %s381 = scalar_lea.vmem %s11, %s380
      $region64: #{bert_base_uncased_forward.7} parent=55 // pred_fallthru
        _
    $region56: #{bert_base_uncased_forward.7} parent=5 // pred_fallthru
      _
    %p382 = scmp.le.s32.totalorder 1, %s18
    %p383 = scmp.lt.s32.totalorder %s18, 3
    %p384 = pnand %p382, %p383
    %p385 = pneg %p384
    // Predicated region
    $region65: #{bert_base_uncased_forward.7} parent=5 // pred_check
      _
    $region66: #{bert_base_uncased_forward.7} parent=5 // pred_check_branch
      %387 = sbr.rel (%p384) target = $region68
    $region67: #{bert_base_uncased_forward.7} parent=5 // pred_region
      %s388 = ssub.s32 %s18, 1
      %p389 = scmp.lt.s32.totalorder %s27, 1
      %s390 = scalar_select %p389, %s27, 1
      %s391 = smul.addr %s390, 4
      %s392 = scalar_lea.vmem %s0, %s391
      %p393 = pneg %p56
      %p394 = pneg %p53
      %p395 = pneg %p77
      %p396 = pneg %p74
      %p397 = pneg %p98
      %p398 = pneg %p95
      %p399 = pneg %p119
      %p400 = pneg %p116
      %p401 = pneg %p140
      %p402 = pneg %p137
      %p403 = pneg %p161
      %p404 = pneg %p158
      %p405 = pneg %p182
      %p406 = pneg %p179
      %p407 = pneg %p203
      %p408 = pneg %p200
      %p409 = pneg %p224
      %p410 = pneg %p221
      %p411 = pneg %p245
      %p412 = pneg %p242
      %p413 = pneg %p266
      %p414 = pneg %p263
      %p415 = scmp.lt.s32.totalorder %s27, 1
      %s416 = scalar_select %p415, %s27, 1
      %s417 = scalar_lea.vmem %s11, %s416
      %p418 = pneg %p292
      %p419 = pneg %p289
      %p420 = pneg %p320
      %p421 = pneg %p317
      %p422 = scmp.lt.s32.totalorder %s27, 1
      %s423 = scalar_select %p422, %s27, 1
      %p424 = scmp.lt.s32.totalorder %s28, 0
      %s425 = scalar_select %p424, %s28, 0
      %s426 = sadd.s32 %s425, %s423
      %s427 = smul.addr %s426, 4
      %s428 = scalar_lea.vmem %s12, %s427
      %p429 = scmp.lt.s32.totalorder %s27, 1
      %s430 = scalar_select %p429, %s27, 1
      %s431 = smul.addr %s430, 4
      %s432 = scalar_lea.vmem %s0, %s431
      %p433 = scmp.lt.s32.totalorder %s27, 1
      %s434 = scalar_select %p433, %s27, 1
      %s435 = scalar_lea.vmem %s11, %s434
      %p436 = scmp.lt.s32.totalorder %s27, 1
      %s437 = scalar_select %p436, %s27, 1
      %p438 = scmp.lt.s32.totalorder %s28, 0
      %s439 = scalar_select %p438, %s28, 0
      %s440 = sadd.s32 %s439, %s437
      %s441 = smul.addr %s440, 4
      %s442 = scalar_lea.vmem %s12, %s441
      %p444 = scmp.eq.s32.totalorder %s28, 0
      // Predicated region
      $region69: #{bert_base_uncased_forward.7} parent=67 // pred_check
        %p445 = pneg %p444
      $region70: #{bert_base_uncased_forward.7} parent=67 // pred_check_branch
        %447 = sbr.rel (%p445) target = $region72
      $region71: #{bert_base_uncased_forward.7} parent=67 // pred_region
        %v448 = vld [vmem:[%s432] sm:$0xf]
        loop: start=0, step=1, limit=4
        $region73: #{bert_base_uncased_forward.7} parent=71 // loop_pre_header
          _
        $region74: #{bert_base_uncased_forward.7} parent=71 // loop_header
          %s450 = sphi 0, %s454
          %p451 = scmp.ge.s32.totalorder %s450, 4
        $region75: #{bert_base_uncased_forward.7} parent=71 // loop_header_branch
          %453 = sbr.rel (%p451) target = $region79
        $region76: #{bert_base_uncased_forward.7} parent=71 // loop_body
          %s455 = smul.u32 %s450, 16
          %s456 = smul.addr %s455, 4
          %s457 = scalar_lea.vmem %s2, %s456
          %v458 = vld [vmem:[%s457] sm:$0xf]
          %v459 = vld [vmem:[%s457 + $0x4] sm:$0xf]
          %v460 = vld [vmem:[%s457 + $0x8] sm:$0xf]
          %v461 = vld [vmem:[%s457 + $0xc] sm:$0xf]
          %v462 = vld [vmem:[%s457 + $0x10] sm:$0xf]
          %v463 = vld [vmem:[%s457 + $0x14] sm:$0xf]
          %v464 = vld [vmem:[%s457 + $0x18] sm:$0xf]
          %v465 = vld [vmem:[%s457 + $0x1c] sm:$0xf]
          %v466 = vld [vmem:[%s457 + $0x20] sm:$0xf]
          %v467 = vld [vmem:[%s457 + $0x24] sm:$0xf]
          %v468 = vld [vmem:[%s457 + $0x28] sm:$0xf]
          %v469 = vld [vmem:[%s457 + $0x2c] sm:$0xf]
          %v470 = vld [vmem:[%s457 + $0x30] sm:$0xf]
          %v471 = vld [vmem:[%s457 + $0x34] sm:$0xf]
          %v472 = vld [vmem:[%s457 + $0x38] sm:$0xf]
          %v473 = vld [vmem:[%s457 + $0x3c] sm:$0xf]
          %s474 = scalar_lea.vmem %s5, %s450
          %v475 = vld [vmem:[%s474] sm:$0x1]
          %v477 = vperm.slane %v475, 0
          %v495 = vunpack.c.l.b16 %v458
          %v496 = vunpack.c.l.b16 %v459
          %v497 = vunpack.c.l.b16 %v460
          %v498 = vunpack.c.l.b16 %v461
          %v499 = vunpack.c.l.b16 %v462
          %v500 = vunpack.c.l.b16 %v463
          %v501 = vunpack.c.l.b16 %v464
          %v502 = vunpack.c.l.b16 %v465
          %v503 = vunpack.c.l.b16 %v466
          %v504 = vunpack.c.l.b16 %v467
          %v505 = vunpack.c.l.b16 %v468
          %v506 = vunpack.c.l.b16 %v469
          %v507 = vunpack.c.l.b16 %v470
          %v508 = vunpack.c.l.b16 %v471
          %v509 = vunpack.c.l.b16 %v472
          %v510 = vunpack.c.l.b16 %v473
          %v511 = vpack.c.b16 %v496, %v495
          %v512 = vpack.c.b16 %v498, %v497
          %v513 = vpack.c.b16 %v500, %v499
          %v514 = vpack.c.b16 %v502, %v501
          %v515 = vpack.c.b16 %v504, %v503
          %v516 = vpack.c.b16 %v506, %v505
          %v517 = vpack.c.b16 %v508, %v507
          %v518 = vpack.c.b16 %v510, %v509
          %527 = vmatpush.bf16.msra.mxu0 %v518
          %528 = vmatpush.bf16.msra.mxu0 %v517
          %529 = vmatpush.bf16.msra.mxu0 %v516
          %530 = vmatpush.bf16.msra.mxu0 %v515
          %531 = vmatpush.bf16.msra.mxu0 %v514
          %532 = vmatpush.bf16.msra.mxu0 %v513
          %533 = vmatpush.bf16.msra.mxu0 %v512
          %534 = vmatpush.bf16.msra.mxu0 %v511
          %535 = vmatmul.bf16.gmra.mxu0 %v448
          %v536 = vpop.f32.mrf.mxu0
          %v537 = vadd.f32 %v477, %v536
          %v538 = vpop.f32.mrf.mxu0
          %539 = vdwg.mxu0
          %v540 = vpack.c.bf16 %v537, %v537
          %s541 = smul.addr %s450, 4
          %s542 = scalar_lea.vmem [#allocation2], %s541
          %vm543 = vcmask 257024
          %544 = vst.msk [vmem:[%s542] sm:$0xf] %vm543, %v540
          %s545 = smul.addr %s455, 4
          %s546 = scalar_lea.vmem %s3, %s545
          %v547 = vld [vmem:[%s546] sm:$0xf]
          %v548 = vld [vmem:[%s546 + $0x4] sm:$0xf]
          %v549 = vld [vmem:[%s546 + $0x8] sm:$0xf]
          %v550 = vld [vmem:[%s546 + $0xc] sm:$0xf]
          %v551 = vld [vmem:[%s546 + $0x10] sm:$0xf]
          %v552 = vld [vmem:[%s546 + $0x14] sm:$0xf]
          %v553 = vld [vmem:[%s546 + $0x18] sm:$0xf]
          %v554 = vld [vmem:[%s546 + $0x1c] sm:$0xf]
          %v555 = vld [vmem:[%s546 + $0x20] sm:$0xf]
          %v556 = vld [vmem:[%s546 + $0x24] sm:$0xf]
          %v557 = vld [vmem:[%s546 + $0x28] sm:$0xf]
          %v558 = vld [vmem:[%s546 + $0x2c] sm:$0xf]
          %v559 = vld [vmem:[%s546 + $0x30] sm:$0xf]
          %v560 = vld [vmem:[%s546 + $0x34] sm:$0xf]
          %v561 = vld [vmem:[%s546 + $0x38] sm:$0xf]
          %v562 = vld [vmem:[%s546 + $0x3c] sm:$0xf]
          %s563 = scalar_lea.vmem %s6, %s450
          %v564 = vld [vmem:[%s563] sm:$0x1]
          %v566 = vperm.slane %v564, 0
          %v584 = vunpack.c.l.b16 %v547
          %v585 = vunpack.c.l.b16 %v548
          %v586 = vunpack.c.l.b16 %v549
          %v587 = vunpack.c.l.b16 %v550
          %v588 = vunpack.c.l.b16 %v551
          %v589 = vunpack.c.l.b16 %v552
          %v590 = vunpack.c.l.b16 %v553
          %v591 = vunpack.c.l.b16 %v554
          %v592 = vunpack.c.l.b16 %v555
          %v593 = vunpack.c.l.b16 %v556
          %v594 = vunpack.c.l.b16 %v557
          %v595 = vunpack.c.l.b16 %v558
          %v596 = vunpack.c.l.b16 %v559
          %v597 = vunpack.c.l.b16 %v560
          %v598 = vunpack.c.l.b16 %v561
          %v599 = vunpack.c.l.b16 %v562
          %v600 = vpack.c.b16 %v585, %v584
          %v601 = vpack.c.b16 %v587, %v586
          %v602 = vpack.c.b16 %v589, %v588
          %v603 = vpack.c.b16 %v591, %v590
          %v604 = vpack.c.b16 %v593, %v592
          %v605 = vpack.c.b16 %v595, %v594
          %v606 = vpack.c.b16 %v597, %v596
          %v607 = vpack.c.b16 %v599, %v598
          %616 = vmatpush.bf16.msra.mxu0 %v607
          %617 = vmatpush.bf16.msra.mxu0 %v606
          %618 = vmatpush.bf16.msra.mxu0 %v605
          %619 = vmatpush.bf16.msra.mxu0 %v604
          %620 = vmatpush.bf16.msra.mxu0 %v603
          %621 = vmatpush.bf16.msra.mxu0 %v602
          %622 = vmatpush.bf16.msra.mxu0 %v601
          %623 = vmatpush.bf16.msra.mxu0 %v600
          %624 = vmatmul.bf16.gmra.mxu0 %v448
          %v625 = vpop.f32.mrf.mxu0
          %v626 = vadd.f32 %v566, %v625
          %v627 = vpop.f32.mrf.mxu0
          %628 = vdwg.mxu0
          %v629 = vpack.c.bf16 %v626, %v626
          %s630 = smul.addr %s450, 4
          %s631 = scalar_lea.vmem [#allocation3], %s630
          %632 = vst.msk [vmem:[%s631] sm:$0xf] %vm543, %v629
        $region77: #{bert_base_uncased_forward.7} parent=71 // loop_footer
          %s454 = sadd.s32 1, %s450
        $region78: #{bert_base_uncased_forward.7} parent=71 // loop_footer_branch
          %449 = sbr.rel target = $region74
        $region79: #{bert_base_uncased_forward.7} parent=71 // loop_exit
          _
      $region72: #{bert_base_uncased_forward.7} parent=67 // pred_fallthru
        _
      %s633 = smul.u32 %s28, 8
      %s634 = sshra.s32 %s633, 3
      %s635 = sand.u32 %s633, 7
      %s636 = smul.addr %s634, 4
      %s637 = scalar_lea.vmem %s432, %s636
      %v638 = vld [vmem:[%s637] sm:$0xf]
      %v639 = vunpack.c.l.bf16 %v638
      %v640 = vld [vmem:[%s8] sm:$0x1]
      %v642 = vperm.slane %v640, 0
      %v644 = vadd.f32 %v639, %v642
      %645 = vst [vmem:[#allocation4] sm:$0xff] %v644
      loop: start=0, step=1, limit=4
      $region80: #{bert_base_uncased_forward.7} parent=67 // loop_pre_header
        _
      $region81: #{bert_base_uncased_forward.7} parent=67 // loop_header
        %s647 = sphi 0, %s651
        %p648 = scmp.ge.s32.totalorder %s647, 4
      $region82: #{bert_base_uncased_forward.7} parent=67 // loop_header_branch
        %650 = sbr.rel (%p648) target = $region86
      $region83: #{bert_base_uncased_forward.7} parent=67 // loop_body
        %s652 = smul.u32 %s647, 16
        %s653 = smul.addr %s652, 4
        %s654 = scalar_lea.vmem %s1, %s653
        %v655 = vld [vmem:[%s654] sm:$0xf]
        %v656 = vld [vmem:[%s654 + $0x4] sm:$0xf]
        %v657 = vld [vmem:[%s654 + $0x8] sm:$0xf]
        %v658 = vld [vmem:[%s654 + $0xc] sm:$0xf]
        %v659 = vld [vmem:[%s654 + $0x10] sm:$0xf]
        %v660 = vld [vmem:[%s654 + $0x14] sm:$0xf]
        %v661 = vld [vmem:[%s654 + $0x18] sm:$0xf]
        %v662 = vld [vmem:[%s654 + $0x1c] sm:$0xf]
        %v663 = vld [vmem:[%s654 + $0x20] sm:$0xf]
        %v664 = vld [vmem:[%s654 + $0x24] sm:$0xf]
        %v665 = vld [vmem:[%s654 + $0x28] sm:$0xf]
        %v666 = vld [vmem:[%s654 + $0x2c] sm:$0xf]
        %v667 = vld [vmem:[%s654 + $0x30] sm:$0xf]
        %v668 = vld [vmem:[%s654 + $0x34] sm:$0xf]
        %v669 = vld [vmem:[%s654 + $0x38] sm:$0xf]
        %v670 = vld [vmem:[%s654 + $0x3c] sm:$0xf]
        %s671 = scalar_lea.vmem %s4, %s647
        %v672 = vld [vmem:[%s671] sm:$0x1]
        %v674 = vperm.slane %v672, 0
        %v692 = vunpack.c.l.b16 %v655
        %v693 = vunpack.c.l.b16 %v656
        %v694 = vunpack.c.l.b16 %v657
        %v695 = vunpack.c.l.b16 %v658
        %v696 = vunpack.c.l.b16 %v659
        %v697 = vunpack.c.l.b16 %v660
        %v698 = vunpack.c.l.b16 %v661
        %v699 = vunpack.c.l.b16 %v662
        %v700 = vunpack.c.l.b16 %v663
        %v701 = vunpack.c.l.b16 %v664
        %v702 = vunpack.c.l.b16 %v665
        %v703 = vunpack.c.l.b16 %v666
        %v704 = vunpack.c.l.b16 %v667
        %v705 = vunpack.c.l.b16 %v668
        %v706 = vunpack.c.l.b16 %v669
        %v707 = vunpack.c.l.b16 %v670
        %v708 = vpack.c.b16 %v693, %v692
        %v709 = vpack.c.b16 %v695, %v694
        %v710 = vpack.c.b16 %v697, %v696
        %v711 = vpack.c.b16 %v699, %v698
        %v712 = vpack.c.b16 %v701, %v700
        %v713 = vpack.c.b16 %v703, %v702
        %v714 = vpack.c.b16 %v705, %v704
        %v715 = vpack.c.b16 %v707, %v706
        %724 = vmatpush.bf16.msra.mxu0 %v715
        %725 = vmatpush.bf16.msra.mxu0 %v714
        %726 = vmatpush.bf16.msra.mxu0 %v713
        %727 = vmatpush.bf16.msra.mxu0 %v712
        %728 = vmatpush.bf16.msra.mxu0 %v711
        %729 = vmatpush.bf16.msra.mxu0 %v710
        %730 = vmatpush.bf16.msra.mxu0 %v709
        %731 = vmatpush.bf16.msra.mxu0 %v708
        %732 = vmatmul.bf16.gmra.mxu0 %v638
        %v733 = vpop.f32.mrf.mxu0
        %v734 = vadd.f32 %v674, %v733
        %v735 = vpop.f32.mrf.mxu0
        %736 = vdwg.mxu0
        %v737 = vpack.c.bf16 %v734, %v734
        %s738 = sadd.s32 0, %s647
        %s739 = smul.addr %s738, 4
        %s740 = scalar_lea.vmem [#allocation2], %s739
        %v741 = vld [vmem:[%s740] sm:$0xf]
        %s742 = smul.addr %s738, 4
        %s743 = scalar_lea.vmem [#allocation3], %s742
        %v744 = vld [vmem:[%s743] sm:$0xf]
        %vm745 = vcmask 261120
        %v747 = vsel %vm745, %v737, 0
        %v750 = vsel %vm745, %v741, 0
        %752 = vmatpush.bf16.xpose.msra.mxu0 0
        %753 = vmatpush.bf16.xpose.msra.mxu0 0
        %754 = vmatpush.bf16.xpose.msra.mxu0 0
        %755 = vmatpush.bf16.xpose.msra.mxu0 0
        %756 = vmatpush.bf16.xpose.msra.mxu0 0
        %757 = vmatpush.bf16.xpose.msra.mxu0 0
        %758 = vmatpush.bf16.xpose.msra.mxu0 0
        %759 = vmatpush.bf16.xpose.msra.mxu0 %v750
        %760 = vmatmul.bf16.gmra.mxu0 %v747
        %v761 = vpop.f32.mrf.mxu0
        %v762 = vadd.f32 0.0, %v761
        %v763 = vpop.f32.mrf.mxu0
        %764 = vdwg.mxu0
        %v765 = vmul.f32 %v762, 0.17677669
        %v766 = vld [vmem:[%s435] sm:$0x1]
        %v768 = vperm.slane %v766, 0
        %v770 = vadd.f32 %v765, %v768
        %vm771 = vcmask 64512
        %v772 = vsel %vm771, %v770, -inf
        %773 = vmax.xlane.f32.xlu0 %v772
        %v774 = vpop.xlane.xlu0 %773
        %v775 = vsub.f32 -inf, %v774
        %v776 = vmul.f32 %v775, 1.442695
        %v777 = vpow.pop %v776
        %v778 = vsub.f32 %v770, %v774
        %v779 = vmul.f32 %v778, 1.442695
        %v780 = vpow.pop %v779
        %v781 = vmul.f32 %v777, 0.0
        %v782 = vsel %vm771, %v780, 0.0
        %783 = vadd.xlane.f32.xlu0 %v782
        %v784 = vpop.xlane.xlu0 %783
        %v785 = vadd.f32 %v781, %v784
        %v786 = vpack.c.bf16 %v780, %v780
        %v788 = vsel %vm771, %v786, 0
        %vm790 = vcmask 1043456
        %v792 = vsel %vm790, %v744, 0
        %794 = vmatpush.bf16.msra.mxu0 0
        %795 = vmatpush.bf16.msra.mxu0 0
        %796 = vmatpush.bf16.msra.mxu0 0
        %797 = vmatpush.bf16.msra.mxu0 0
        %798 = vmatpush.bf16.msra.mxu0 0
        %799 = vmatpush.bf16.msra.mxu0 0
        %800 = vmatpush.bf16.msra.mxu0 0
        %801 = vmatpush.bf16.msra.mxu0 %v792
        %802 = vmatmul.bf16.gmra.mxu0 %v788
        %v803 = vpop.f32.mrf.mxu0
        %v804 = vadd.f32 0.0, %v803
        %v805 = vpop.f32.mrf.mxu0
        %806 = vdwg.mxu0
        %v807 = vadd.f32 %v781, %v804
        %v808 = vrcp.pop %v785
        %v809 = vmul.f32 %v807, %v808
        %v810 = vpack.c.bf16 %v809, %v809
        %v811 = vld [vmem:[#allocation4] sm:$0xff]
        %s812 = smul.u32 %s647, 4
        %s813 = smul.addr %s812, 4
        %s814 = scalar_lea.vmem %s7, %s813
        %v815 = vld [vmem:[%s814] sm:$0xf]
        %v816 = vld [vmem:[%s814 + $0x4] sm:$0xf]
        %v817 = vld [vmem:[%s814 + $0x8] sm:$0xf]
        %v818 = vld [vmem:[%s814 + $0xc] sm:$0xf]
        %v823 = vunpack.c.l.b16 %v815
        %v824 = vunpack.c.l.b16 %v816
        %v825 = vunpack.c.l.b16 %v817
        %v826 = vunpack.c.l.b16 %v818
        %v827 = vpack.c.b16 %v824, %v823
        %v828 = vpack.c.b16 %v826, %v825
        %v832 = vsel %vm745, %v810, 0
        %834 = vmatpush.bf16.msra.mxu0 0
        %835 = vmatpush.bf16.msra.mxu0 0
        %836 = vmatpush.bf16.msra.mxu0 0
        %837 = vmatpush.bf16.msra.mxu0 0
        %838 = vmatpush.bf16.msra.mxu0 0
        %839 = vmatpush.bf16.msra.mxu0 0
        %840 = vmatpush.bf16.msra.mxu0 %v828
        %841 = vmatpush.bf16.msra.mxu0 %v827
        %842 = vmatmul.bf16.gmra.mxu0 %v832
        %v843 = vpop.f32.mrf.mxu0
        %v844 = vadd.f32 0.0, %v843
        %v845 = vpop.f32.mrf.mxu0
        %846 = vdwg.mxu0
        %v847 = vadd.f32 %v811, %v844
        %848 = vst [vmem:[#allocation4] sm:$0xff] %v847
      $region84: #{bert_base_uncased_forward.7} parent=67 // loop_footer
        %s651 = sadd.s32 1, %s647
      $region85: #{bert_base_uncased_forward.7} parent=67 // loop_footer_branch
        %646 = sbr.rel target = $region81
      $region86: #{bert_base_uncased_forward.7} parent=67 // loop_exit
        _
      %v849 = vld [vmem:[#allocation4] sm:$0xff]
      %v850 = vld [vmem:[%s9] sm:$0x1]
      %v851 = vld [vmem:[%s10] sm:$0x1]
      %852 = vadd.xlane.f32.xlu0 %v849
      %v853 = vpop.xlane.xlu0 %852
      %v854 = vrcp.pop 128.0
      %v855 = vmul.f32 128.0, %v854
      %v856 = vsub.f32 1.0, %v855
      %v857 = vmul.f32 %v854, %v856
      %v858 = vadd.f32 %v854, %v857
      %vm859 = vweird.f32 %v854
      %v860 = vsel %vm859, %v854, %v858
      %v861 = vmul.f32 %v853, %v860
      %v862 = vsub.f32 %v849, %v861
      %v863 = vmul.f32 %v862, %v862
      %864 = vadd.xlane.f32.xlu0 %v863
      %v865 = vpop.xlane.xlu0 %864
      %v866 = vmul.f32 %v865, %v860
      %v867 = vadd.f32 %v866, 1e-12
      %v868 = vrsqrt.pop %v867
      %v869 = vmul.f32 %v868, %v867
      %v870 = vmul.f32 %v869, %v868
      %v871 = vmul.f32 0.5, %v870
      %v872 = vsub.f32 1.5, %v871
      %v873 = vmul.f32 %v868, %v872
      %vm874 = vweird.f32 %v867
      %vm875 = vweird.f32 %v868
      %vm876 = vmor %vm874, %vm875
      %v877 = vsel %vm876, %v868, %v873
      %v878 = vmul.f32 %v862, %v877
      %v880 = vperm.slane %v850, 0
      %v882 = vmul.f32 %v878, %v880
      %v884 = vperm.slane %v851, 0
      %v886 = vadd.f32 %v882, %v884
      %v887 = vpack.c.bf16 %v886, %v886
      %888 = vst [vmem:[%s442] sm:$0xf] %v887
      %p889 = scmp.lt.s32.totalorder %s27, 1
      %s890 = scalar_select %p889, %s27, 1
      %p891 = scmp.lt.s32.totalorder %s28, 0
      %s892 = scalar_select %p891, %s28, 0
      %s893 = sadd.s32 %s892, %s890
      %s894 = smul.addr %s893, 4
      %s895 = scalar_lea.vmem %s12, %s894
      // Predicated region
      $region87: #{bert_base_uncased_forward.7} parent=67 // pred_check
        %p896 = pneg %p317
      $region88: #{bert_base_uncased_forward.7} parent=67 // pred_check_branch
        %898 = sbr.rel (%p896) target = $region90
      $region89: #{bert_base_uncased_forward.7} parent=67 // pred_region
        _
      $region90: #{bert_base_uncased_forward.7} parent=67 // pred_fallthru
        _
    $region68: #{bert_base_uncased_forward.7} parent=5 // pred_fallthru
      _
    %p899 = scmp.le.s32.totalorder 2, %s18
    // Predicated region
    $region91: #{bert_base_uncased_forward.7} parent=5 // pred_check
      %p900 = pneg %p899
    $region92: #{bert_base_uncased_forward.7} parent=5 // pred_check_branch
      %902 = sbr.rel (%p900) target = $region94
    $region93: #{bert_base_uncased_forward.7} parent=5 // pred_region
      %s903 = ssub.s32 %s18, 2
      // Predicated region
      $region95: #{bert_base_uncased_forward.7} parent=93 // pred_check
        %p904 = pneg %p323
      $region96: #{bert_base_uncased_forward.7} parent=93 // pred_check_branch
        %906 = sbr.rel (%p904) target = $region98
      $region97: #{bert_base_uncased_forward.7} parent=93 // pred_region
        %p907 = scmp.lt.s32.totalorder %s29, 1
        %s908 = scalar_select %p907, %s29, 1
        %p909 = scmp.lt.s32.totalorder %s30, 0
        %s910 = scalar_select %p909, %s30, 0
        %s911 = sadd.s32 %s910, %s908
        %s912 = smul.addr %s911, 4
        %s913 = scalar_lea.vmem %s12, %s912
      $region98: #{bert_base_uncased_forward.7} parent=93 // pred_fallthru
        _
    $region94: #{bert_base_uncased_forward.7} parent=5 // pred_fallthru
      _
  $region6: #{bert_base_uncased_forward.7} parent=0 // loop_footer
    %s22 = sadd.s32 1, %s18
  $region7: #{bert_base_uncased_forward.7} parent=0 // loop_footer_branch
    %17 = sbr.rel target = $region3
  $region8: #{bert_base_uncased_forward.7} parent=0 // loop_exit
    _

</llo_original>
